<compile_context>
chip_gen: v7x
topology: tpu7x:2x2x1
jax: 0.10.0
libtpu: 0.0.40
codegen_flags: <defaults>
</compile_context>

<pallas_src>
import functools
import math

import jax
import jax.numpy as jnp
from jax.experimental import pallas as pl
from jax.experimental.pallas import tpu as pltpu


# --------------------------------------------------------------------------
# Fused kernel: full Transformer forward on one VMEM-resident block.
# --------------------------------------------------------------------------
def _transformer_kernel(
    x_ref,        # (B, S, D)
    ln_g_ref,     # (1 + 2*n_block, D)   layernorm gains   [norm0, blk0_ln0, blk0_ln1, ...]
    ln_b_ref,     # (1 + 2*n_block, D)   layernorm biases
    attn_w_ref,   # (n_block, 7, D, D)   [q_g, k_g, v_g, q, k, v, out] (stored as x @ W)
    attn_b_ref,   # (n_block, 7, D)
    ffn_w1_ref,   # (n_block, D, F)
    ffn_b1_ref,   # (n_block, 1, F)
    ffn_w2_ref,   # (n_block, F, D)
    ffn_b2_ref,   # (n_block, 1, D)
    o_ref,        # (B, S, D)
    *,
    n_block,
    n_head,
    eps,
):
    B, S, D = x_ref.shape
    BS = B * S
    dk = D // n_head
    inv_sqrt_dk = 1.0 / math.sqrt(dk)

    # Flatten (B,S,D) -> (B*S, D): S is a multiple of 8 and D of 128, so this
    # is layout-trivial and keeps every matmul a dense 2-D MXU op.
    x = x_ref[...].reshape(BS, D)

    ln_g = ln_g_ref[...]
    ln_b = ln_b_ref[...]

    # CLS rows (token 0 of each sequence) in the flattened layout.
    flat_ids = jax.lax.broadcasted_iota(jnp.int32, (BS, 1), 0)
    is_cls = (flat_ids % S) == 0                       # (BS, 1) bool

    def layer_norm(h, idx):
        g = ln_g[idx:idx + 1, :]                       # (1, D)
        b = ln_b[idx:idx + 1, :]
        mean = jnp.mean(h, axis=-1, keepdims=True)
        diff = h - mean
        var = jnp.sum(diff * diff, axis=-1, keepdims=True) * (1.0 / (D - 1))
        std = jnp.sqrt(var)                            # unbiased std, matches torch.std
        return g * diff / (std + eps) + b

    # Transformer.norm (applied once before the blocks).
    x = layer_norm(x, 0)

    for blk in range(n_block):                         # static unroll
        aw = attn_w_ref[blk]                           # (7, D, D)
        ab = attn_b_ref[blk]                           # (7, D)

        # ---- sublayer 0: SpecialAttention ---------------------------------
        h = layer_norm(x, 1 + 2 * blk)

        def proj(i):
            return (jnp.dot(h, aw[i], preferred_element_type=jnp.float32)
                    + ab[i:i + 1, :])

        # indices 0..2 = global (CLS) projections, 3..5 = local (Feat).
        q = jnp.where(is_cls, proj(0), proj(3))
        k = jnp.where(is_cls, proj(1), proj(4))
        v = jnp.where(is_cls, proj(2), proj(5))

        q3 = q.reshape(B, S, D)
        k3 = k.reshape(B, S, D)
        v3 = v.reshape(B, S, D)

        head_outs = []
        for hd in range(n_head):                       # static unroll over heads
            lo = hd * dk
            qh = q3[:, :, lo:lo + dk]                  # (B, S, dk)
            kh = k3[:, :, lo:lo + dk]
            vh = v3[:, :, lo:lo + dk]
            s = jnp.einsum('bqd,bkd->bqk', qh, kh,
                           preferred_element_type=jnp.float32) * inv_sqrt_dk
            s = s - jnp.max(s, axis=-1, keepdims=True)
            e = jnp.exp(s)
            p = e / jnp.sum(e, axis=-1, keepdims=True)
            head_outs.append(jnp.einsum('bqk,bkd->bqd', p, vh,
                                        preferred_element_type=jnp.float32))
        attn = jnp.concatenate(head_outs, axis=-1).reshape(BS, D)
        attn = (jnp.dot(attn, aw[6], preferred_element_type=jnp.float32)
                + ab[6:7, :])
        # dropout == identity (eval mode)
        x = x + attn

        # ---- sublayer 1: PositionwiseFeedForward --------------------------
        h = layer_norm(x, 2 + 2 * blk)
        h1 = jnp.maximum(
            jnp.dot(h, ffn_w1_ref[blk], preferred_element_type=jnp.float32)
            + ffn_b1_ref[blk], 0.0)
        h2 = (jnp.dot(h1, ffn_w2_ref[blk], preferred_element_type=jnp.float32)
              + ffn_b2_ref[blk])
        x = x + h2

    o_ref[...] = x.reshape(B, S, D).astype(o_ref.dtype)


def transformer_forward(x, params, *, n_head, eps=1e-6):
    """x: (B, S, D) float32; params: dict of stacked per-block weights."""
    B, S, D = x.shape
    n_block = params["attn_w"].shape[0]
    kernel = functools.partial(
        _transformer_kernel, n_block=n_block, n_head=n_head, eps=eps)

    vmem = pl.BlockSpec(memory_space=pltpu.MemorySpace.VMEM)  # whole array, VMEM-resident
    return pl.pallas_call(
        kernel,
        out_shape=jax.ShapeDtypeStruct((B, S, D), x.dtype),
        in_specs=[vmem] * 9,
        out_specs=vmem,
    )(
        x,
        params["ln_g"], params["ln_b"],
        params["attn_w"], params["attn_b"],
        params["ffn_w1"], params["ffn_b1"],
        params["ffn_w2"], params["ffn_b2"],
    )


# --------------------------------------------------------------------------
# Pure-JAX reference mirroring the PyTorch module (eval mode).
# --------------------------------------------------------------------------
def _layer_norm_ref(x, g, b, eps):
    mean = jnp.mean(x, axis=-1, keepdims=True)
    std = jnp.std(x, axis=-1, keepdims=True, ddof=1)   # torch.std default: unbiased
    return g * (x - mean) / (std + eps) + b


def transformer_reference(x, params, *, n_head, eps=1e-6):
    B, S, D = x.shape
    dk = D // n_head
    n_block = params["attn_w"].shape[0]
    ln_g, ln_b = params["ln_g"], params["ln_b"]

    h = _layer_norm_ref(x, ln_g[0], ln_b[0], eps)
    for blk in range(n_block):
        aw = params["attn_w"][blk]
        ab = params["attn_b"][blk]

        # ---- SpecialAttention ----
        n = _layer_norm_ref(h, ln_g[1 + 2 * blk], ln_b[1 + 2 * blk], eps)

        def lin(t, i):
            return t @ aw[i] + ab[i]

        def heads(t):  # (B, L, D) -> (B, H, L, dk)
            Bq, L, _ = t.shape
            return t.reshape(Bq, L, n_head, dk).transpose(0, 2, 1, 3)

        q = jnp.concatenate([heads(lin(n[:, :1], 0)), heads(lin(n[:, 1:], 3))], axis=2)
        k = jnp.concatenate([heads(lin(n[:, :1], 1)), heads(lin(n[:, 1:], 4))], axis=2)
        v = jnp.concatenate([heads(lin(n[:, :1], 2)), heads(lin(n[:, 1:], 5))], axis=2)

        w = jnp.einsum('bhqd,bhkd->bhqk', q, k) / math.sqrt(dk)
        p = jax.nn.softmax(w, axis=-1)
        o = jnp.einsum('bhqk,bhkd->bhqd', p, v)
        o = o.transpose(0, 2, 1, 3).reshape(B, S, D)
        o = o @ aw[6] + ab[6]
        h = h + o

        # ---- PositionwiseFeedForward ----
        n = _layer_norm_ref(h, ln_g[2 + 2 * blk], ln_b[2 + 2 * blk], eps)
        f = jnp.maximum(n @ params["ffn_w1"][blk] + params["ffn_b1"][blk], 0.0)
        f = f @ params["ffn_w2"][blk] + params["ffn_b2"][blk]
        h = h + f
    return h


def init_params(key, n_embs, dim_ff, n_block):
    ks = jax.random.split(key, 8)
    n_norm = 1 + 2 * n_block
    sd = 1.0 / math.sqrt(n_embs)   # ~ nn.Linear default init scale (fan_in = n_embs)
    sf = 1.0 / math.sqrt(dim_ff)
    return {
        # LayerNorm params (perturbed from the ones/zeros default to exercise the affine)
        "ln_g": 1.0 + 0.1 * jax.random.normal(ks[6], (n_norm, n_embs), jnp.float32),
        "ln_b": 0.1 * jax.random.normal(ks[7], (n_norm, n_embs), jnp.float32),
        # [q_global, k_global, v_global, q_linear, k_linear, v_linear, out_linear]
        "attn_w": jax.random.uniform(ks[0], (n_block, 7, n_embs, n_embs),
                                     jnp.float32, -sd, sd),
        "attn_b": jax.random.uniform(ks[1], (n_block, 7, n_embs),
                                     jnp.float32, -sd, sd),
        "ffn_w1": jax.random.uniform(ks[2], (n_block, n_embs, dim_ff),
                                     jnp.float32, -sd, sd),
        "ffn_b1": jax.random.uniform(ks[3], (n_block, 1, dim_ff),
                                     jnp.float32, -sd, sd),
        "ffn_w2": jax.random.uniform(ks[4], (n_block, dim_ff, n_embs),
                                     jnp.float32, -sf, sf),
        "ffn_b2": jax.random.uniform(ks[5], (n_block, 1, n_embs),
                                     jnp.float32, -sf, sf),
    }


if __name__ == "__main__":
    # Transformer(n_embs, dim_ff, n_head, dropout, n_block)
    n_embs, dim_ff, n_head, dropout, n_block = 128, 256, 4, 0.1, 2
    batch, seq = 2, 8   # seq >= 2 (token 0 is the CLS token)

    key = jax.random.PRNGKey(0)
    k_x, k_p = jax.random.split(key)
    x = jax.random.normal(k_x, (batch, seq, n_embs), dtype=jnp.float32)
    params = init_params(k_p, n_embs, dim_ff, n_block)

    ref = transformer_reference(x, params, n_head=n_head)

    out = transformer_forward(x, params, n_head=n_head)
    out = jax.block_until_ready(out)

    assert out.shape == (batch, seq, n_embs)
    assert jnp.allclose(out, ref, atol=2e-2, rtol=2e-2)

    print("KERNEL_OK")
</pallas_src>

<mosaic_0001>
module attributes {stable_mosaic.version = 11 : i64} {
  func.func @_transformer_kernel(%arg0: memref<2x8x128xf32, #tpu.memory_space<vmem>>, %arg1: memref<5x128xf32, #tpu.memory_space<vmem>>, %arg2: memref<5x128xf32, #tpu.memory_space<vmem>>, %arg3: memref<2x7x128x128xf32, #tpu.memory_space<vmem>>, %arg4: memref<2x7x128xf32, #tpu.memory_space<vmem>>, %arg5: memref<2x128x256xf32, #tpu.memory_space<vmem>>, %arg6: memref<2x1x256xf32, #tpu.memory_space<vmem>>, %arg7: memref<2x256x128xf32, #tpu.memory_space<vmem>>, %arg8: memref<2x1x128xf32, #tpu.memory_space<vmem>>, %arg9: memref<2x8x128xf32, #tpu.memory_space<vmem>>) attributes {dimension_semantics = [], scalar_prefetch = 0 : i64, scratch_operands = 0 : i64, tpu.core_type = #tpu.core_type<tc>} {
    %c0 = arith.constant 0 : index
    %c0_0 = arith.constant 0 : index
    %c0_1 = arith.constant 0 : index
    %0 = vector.load %arg0[%c0, %c0_0, %c0_1] : memref<2x8x128xf32, #tpu.memory_space<vmem>>, vector<2x8x128xf32>
    %1 = vector.shape_cast %0 : vector<2x8x128xf32> to vector<16x128xf32>
    %c0_2 = arith.constant 0 : index
    %c0_3 = arith.constant 0 : index
    %2 = vector.load %arg1[%c0_2, %c0_3] : memref<5x128xf32, #tpu.memory_space<vmem>>, vector<5x128xf32>
    %c0_4 = arith.constant 0 : index
    %c0_5 = arith.constant 0 : index
    %3 = vector.load %arg2[%c0_4, %c0_5] : memref<5x128xf32, #tpu.memory_space<vmem>>, vector<5x128xf32>
    %4 = tpu.iota {dimensions = array<i32: 0>} : vector<16x1xi32>
    %c8_i32 = arith.constant 8 : i32
    %c0_i32 = arith.constant 0 : i32
    %5 = arith.cmpi eq, %c8_i32, %c0_i32 : i32
    %c1_i32 = arith.constant 1 : i32
    %6 = arith.select %5, %c1_i32, %c8_i32 : i32
    %7 = vector.broadcast %6 : i32 to vector<16x1xi32>
    %8 = arith.remsi %4, %7 : vector<16x1xi32>
    %c0_i32_6 = arith.constant 0 : i32
    %9 = vector.broadcast %c0_i32_6 : i32 to vector<16x1xi32>
    %10 = arith.cmpi ne, %8, %9 : vector<16x1xi32>
    %c0_i32_7 = arith.constant 0 : i32
    %11 = vector.broadcast %c0_i32_7 : i32 to vector<16x1xi32>
    %12 = arith.cmpi slt, %8, %11 : vector<16x1xi32>
    %c0_i32_8 = arith.constant 0 : i32
    %13 = arith.cmpi slt, %6, %c0_i32_8 : i32
    %14 = vector.broadcast %13 : i1 to vector<16x1xi1>
    %15 = vector.broadcast %14 : vector<16x1xi1> to vector<16x1xi1>
    %16 = arith.xori %12, %15 : vector<16x1xi1>
    %17 = arith.andi %16, %10 : vector<16x1xi1>
    %18 = vector.broadcast %6 : i32 to vector<16x1xi32>
    %19 = arith.addi %8, %18 : vector<16x1xi32>
    %20 = arith.select %17, %19, %8 : vector<16x1xi1>, vector<16x1xi32>
    %c0_i32_9 = arith.constant 0 : i32
    %21 = vector.broadcast %c0_i32_9 : i32 to vector<16x1xi32>
    %22 = arith.cmpi eq, %20, %21 : vector<16x1xi32>
    %23 = vector.extract_strided_slice %2 {offsets = [0, 0], sizes = [1, 128], strides = [1, 1]} : vector<5x128xf32> to vector<1x128xf32>
    %24 = vector.extract_strided_slice %3 {offsets = [0, 0], sizes = [1, 128], strides = [1, 1]} : vector<5x128xf32> to vector<1x128xf32>
    %cst = arith.constant dense<0.000000e+00> : vector<16xf32>
    %25 = vector.multi_reduction <add>, %1, %cst [1] : vector<16x128xf32> to vector<16xf32>
    %26 = vector.shape_cast %25 : vector<16xf32> to vector<16x1xf32>
    %cst_10 = arith.constant 1.280000e+02 : f32
    %27 = vector.broadcast %cst_10 : f32 to vector<16x1xf32>
    %28 = arith.divf %26, %27 : vector<16x1xf32>
    %29 = vector.broadcast %28 : vector<16x1xf32> to vector<16x128xf32>
    %30 = arith.subf %1, %29 : vector<16x128xf32>
    %31 = arith.mulf %30, %30 : vector<16x128xf32>
    %cst_11 = arith.constant dense<0.000000e+00> : vector<16xf32>
    %32 = vector.multi_reduction <add>, %31, %cst_11 [1] : vector<16x128xf32> to vector<16xf32>
    %33 = vector.shape_cast %32 : vector<16xf32> to vector<16x1xf32>
    %cst_12 = arith.constant 0.00787401571 : f32
    %34 = vector.broadcast %cst_12 : f32 to vector<16x1xf32>
    %35 = arith.mulf %33, %34 : vector<16x1xf32>
    %36 = math.sqrt %35 : vector<16x1xf32>
    %37 = vector.broadcast %23 : vector<1x128xf32> to vector<16x128xf32>
    %38 = arith.mulf %37, %30 : vector<16x128xf32>
    %cst_13 = arith.constant 9.99999997E-7 : f32
    %39 = vector.broadcast %cst_13 : f32 to vector<16x1xf32>
    %40 = arith.addf %36, %39 : vector<16x1xf32>
    %41 = vector.broadcast %40 : vector<16x1xf32> to vector<16x128xf32>
    %42 = arith.divf %38, %41 : vector<16x128xf32>
    %43 = vector.broadcast %24 : vector<1x128xf32> to vector<16x128xf32>
    %44 = arith.addf %42, %43 : vector<16x128xf32>
    %c0_14 = arith.constant 0 : index
    %c0_15 = arith.constant 0 : index
    %c0_16 = arith.constant 0 : index
    %c0_17 = arith.constant 0 : index
    %45 = vector.load %arg3[%c0_14, %c0_15, %c0_16, %c0_17] : memref<2x7x128x128xf32, #tpu.memory_space<vmem>>, vector<1x7x128x128xf32>
    %46 = vector.shape_cast %45 : vector<1x7x128x128xf32> to vector<7x128x128xf32>
    %c0_18 = arith.constant 0 : index
    %c0_19 = arith.constant 0 : index
    %c0_20 = arith.constant 0 : index
    %47 = vector.load %arg4[%c0_18, %c0_19, %c0_20] : memref<2x7x128xf32, #tpu.memory_space<vmem>>, vector<1x7x128xf32>
    %48 = vector.shape_cast %47 : vector<1x7x128xf32> to vector<7x128xf32>
    %49 = vector.extract_strided_slice %2 {offsets = [1, 0], sizes = [1, 128], strides = [1, 1]} : vector<5x128xf32> to vector<1x128xf32>
    %50 = vector.extract_strided_slice %3 {offsets = [1, 0], sizes = [1, 128], strides = [1, 1]} : vector<5x128xf32> to vector<1x128xf32>
    %cst_21 = arith.constant dense<0.000000e+00> : vector<16xf32>
    %51 = vector.multi_reduction <add>, %44, %cst_21 [1] : vector<16x128xf32> to vector<16xf32>
    %52 = vector.shape_cast %51 : vector<16xf32> to vector<16x1xf32>
    %cst_22 = arith.constant 1.280000e+02 : f32
    %53 = vector.broadcast %cst_22 : f32 to vector<16x1xf32>
    %54 = arith.divf %52, %53 : vector<16x1xf32>
    %55 = vector.broadcast %54 : vector<16x1xf32> to vector<16x128xf32>
    %56 = arith.subf %44, %55 : vector<16x128xf32>
    %57 = arith.mulf %56, %56 : vector<16x128xf32>
    %cst_23 = arith.constant dense<0.000000e+00> : vector<16xf32>
    %58 = vector.multi_reduction <add>, %57, %cst_23 [1] : vector<16x128xf32> to vector<16xf32>
    %59 = vector.shape_cast %58 : vector<16xf32> to vector<16x1xf32>
    %cst_24 = arith.constant 0.00787401571 : f32
    %60 = vector.broadcast %cst_24 : f32 to vector<16x1xf32>
    %61 = arith.mulf %59, %60 : vector<16x1xf32>
    %62 = math.sqrt %61 : vector<16x1xf32>
    %63 = vector.broadcast %49 : vector<1x128xf32> to vector<16x128xf32>
    %64 = arith.mulf %63, %56 : vector<16x128xf32>
    %cst_25 = arith.constant 9.99999997E-7 : f32
    %65 = vector.broadcast %cst_25 : f32 to vector<16x1xf32>
    %66 = arith.addf %62, %65 : vector<16x1xf32>
    %67 = vector.broadcast %66 : vector<16x1xf32> to vector<16x128xf32>
    %68 = arith.divf %64, %67 : vector<16x128xf32>
    %69 = vector.broadcast %50 : vector<1x128xf32> to vector<16x128xf32>
    %70 = arith.addf %68, %69 : vector<16x128xf32>
    %71 = vector.extract_strided_slice %46 {offsets = [0, 0, 0], sizes = [1, 128, 128], strides = [1, 1, 1]} : vector<7x128x128xf32> to vector<1x128x128xf32>
    %72 = vector.shape_cast %71 : vector<1x128x128xf32> to vector<128x128xf32>
    %cst_26 = arith.constant dense<0.000000e+00> : vector<16x128xf32>
    %73 = tpu.matmul %70, %72, %cst_26 {dimension_numbers = #tpu.dot_dimension_numbers<[1], [0], [0], [1], [0, 0, 1, 1], [], []>} : vector<16x128xf32>, vector<128x128xf32>, vector<16x128xf32> -> vector<16x128xf32>
    %74 = vector.extract_strided_slice %48 {offsets = [0, 0], sizes = [1, 128], strides = [1, 1]} : vector<7x128xf32> to vector<1x128xf32>
    %75 = vector.broadcast %74 : vector<1x128xf32> to vector<16x128xf32>
    %76 = arith.addf %73, %75 : vector<16x128xf32>
    %77 = vector.extract_strided_slice %46 {offsets = [3, 0, 0], sizes = [1, 128, 128], strides = [1, 1, 1]} : vector<7x128x128xf32> to vector<1x128x128xf32>
    %78 = vector.shape_cast %77 : vector<1x128x128xf32> to vector<128x128xf32>
    %cst_27 = arith.constant dense<0.000000e+00> : vector<16x128xf32>
    %79 = tpu.matmul %70, %78, %cst_27 {dimension_numbers = #tpu.dot_dimension_numbers<[1], [0], [0], [1], [0, 0, 1, 1], [], []>} : vector<16x128xf32>, vector<128x128xf32>, vector<16x128xf32> -> vector<16x128xf32>
    %80 = vector.extract_strided_slice %48 {offsets = [3, 0], sizes = [1, 128], strides = [1, 1]} : vector<7x128xf32> to vector<1x128xf32>
    %81 = vector.broadcast %80 : vector<1x128xf32> to vector<16x128xf32>
    %82 = arith.addf %79, %81 : vector<16x128xf32>
    %83 = vector.shape_cast %22 : vector<16x1xi1> to vector<16x1xi1>
    %84 = vector.broadcast %83 : vector<16x1xi1> to vector<16x128xi1>
    %85 = arith.select %84, %76, %82 : vector<16x128xi1>, vector<16x128xf32>
    %86 = vector.extract_strided_slice %46 {offsets = [1, 0, 0], sizes = [1, 128, 128], strides = [1, 1, 1]} : vector<7x128x128xf32> to vector<1x128x128xf32>
    %87 = vector.shape_cast %86 : vector<1x128x128xf32> to vector<128x128xf32>
    %cst_28 = arith.constant dense<0.000000e+00> : vector<16x128xf32>
    %88 = tpu.matmul %70, %87, %cst_28 {dimension_numbers = #tpu.dot_dimension_numbers<[1], [0], [0], [1], [0, 0, 1, 1], [], []>} : vector<16x128xf32>, vector<128x128xf32>, vector<16x128xf32> -> vector<16x128xf32>
    %89 = vector.extract_strided_slice %48 {offsets = [1, 0], sizes = [1, 128], strides = [1, 1]} : vector<7x128xf32> to vector<1x128xf32>
    %90 = vector.broadcast %89 : vector<1x128xf32> to vector<16x128xf32>
    %91 = arith.addf %88, %90 : vector<16x128xf32>
    %92 = vector.extract_strided_slice %46 {offsets = [4, 0, 0], sizes = [1, 128, 128], strides = [1, 1, 1]} : vector<7x128x128xf32> to vector<1x128x128xf32>
    %93 = vector.shape_cast %92 : vector<1x128x128xf32> to vector<128x128xf32>
    %cst_29 = arith.constant dense<0.000000e+00> : vector<16x128xf32>
    %94 = tpu.matmul %70, %93, %cst_29 {dimension_numbers = #tpu.dot_dimension_numbers<[1], [0], [0], [1], [0, 0, 1, 1], [], []>} : vector<16x128xf32>, vector<128x128xf32>, vector<16x128xf32> -> vector<16x128xf32>
    %95 = vector.extract_strided_slice %48 {offsets = [4, 0], sizes = [1, 128], strides = [1, 1]} : vector<7x128xf32> to vector<1x128xf32>
    %96 = vector.broadcast %95 : vector<1x128xf32> to vector<16x128xf32>
    %97 = arith.addf %94, %96 : vector<16x128xf32>
    %98 = vector.shape_cast %22 : vector<16x1xi1> to vector<16x1xi1>
    %99 = vector.broadcast %98 : vector<16x1xi1> to vector<16x128xi1>
    %100 = arith.select %99, %91, %97 : vector<16x128xi1>, vector<16x128xf32>
    %101 = vector.extract_strided_slice %46 {offsets = [2, 0, 0], sizes = [1, 128, 128], strides = [1, 1, 1]} : vector<7x128x128xf32> to vector<1x128x128xf32>
    %102 = vector.shape_cast %101 : vector<1x128x128xf32> to vector<128x128xf32>
    %cst_30 = arith.constant dense<0.000000e+00> : vector<16x128xf32>
    %103 = tpu.matmul %70, %102, %cst_30 {dimension_numbers = #tpu.dot_dimension_numbers<[1], [0], [0], [1], [0, 0, 1, 1], [], []>} : vector<16x128xf32>, vector<128x128xf32>, vector<16x128xf32> -> vector<16x128xf32>
    %104 = vector.extract_strided_slice %48 {offsets = [2, 0], sizes = [1, 128], strides = [1, 1]} : vector<7x128xf32> to vector<1x128xf32>
    %105 = vector.broadcast %104 : vector<1x128xf32> to vector<16x128xf32>
    %106 = arith.addf %103, %105 : vector<16x128xf32>
    %107 = vector.extract_strided_slice %46 {offsets = [5, 0, 0], sizes = [1, 128, 128], strides = [1, 1, 1]} : vector<7x128x128xf32> to vector<1x128x128xf32>
    %108 = vector.shape_cast %107 : vector<1x128x128xf32> to vector<128x128xf32>
    %cst_31 = arith.constant dense<0.000000e+00> : vector<16x128xf32>
    %109 = tpu.matmul %70, %108, %cst_31 {dimension_numbers = #tpu.dot_dimension_numbers<[1], [0], [0], [1], [0, 0, 1, 1], [], []>} : vector<16x128xf32>, vector<128x128xf32>, vector<16x128xf32> -> vector<16x128xf32>
    %110 = vector.extract_strided_slice %48 {offsets = [5, 0], sizes = [1, 128], strides = [1, 1]} : vector<7x128xf32> to vector<1x128xf32>
    %111 = vector.broadcast %110 : vector<1x128xf32> to vector<16x128xf32>
    %112 = arith.addf %109, %111 : vector<16x128xf32>
    %113 = vector.shape_cast %22 : vector<16x1xi1> to vector<16x1xi1>
    %114 = vector.broadcast %113 : vector<16x1xi1> to vector<16x128xi1>
    %115 = arith.select %114, %106, %112 : vector<16x128xi1>, vector<16x128xf32>
    %116 = vector.shape_cast %85 : vector<16x128xf32> to vector<2x8x128xf32>
    %117 = vector.shape_cast %100 : vector<16x128xf32> to vector<2x8x128xf32>
    %118 = vector.shape_cast %115 : vector<16x128xf32> to vector<2x8x128xf32>
    %119 = vector.extract_strided_slice %116 {offsets = [0, 0, 0], sizes = [2, 8, 32], strides = [1, 1, 1]} : vector<2x8x128xf32> to vector<2x8x32xf32>
    %120 = vector.extract_strided_slice %117 {offsets = [0, 0, 0], sizes = [2, 8, 32], strides = [1, 1, 1]} : vector<2x8x128xf32> to vector<2x8x32xf32>
    %121 = vector.extract_strided_slice %118 {offsets = [0, 0, 0], sizes = [2, 8, 32], strides = [1, 1, 1]} : vector<2x8x128xf32> to vector<2x8x32xf32>
    "tpu.trace_start"() <{level = 10 : i32, message = "bqd,bkd->bqk"}> : () -> ()
    %cst_32 = arith.constant dense<0.000000e+00> : vector<2x8x8xf32>
    %122 = tpu.matmul %119, %120, %cst_32 {dimension_numbers = #tpu.dot_dimension_numbers<[2], [2], [1], [1], [0, 0, 0, 1, 1, 1], [0], [0]>} : vector<2x8x32xf32>, vector<2x8x32xf32>, vector<2x8x8xf32> -> vector<2x8x8xf32>
    "tpu.trace_stop"() : () -> ()
    %cst_33 = arith.constant 0.176776692 : f32
    %123 = vector.broadcast %cst_33 : f32 to vector<2x8x8xf32>
    %124 = arith.mulf %122, %123 : vector<2x8x8xf32>
    %cst_34 = arith.constant dense<0xFF800000> : vector<2x8xf32>
    %125 = vector.multi_reduction <maximumf>, %124, %cst_34 [2] : vector<2x8x8xf32> to vector<2x8xf32>
    %126 = vector.shape_cast %125 : vector<2x8xf32> to vector<2x8x1xf32>
    %127 = vector.broadcast %126 : vector<2x8x1xf32> to vector<2x8x8xf32>
    %128 = arith.subf %124, %127 : vector<2x8x8xf32>
    %129 = math.exp %128 : vector<2x8x8xf32>
    %cst_35 = arith.constant dense<0.000000e+00> : vector<2x8xf32>
    %130 = vector.multi_reduction <add>, %129, %cst_35 [2] : vector<2x8x8xf32> to vector<2x8xf32>
    %131 = vector.shape_cast %130 : vector<2x8xf32> to vector<2x8x1xf32>
    %132 = vector.broadcast %131 : vector<2x8x1xf32> to vector<2x8x8xf32>
    %133 = arith.divf %129, %132 : vector<2x8x8xf32>
    "tpu.trace_start"() <{level = 10 : i32, message = "bqk,bkd->bqd"}> : () -> ()
    %cst_36 = arith.constant dense<0.000000e+00> : vector<2x8x32xf32>
    %134 = tpu.matmul %133, %121, %cst_36 {dimension_numbers = #tpu.dot_dimension_numbers<[2], [1], [1], [2], [0, 0, 0, 1, 1, 2], [0], [0]>} : vector<2x8x8xf32>, vector<2x8x32xf32>, vector<2x8x32xf32> -> vector<2x8x32xf32>
    "tpu.trace_stop"() : () -> ()
    %135 = vector.extract_strided_slice %116 {offsets = [0, 0, 32], sizes = [2, 8, 32], strides = [1, 1, 1]} : vector<2x8x128xf32> to vector<2x8x32xf32>
    %136 = vector.extract_strided_slice %117 {offsets = [0, 0, 32], sizes = [2, 8, 32], strides = [1, 1, 1]} : vector<2x8x128xf32> to vector<2x8x32xf32>
    %137 = vector.extract_strided_slice %118 {offsets = [0, 0, 32], sizes = [2, 8, 32], strides = [1, 1, 1]} : vector<2x8x128xf32> to vector<2x8x32xf32>
    "tpu.trace_start"() <{level = 10 : i32, message = "bqd,bkd->bqk"}> : () -> ()
    %cst_37 = arith.constant dense<0.000000e+00> : vector<2x8x8xf32>
    %138 = tpu.matmul %135, %136, %cst_37 {dimension_numbers = #tpu.dot_dimension_numbers<[2], [2], [1], [1], [0, 0, 0, 1, 1, 1], [0], [0]>} : vector<2x8x32xf32>, vector<2x8x32xf32>, vector<2x8x8xf32> -> vector<2x8x8xf32>
    "tpu.trace_stop"() : () -> ()
    %cst_38 = arith.constant 0.176776692 : f32
    %139 = vector.broadcast %cst_38 : f32 to vector<2x8x8xf32>
    %140 = arith.mulf %138, %139 : vector<2x8x8xf32>
    %cst_39 = arith.constant dense<0xFF800000> : vector<2x8xf32>
    %141 = vector.multi_reduction <maximumf>, %140, %cst_39 [2] : vector<2x8x8xf32> to vector<2x8xf32>
    %142 = vector.shape_cast %141 : vector<2x8xf32> to vector<2x8x1xf32>
    %143 = vector.broadcast %142 : vector<2x8x1xf32> to vector<2x8x8xf32>
    %144 = arith.subf %140, %143 : vector<2x8x8xf32>
    %145 = math.exp %144 : vector<2x8x8xf32>
    %cst_40 = arith.constant dense<0.000000e+00> : vector<2x8xf32>
    %146 = vector.multi_reduction <add>, %145, %cst_40 [2] : vector<2x8x8xf32> to vector<2x8xf32>
    %147 = vector.shape_cast %146 : vector<2x8xf32> to vector<2x8x1xf32>
    %148 = vector.broadcast %147 : vector<2x8x1xf32> to vector<2x8x8xf32>
    %149 = arith.divf %145, %148 : vector<2x8x8xf32>
    "tpu.trace_start"() <{level = 10 : i32, message = "bqk,bkd->bqd"}> : () -> ()
    %cst_41 = arith.constant dense<0.000000e+00> : vector<2x8x32xf32>
    %150 = tpu.matmul %149, %137, %cst_41 {dimension_numbers = #tpu.dot_dimension_numbers<[2], [1], [1], [2], [0, 0, 0, 1, 1, 2], [0], [0]>} : vector<2x8x8xf32>, vector<2x8x32xf32>, vector<2x8x32xf32> -> vector<2x8x32xf32>
    "tpu.trace_stop"() : () -> ()
    %151 = vector.extract_strided_slice %116 {offsets = [0, 0, 64], sizes = [2, 8, 32], strides = [1, 1, 1]} : vector<2x8x128xf32> to vector<2x8x32xf32>
    %152 = vector.extract_strided_slice %117 {offsets = [0, 0, 64], sizes = [2, 8, 32], strides = [1, 1, 1]} : vector<2x8x128xf32> to vector<2x8x32xf32>
    %153 = vector.extract_strided_slice %118 {offsets = [0, 0, 64], sizes = [2, 8, 32], strides = [1, 1, 1]} : vector<2x8x128xf32> to vector<2x8x32xf32>
    "tpu.trace_start"() <{level = 10 : i32, message = "bqd,bkd->bqk"}> : () -> ()
    %cst_42 = arith.constant dense<0.000000e+00> : vector<2x8x8xf32>
    %154 = tpu.matmul %151, %152, %cst_42 {dimension_numbers = #tpu.dot_dimension_numbers<[2], [2], [1], [1], [0, 0, 0, 1, 1, 1], [0], [0]>} : vector<2x8x32xf32>, vector<2x8x32xf32>, vector<2x8x8xf32> -> vector<2x8x8xf32>
    "tpu.trace_stop"() : () -> ()
    %cst_43 = arith.constant 0.176776692 : f32
    %155 = vector.broadcast %cst_43 : f32 to vector<2x8x8xf32>
    %156 = arith.mulf %154, %155 : vector<2x8x8xf32>
    %cst_44 = arith.constant dense<0xFF800000> : vector<2x8xf32>
    %157 = vector.multi_reduction <maximumf>, %156, %cst_44 [2] : vector<2x8x8xf32> to vector<2x8xf32>
    %158 = vector.shape_cast %157 : vector<2x8xf32> to vector<2x8x1xf32>
    %159 = vector.broadcast %158 : vector<2x8x1xf32> to vector<2x8x8xf32>
    %160 = arith.subf %156, %159 : vector<2x8x8xf32>
    %161 = math.exp %160 : vector<2x8x8xf32>
    %cst_45 = arith.constant dense<0.000000e+00> : vector<2x8xf32>
    %162 = vector.multi_reduction <add>, %161, %cst_45 [2] : vector<2x8x8xf32> to vector<2x8xf32>
    %163 = vector.shape_cast %162 : vector<2x8xf32> to vector<2x8x1xf32>
    %164 = vector.broadcast %163 : vector<2x8x1xf32> to vector<2x8x8xf32>
    %165 = arith.divf %161, %164 : vector<2x8x8xf32>
    "tpu.trace_start"() <{level = 10 : i32, message = "bqk,bkd->bqd"}> : () -> ()
    %cst_46 = arith.constant dense<0.000000e+00> : vector<2x8x32xf32>
    %166 = tpu.matmul %165, %153, %cst_46 {dimension_numbers = #tpu.dot_dimension_numbers<[2], [1], [1], [2], [0, 0, 0, 1, 1, 2], [0], [0]>} : vector<2x8x8xf32>, vector<2x8x32xf32>, vector<2x8x32xf32> -> vector<2x8x32xf32>
    "tpu.trace_stop"() : () -> ()
    %167 = vector.extract_strided_slice %116 {offsets = [0, 0, 96], sizes = [2, 8, 32], strides = [1, 1, 1]} : vector<2x8x128xf32> to vector<2x8x32xf32>
    %168 = vector.extract_strided_slice %117 {offsets = [0, 0, 96], sizes = [2, 8, 32], strides = [1, 1, 1]} : vector<2x8x128xf32> to vector<2x8x32xf32>
    %169 = vector.extract_strided_slice %118 {offsets = [0, 0, 96], sizes = [2, 8, 32], strides = [1, 1, 1]} : vector<2x8x128xf32> to vector<2x8x32xf32>
    "tpu.trace_start"() <{level = 10 : i32, message = "bqd,bkd->bqk"}> : () -> ()
    %cst_47 = arith.constant dense<0.000000e+00> : vector<2x8x8xf32>
    %170 = tpu.matmul %167, %168, %cst_47 {dimension_numbers = #tpu.dot_dimension_numbers<[2], [2], [1], [1], [0, 0, 0, 1, 1, 1], [0], [0]>} : vector<2x8x32xf32>, vector<2x8x32xf32>, vector<2x8x8xf32> -> vector<2x8x8xf32>
    "tpu.trace_stop"() : () -> ()
    %cst_48 = arith.constant 0.176776692 : f32
    %171 = vector.broadcast %cst_48 : f32 to vector<2x8x8xf32>
    %172 = arith.mulf %170, %171 : vector<2x8x8xf32>
    %cst_49 = arith.constant dense<0xFF800000> : vector<2x8xf32>
    %173 = vector.multi_reduction <maximumf>, %172, %cst_49 [2] : vector<2x8x8xf32> to vector<2x8xf32>
    %174 = vector.shape_cast %173 : vector<2x8xf32> to vector<2x8x1xf32>
    %175 = vector.broadcast %174 : vector<2x8x1xf32> to vector<2x8x8xf32>
    %176 = arith.subf %172, %175 : vector<2x8x8xf32>
    %177 = math.exp %176 : vector<2x8x8xf32>
    %cst_50 = arith.constant dense<0.000000e+00> : vector<2x8xf32>
    %178 = vector.multi_reduction <add>, %177, %cst_50 [2] : vector<2x8x8xf32> to vector<2x8xf32>
    %179 = vector.shape_cast %178 : vector<2x8xf32> to vector<2x8x1xf32>
    %180 = vector.broadcast %179 : vector<2x8x1xf32> to vector<2x8x8xf32>
    %181 = arith.divf %177, %180 : vector<2x8x8xf32>
    "tpu.trace_start"() <{level = 10 : i32, message = "bqk,bkd->bqd"}> : () -> ()
    %cst_51 = arith.constant dense<0.000000e+00> : vector<2x8x32xf32>
    %182 = tpu.matmul %181, %169, %cst_51 {dimension_numbers = #tpu.dot_dimension_numbers<[2], [1], [1], [2], [0, 0, 0, 1, 1, 2], [0], [0]>} : vector<2x8x8xf32>, vector<2x8x32xf32>, vector<2x8x32xf32> -> vector<2x8x32xf32>
    "tpu.trace_stop"() : () -> ()
    %183 = tpu.concatenate %134, %150, %166, %182 in 2 : vector<2x8x32xf32>, vector<2x8x32xf32>, vector<2x8x32xf32>, vector<2x8x32xf32> -> vector<2x8x128xf32>
    %184 = vector.shape_cast %183 : vector<2x8x128xf32> to vector<16x128xf32>
    %185 = vector.extract_strided_slice %46 {offsets = [6, 0, 0], sizes = [1, 128, 128], strides = [1, 1, 1]} : vector<7x128x128xf32> to vector<1x128x128xf32>
    %186 = vector.shape_cast %185 : vector<1x128x128xf32> to vector<128x128xf32>
    %cst_52 = arith.constant dense<0.000000e+00> : vector<16x128xf32>
    %187 = tpu.matmul %184, %186, %cst_52 {dimension_numbers = #tpu.dot_dimension_numbers<[1], [0], [0], [1], [0, 0, 1, 1], [], []>} : vector<16x128xf32>, vector<128x128xf32>, vector<16x128xf32> -> vector<16x128xf32>
    %188 = vector.extract_strided_slice %48 {offsets = [6, 0], sizes = [1, 128], strides = [1, 1]} : vector<7x128xf32> to vector<1x128xf32>
    %189 = vector.broadcast %188 : vector<1x128xf32> to vector<16x128xf32>
    %190 = arith.addf %187, %189 : vector<16x128xf32>
    %191 = arith.addf %44, %190 : vector<16x128xf32>
    %192 = vector.extract_strided_slice %2 {offsets = [2, 0], sizes = [1, 128], strides = [1, 1]} : vector<5x128xf32> to vector<1x128xf32>
    %193 = vector.extract_strided_slice %3 {offsets = [2, 0], sizes = [1, 128], strides = [1, 1]} : vector<5x128xf32> to vector<1x128xf32>
    %cst_53 = arith.constant dense<0.000000e+00> : vector<16xf32>
    %194 = vector.multi_reduction <add>, %191, %cst_53 [1] : vector<16x128xf32> to vector<16xf32>
    %195 = vector.shape_cast %194 : vector<16xf32> to vector<16x1xf32>
    %cst_54 = arith.constant 1.280000e+02 : f32
    %196 = vector.broadcast %cst_54 : f32 to vector<16x1xf32>
    %197 = arith.divf %195, %196 : vector<16x1xf32>
    %198 = vector.broadcast %197 : vector<16x1xf32> to vector<16x128xf32>
    %199 = arith.subf %191, %198 : vector<16x128xf32>
    %200 = arith.mulf %199, %199 : vector<16x128xf32>
    %cst_55 = arith.constant dense<0.000000e+00> : vector<16xf32>
    %201 = vector.multi_reduction <add>, %200, %cst_55 [1] : vector<16x128xf32> to vector<16xf32>
    %202 = vector.shape_cast %201 : vector<16xf32> to vector<16x1xf32>
    %cst_56 = arith.constant 0.00787401571 : f32
    %203 = vector.broadcast %cst_56 : f32 to vector<16x1xf32>
    %204 = arith.mulf %202, %203 : vector<16x1xf32>
    %205 = math.sqrt %204 : vector<16x1xf32>
    %206 = vector.broadcast %192 : vector<1x128xf32> to vector<16x128xf32>
    %207 = arith.mulf %206, %199 : vector<16x128xf32>
    %cst_57 = arith.constant 9.99999997E-7 : f32
    %208 = vector.broadcast %cst_57 : f32 to vector<16x1xf32>
    %209 = arith.addf %205, %208 : vector<16x1xf32>
    %210 = vector.broadcast %209 : vector<16x1xf32> to vector<16x128xf32>
    %211 = arith.divf %207, %210 : vector<16x128xf32>
    %212 = vector.broadcast %193 : vector<1x128xf32> to vector<16x128xf32>
    %213 = arith.addf %211, %212 : vector<16x128xf32>
    %c0_58 = arith.constant 0 : index
    %c0_59 = arith.constant 0 : index
    %c0_60 = arith.constant 0 : index
    %214 = vector.load %arg5[%c0_58, %c0_59, %c0_60] : memref<2x128x256xf32, #tpu.memory_space<vmem>>, vector<1x128x256xf32>
    %215 = vector.shape_cast %214 : vector<1x128x256xf32> to vector<128x256xf32>
    %cst_61 = arith.constant dense<0.000000e+00> : vector<16x256xf32>
    %216 = tpu.matmul %213, %215, %cst_61 {dimension_numbers = #tpu.dot_dimension_numbers<[1], [0], [0], [1], [0, 0, 1, 1], [], []>} : vector<16x128xf32>, vector<128x256xf32>, vector<16x256xf32> -> vector<16x256xf32>
    %c0_62 = arith.constant 0 : index
    %c0_63 = arith.constant 0 : index
    %c0_64 = arith.constant 0 : index
    %217 = vector.load %arg6[%c0_62, %c0_63, %c0_64] : memref<2x1x256xf32, #tpu.memory_space<vmem>>, vector<1x1x256xf32>
    %218 = vector.shape_cast %217 : vector<1x1x256xf32> to vector<1x256xf32>
    %219 = vector.broadcast %218 : vector<1x256xf32> to vector<16x256xf32>
    %220 = arith.addf %216, %219 : vector<16x256xf32>
    %cst_65 = arith.constant 0.000000e+00 : f32
    %221 = vector.broadcast %cst_65 : f32 to vector<16x256xf32>
    %222 = arith.maximumf %220, %221 : vector<16x256xf32>
    %c0_66 = arith.constant 0 : index
    %c0_67 = arith.constant 0 : index
    %c0_68 = arith.constant 0 : index
    %223 = vector.load %arg7[%c0_66, %c0_67, %c0_68] : memref<2x256x128xf32, #tpu.memory_space<vmem>>, vector<1x256x128xf32>
    %224 = vector.shape_cast %223 : vector<1x256x128xf32> to vector<256x128xf32>
    %cst_69 = arith.constant dense<0.000000e+00> : vector<16x128xf32>
    %225 = tpu.matmul %222, %224, %cst_69 {dimension_numbers = #tpu.dot_dimension_numbers<[1], [0], [0], [1], [0, 0, 1, 1], [], []>} : vector<16x256xf32>, vector<256x128xf32>, vector<16x128xf32> -> vector<16x128xf32>
    %c0_70 = arith.constant 0 : index
    %c0_71 = arith.constant 0 : index
    %c0_72 = arith.constant 0 : index
    %226 = vector.load %arg8[%c0_70, %c0_71, %c0_72] : memref<2x1x128xf32, #tpu.memory_space<vmem>>, vector<1x1x128xf32>
    %227 = vector.shape_cast %226 : vector<1x1x128xf32> to vector<1x128xf32>
    %228 = vector.broadcast %227 : vector<1x128xf32> to vector<16x128xf32>
    %229 = arith.addf %225, %228 : vector<16x128xf32>
    %230 = arith.addf %191, %229 : vector<16x128xf32>
    %c1 = arith.constant 1 : index
    %c0_73 = arith.constant 0 : index
    %c0_74 = arith.constant 0 : index
    %c0_75 = arith.constant 0 : index
    %231 = vector.load %arg3[%c1, %c0_73, %c0_74, %c0_75] : memref<2x7x128x128xf32, #tpu.memory_space<vmem>>, vector<1x7x128x128xf32>
    %232 = vector.shape_cast %231 : vector<1x7x128x128xf32> to vector<7x128x128xf32>
    %c1_76 = arith.constant 1 : index
    %c0_77 = arith.constant 0 : index
    %c0_78 = arith.constant 0 : index
    %233 = vector.load %arg4[%c1_76, %c0_77, %c0_78] : memref<2x7x128xf32, #tpu.memory_space<vmem>>, vector<1x7x128xf32>
    %234 = vector.shape_cast %233 : vector<1x7x128xf32> to vector<7x128xf32>
    %235 = vector.extract_strided_slice %2 {offsets = [3, 0], sizes = [1, 128], strides = [1, 1]} : vector<5x128xf32> to vector<1x128xf32>
    %236 = vector.extract_strided_slice %3 {offsets = [3, 0], sizes = [1, 128], strides = [1, 1]} : vector<5x128xf32> to vector<1x128xf32>
    %cst_79 = arith.constant dense<0.000000e+00> : vector<16xf32>
    %237 = vector.multi_reduction <add>, %230, %cst_79 [1] : vector<16x128xf32> to vector<16xf32>
    %238 = vector.shape_cast %237 : vector<16xf32> to vector<16x1xf32>
    %cst_80 = arith.constant 1.280000e+02 : f32
    %239 = vector.broadcast %cst_80 : f32 to vector<16x1xf32>
    %240 = arith.divf %238, %239 : vector<16x1xf32>
    %241 = vector.broadcast %240 : vector<16x1xf32> to vector<16x128xf32>
    %242 = arith.subf %230, %241 : vector<16x128xf32>
    %243 = arith.mulf %242, %242 : vector<16x128xf32>
    %cst_81 = arith.constant dense<0.000000e+00> : vector<16xf32>
    %244 = vector.multi_reduction <add>, %243, %cst_81 [1] : vector<16x128xf32> to vector<16xf32>
    %245 = vector.shape_cast %244 : vector<16xf32> to vector<16x1xf32>
    %cst_82 = arith.constant 0.00787401571 : f32
    %246 = vector.broadcast %cst_82 : f32 to vector<16x1xf32>
    %247 = arith.mulf %245, %246 : vector<16x1xf32>
    %248 = math.sqrt %247 : vector<16x1xf32>
    %249 = vector.broadcast %235 : vector<1x128xf32> to vector<16x128xf32>
    %250 = arith.mulf %249, %242 : vector<16x128xf32>
    %cst_83 = arith.constant 9.99999997E-7 : f32
    %251 = vector.broadcast %cst_83 : f32 to vector<16x1xf32>
    %252 = arith.addf %248, %251 : vector<16x1xf32>
    %253 = vector.broadcast %252 : vector<16x1xf32> to vector<16x128xf32>
    %254 = arith.divf %250, %253 : vector<16x128xf32>
    %255 = vector.broadcast %236 : vector<1x128xf32> to vector<16x128xf32>
    %256 = arith.addf %254, %255 : vector<16x128xf32>
    %257 = vector.extract_strided_slice %232 {offsets = [0, 0, 0], sizes = [1, 128, 128], strides = [1, 1, 1]} : vector<7x128x128xf32> to vector<1x128x128xf32>
    %258 = vector.shape_cast %257 : vector<1x128x128xf32> to vector<128x128xf32>
    %cst_84 = arith.constant dense<0.000000e+00> : vector<16x128xf32>
    %259 = tpu.matmul %256, %258, %cst_84 {dimension_numbers = #tpu.dot_dimension_numbers<[1], [0], [0], [1], [0, 0, 1, 1], [], []>} : vector<16x128xf32>, vector<128x128xf32>, vector<16x128xf32> -> vector<16x128xf32>
    %260 = vector.extract_strided_slice %234 {offsets = [0, 0], sizes = [1, 128], strides = [1, 1]} : vector<7x128xf32> to vector<1x128xf32>
    %261 = vector.broadcast %260 : vector<1x128xf32> to vector<16x128xf32>
    %262 = arith.addf %259, %261 : vector<16x128xf32>
    %263 = vector.extract_strided_slice %232 {offsets = [3, 0, 0], sizes = [1, 128, 128], strides = [1, 1, 1]} : vector<7x128x128xf32> to vector<1x128x128xf32>
    %264 = vector.shape_cast %263 : vector<1x128x128xf32> to vector<128x128xf32>
    %cst_85 = arith.constant dense<0.000000e+00> : vector<16x128xf32>
    %265 = tpu.matmul %256, %264, %cst_85 {dimension_numbers = #tpu.dot_dimension_numbers<[1], [0], [0], [1], [0, 0, 1, 1], [], []>} : vector<16x128xf32>, vector<128x128xf32>, vector<16x128xf32> -> vector<16x128xf32>
    %266 = vector.extract_strided_slice %234 {offsets = [3, 0], sizes = [1, 128], strides = [1, 1]} : vector<7x128xf32> to vector<1x128xf32>
    %267 = vector.broadcast %266 : vector<1x128xf32> to vector<16x128xf32>
    %268 = arith.addf %265, %267 : vector<16x128xf32>
    %269 = vector.shape_cast %22 : vector<16x1xi1> to vector<16x1xi1>
    %270 = vector.broadcast %269 : vector<16x1xi1> to vector<16x128xi1>
    %271 = arith.select %270, %262, %268 : vector<16x128xi1>, vector<16x128xf32>
    %272 = vector.extract_strided_slice %232 {offsets = [1, 0, 0], sizes = [1, 128, 128], strides = [1, 1, 1]} : vector<7x128x128xf32> to vector<1x128x128xf32>
    %273 = vector.shape_cast %272 : vector<1x128x128xf32> to vector<128x128xf32>
    %cst_86 = arith.constant dense<0.000000e+00> : vector<16x128xf32>
    %274 = tpu.matmul %256, %273, %cst_86 {dimension_numbers = #tpu.dot_dimension_numbers<[1], [0], [0], [1], [0, 0, 1, 1], [], []>} : vector<16x128xf32>, vector<128x128xf32>, vector<16x128xf32> -> vector<16x128xf32>
    %275 = vector.extract_strided_slice %234 {offsets = [1, 0], sizes = [1, 128], strides = [1, 1]} : vector<7x128xf32> to vector<1x128xf32>
    %276 = vector.broadcast %275 : vector<1x128xf32> to vector<16x128xf32>
    %277 = arith.addf %274, %276 : vector<16x128xf32>
    %278 = vector.extract_strided_slice %232 {offsets = [4, 0, 0], sizes = [1, 128, 128], strides = [1, 1, 1]} : vector<7x128x128xf32> to vector<1x128x128xf32>
    %279 = vector.shape_cast %278 : vector<1x128x128xf32> to vector<128x128xf32>
    %cst_87 = arith.constant dense<0.000000e+00> : vector<16x128xf32>
    %280 = tpu.matmul %256, %279, %cst_87 {dimension_numbers = #tpu.dot_dimension_numbers<[1], [0], [0], [1], [0, 0, 1, 1], [], []>} : vector<16x128xf32>, vector<128x128xf32>, vector<16x128xf32> -> vector<16x128xf32>
    %281 = vector.extract_strided_slice %234 {offsets = [4, 0], sizes = [1, 128], strides = [1, 1]} : vector<7x128xf32> to vector<1x128xf32>
    %282 = vector.broadcast %281 : vector<1x128xf32> to vector<16x128xf32>
    %283 = arith.addf %280, %282 : vector<16x128xf32>
    %284 = vector.shape_cast %22 : vector<16x1xi1> to vector<16x1xi1>
    %285 = vector.broadcast %284 : vector<16x1xi1> to vector<16x128xi1>
    %286 = arith.select %285, %277, %283 : vector<16x128xi1>, vector<16x128xf32>
    %287 = vector.extract_strided_slice %232 {offsets = [2, 0, 0], sizes = [1, 128, 128], strides = [1, 1, 1]} : vector<7x128x128xf32> to vector<1x128x128xf32>
    %288 = vector.shape_cast %287 : vector<1x128x128xf32> to vector<128x128xf32>
    %cst_88 = arith.constant dense<0.000000e+00> : vector<16x128xf32>
    %289 = tpu.matmul %256, %288, %cst_88 {dimension_numbers = #tpu.dot_dimension_numbers<[1], [0], [0], [1], [0, 0, 1, 1], [], []>} : vector<16x128xf32>, vector<128x128xf32>, vector<16x128xf32> -> vector<16x128xf32>
    %290 = vector.extract_strided_slice %234 {offsets = [2, 0], sizes = [1, 128], strides = [1, 1]} : vector<7x128xf32> to vector<1x128xf32>
    %291 = vector.broadcast %290 : vector<1x128xf32> to vector<16x128xf32>
    %292 = arith.addf %289, %291 : vector<16x128xf32>
    %293 = vector.extract_strided_slice %232 {offsets = [5, 0, 0], sizes = [1, 128, 128], strides = [1, 1, 1]} : vector<7x128x128xf32> to vector<1x128x128xf32>
    %294 = vector.shape_cast %293 : vector<1x128x128xf32> to vector<128x128xf32>
    %cst_89 = arith.constant dense<0.000000e+00> : vector<16x128xf32>
    %295 = tpu.matmul %256, %294, %cst_89 {dimension_numbers = #tpu.dot_dimension_numbers<[1], [0], [0], [1], [0, 0, 1, 1], [], []>} : vector<16x128xf32>, vector<128x128xf32>, vector<16x128xf32> -> vector<16x128xf32>
    %296 = vector.extract_strided_slice %234 {offsets = [5, 0], sizes = [1, 128], strides = [1, 1]} : vector<7x128xf32> to vector<1x128xf32>
    %297 = vector.broadcast %296 : vector<1x128xf32> to vector<16x128xf32>
    %298 = arith.addf %295, %297 : vector<16x128xf32>
    %299 = vector.shape_cast %22 : vector<16x1xi1> to vector<16x1xi1>
    %300 = vector.broadcast %299 : vector<16x1xi1> to vector<16x128xi1>
    %301 = arith.select %300, %292, %298 : vector<16x128xi1>, vector<16x128xf32>
    %302 = vector.shape_cast %271 : vector<16x128xf32> to vector<2x8x128xf32>
    %303 = vector.shape_cast %286 : vector<16x128xf32> to vector<2x8x128xf32>
    %304 = vector.shape_cast %301 : vector<16x128xf32> to vector<2x8x128xf32>
    %305 = vector.extract_strided_slice %302 {offsets = [0, 0, 0], sizes = [2, 8, 32], strides = [1, 1, 1]} : vector<2x8x128xf32> to vector<2x8x32xf32>
    %306 = vector.extract_strided_slice %303 {offsets = [0, 0, 0], sizes = [2, 8, 32], strides = [1, 1, 1]} : vector<2x8x128xf32> to vector<2x8x32xf32>
    %307 = vector.extract_strided_slice %304 {offsets = [0, 0, 0], sizes = [2, 8, 32], strides = [1, 1, 1]} : vector<2x8x128xf32> to vector<2x8x32xf32>
    "tpu.trace_start"() <{level = 10 : i32, message = "bqd,bkd->bqk"}> : () -> ()
    %cst_90 = arith.constant dense<0.000000e+00> : vector<2x8x8xf32>
    %308 = tpu.matmul %305, %306, %cst_90 {dimension_numbers = #tpu.dot_dimension_numbers<[2], [2], [1], [1], [0, 0, 0, 1, 1, 1], [0], [0]>} : vector<2x8x32xf32>, vector<2x8x32xf32>, vector<2x8x8xf32> -> vector<2x8x8xf32>
    "tpu.trace_stop"() : () -> ()
    %cst_91 = arith.constant 0.176776692 : f32
    %309 = vector.broadcast %cst_91 : f32 to vector<2x8x8xf32>
    %310 = arith.mulf %308, %309 : vector<2x8x8xf32>
    %cst_92 = arith.constant dense<0xFF800000> : vector<2x8xf32>
    %311 = vector.multi_reduction <maximumf>, %310, %cst_92 [2] : vector<2x8x8xf32> to vector<2x8xf32>
    %312 = vector.shape_cast %311 : vector<2x8xf32> to vector<2x8x1xf32>
    %313 = vector.broadcast %312 : vector<2x8x1xf32> to vector<2x8x8xf32>
    %314 = arith.subf %310, %313 : vector<2x8x8xf32>
    %315 = math.exp %314 : vector<2x8x8xf32>
    %cst_93 = arith.constant dense<0.000000e+00> : vector<2x8xf32>
    %316 = vector.multi_reduction <add>, %315, %cst_93 [2] : vector<2x8x8xf32> to vector<2x8xf32>
    %317 = vector.shape_cast %316 : vector<2x8xf32> to vector<2x8x1xf32>
    %318 = vector.broadcast %317 : vector<2x8x1xf32> to vector<2x8x8xf32>
    %319 = arith.divf %315, %318 : vector<2x8x8xf32>
    "tpu.trace_start"() <{level = 10 : i32, message = "bqk,bkd->bqd"}> : () -> ()
    %cst_94 = arith.constant dense<0.000000e+00> : vector<2x8x32xf32>
    %320 = tpu.matmul %319, %307, %cst_94 {dimension_numbers = #tpu.dot_dimension_numbers<[2], [1], [1], [2], [0, 0, 0, 1, 1, 2], [0], [0]>} : vector<2x8x8xf32>, vector<2x8x32xf32>, vector<2x8x32xf32> -> vector<2x8x32xf32>
    "tpu.trace_stop"() : () -> ()
    %321 = vector.extract_strided_slice %302 {offsets = [0, 0, 32], sizes = [2, 8, 32], strides = [1, 1, 1]} : vector<2x8x128xf32> to vector<2x8x32xf32>
    %322 = vector.extract_strided_slice %303 {offsets = [0, 0, 32], sizes = [2, 8, 32], strides = [1, 1, 1]} : vector<2x8x128xf32> to vector<2x8x32xf32>
    %323 = vector.extract_strided_slice %304 {offsets = [0, 0, 32], sizes = [2, 8, 32], strides = [1, 1, 1]} : vector<2x8x128xf32> to vector<2x8x32xf32>
    "tpu.trace_start"() <{level = 10 : i32, message = "bqd,bkd->bqk"}> : () -> ()
    %cst_95 = arith.constant dense<0.000000e+00> : vector<2x8x8xf32>
    %324 = tpu.matmul %321, %322, %cst_95 {dimension_numbers = #tpu.dot_dimension_numbers<[2], [2], [1], [1], [0, 0, 0, 1, 1, 1], [0], [0]>} : vector<2x8x32xf32>, vector<2x8x32xf32>, vector<2x8x8xf32> -> vector<2x8x8xf32>
    "tpu.trace_stop"() : () -> ()
    %cst_96 = arith.constant 0.176776692 : f32
    %325 = vector.broadcast %cst_96 : f32 to vector<2x8x8xf32>
    %326 = arith.mulf %324, %325 : vector<2x8x8xf32>
    %cst_97 = arith.constant dense<0xFF800000> : vector<2x8xf32>
    %327 = vector.multi_reduction <maximumf>, %326, %cst_97 [2] : vector<2x8x8xf32> to vector<2x8xf32>
    %328 = vector.shape_cast %327 : vector<2x8xf32> to vector<2x8x1xf32>
    %329 = vector.broadcast %328 : vector<2x8x1xf32> to vector<2x8x8xf32>
    %330 = arith.subf %326, %329 : vector<2x8x8xf32>
    %331 = math.exp %330 : vector<2x8x8xf32>
    %cst_98 = arith.constant dense<0.000000e+00> : vector<2x8xf32>
    %332 = vector.multi_reduction <add>, %331, %cst_98 [2] : vector<2x8x8xf32> to vector<2x8xf32>
    %333 = vector.shape_cast %332 : vector<2x8xf32> to vector<2x8x1xf32>
    %334 = vector.broadcast %333 : vector<2x8x1xf32> to vector<2x8x8xf32>
    %335 = arith.divf %331, %334 : vector<2x8x8xf32>
    "tpu.trace_start"() <{level = 10 : i32, message = "bqk,bkd->bqd"}> : () -> ()
    %cst_99 = arith.constant dense<0.000000e+00> : vector<2x8x32xf32>
    %336 = tpu.matmul %335, %323, %cst_99 {dimension_numbers = #tpu.dot_dimension_numbers<[2], [1], [1], [2], [0, 0, 0, 1, 1, 2], [0], [0]>} : vector<2x8x8xf32>, vector<2x8x32xf32>, vector<2x8x32xf32> -> vector<2x8x32xf32>
    "tpu.trace_stop"() : () -> ()
    %337 = vector.extract_strided_slice %302 {offsets = [0, 0, 64], sizes = [2, 8, 32], strides = [1, 1, 1]} : vector<2x8x128xf32> to vector<2x8x32xf32>
    %338 = vector.extract_strided_slice %303 {offsets = [0, 0, 64], sizes = [2, 8, 32], strides = [1, 1, 1]} : vector<2x8x128xf32> to vector<2x8x32xf32>
    %339 = vector.extract_strided_slice %304 {offsets = [0, 0, 64], sizes = [2, 8, 32], strides = [1, 1, 1]} : vector<2x8x128xf32> to vector<2x8x32xf32>
    "tpu.trace_start"() <{level = 10 : i32, message = "bqd,bkd->bqk"}> : () -> ()
    %cst_100 = arith.constant dense<0.000000e+00> : vector<2x8x8xf32>
    %340 = tpu.matmul %337, %338, %cst_100 {dimension_numbers = #tpu.dot_dimension_numbers<[2], [2], [1], [1], [0, 0, 0, 1, 1, 1], [0], [0]>} : vector<2x8x32xf32>, vector<2x8x32xf32>, vector<2x8x8xf32> -> vector<2x8x8xf32>
    "tpu.trace_stop"() : () -> ()
    %cst_101 = arith.constant 0.176776692 : f32
    %341 = vector.broadcast %cst_101 : f32 to vector<2x8x8xf32>
    %342 = arith.mulf %340, %341 : vector<2x8x8xf32>
    %cst_102 = arith.constant dense<0xFF800000> : vector<2x8xf32>
    %343 = vector.multi_reduction <maximumf>, %342, %cst_102 [2] : vector<2x8x8xf32> to vector<2x8xf32>
    %344 = vector.shape_cast %343 : vector<2x8xf32> to vector<2x8x1xf32>
    %345 = vector.broadcast %344 : vector<2x8x1xf32> to vector<2x8x8xf32>
    %346 = arith.subf %342, %345 : vector<2x8x8xf32>
    %347 = math.exp %346 : vector<2x8x8xf32>
    %cst_103 = arith.constant dense<0.000000e+00> : vector<2x8xf32>
    %348 = vector.multi_reduction <add>, %347, %cst_103 [2] : vector<2x8x8xf32> to vector<2x8xf32>
    %349 = vector.shape_cast %348 : vector<2x8xf32> to vector<2x8x1xf32>
    %350 = vector.broadcast %349 : vector<2x8x1xf32> to vector<2x8x8xf32>
    %351 = arith.divf %347, %350 : vector<2x8x8xf32>
    "tpu.trace_start"() <{level = 10 : i32, message = "bqk,bkd->bqd"}> : () -> ()
    %cst_104 = arith.constant dense<0.000000e+00> : vector<2x8x32xf32>
    %352 = tpu.matmul %351, %339, %cst_104 {dimension_numbers = #tpu.dot_dimension_numbers<[2], [1], [1], [2], [0, 0, 0, 1, 1, 2], [0], [0]>} : vector<2x8x8xf32>, vector<2x8x32xf32>, vector<2x8x32xf32> -> vector<2x8x32xf32>
    "tpu.trace_stop"() : () -> ()
    %353 = vector.extract_strided_slice %302 {offsets = [0, 0, 96], sizes = [2, 8, 32], strides = [1, 1, 1]} : vector<2x8x128xf32> to vector<2x8x32xf32>
    %354 = vector.extract_strided_slice %303 {offsets = [0, 0, 96], sizes = [2, 8, 32], strides = [1, 1, 1]} : vector<2x8x128xf32> to vector<2x8x32xf32>
    %355 = vector.extract_strided_slice %304 {offsets = [0, 0, 96], sizes = [2, 8, 32], strides = [1, 1, 1]} : vector<2x8x128xf32> to vector<2x8x32xf32>
    "tpu.trace_start"() <{level = 10 : i32, message = "bqd,bkd->bqk"}> : () -> ()
    %cst_105 = arith.constant dense<0.000000e+00> : vector<2x8x8xf32>
    %356 = tpu.matmul %353, %354, %cst_105 {dimension_numbers = #tpu.dot_dimension_numbers<[2], [2], [1], [1], [0, 0, 0, 1, 1, 1], [0], [0]>} : vector<2x8x32xf32>, vector<2x8x32xf32>, vector<2x8x8xf32> -> vector<2x8x8xf32>
    "tpu.trace_stop"() : () -> ()
    %cst_106 = arith.constant 0.176776692 : f32
    %357 = vector.broadcast %cst_106 : f32 to vector<2x8x8xf32>
    %358 = arith.mulf %356, %357 : vector<2x8x8xf32>
    %cst_107 = arith.constant dense<0xFF800000> : vector<2x8xf32>
    %359 = vector.multi_reduction <maximumf>, %358, %cst_107 [2] : vector<2x8x8xf32> to vector<2x8xf32>
    %360 = vector.shape_cast %359 : vector<2x8xf32> to vector<2x8x1xf32>
    %361 = vector.broadcast %360 : vector<2x8x1xf32> to vector<2x8x8xf32>
    %362 = arith.subf %358, %361 : vector<2x8x8xf32>
    %363 = math.exp %362 : vector<2x8x8xf32>
    %cst_108 = arith.constant dense<0.000000e+00> : vector<2x8xf32>
    %364 = vector.multi_reduction <add>, %363, %cst_108 [2] : vector<2x8x8xf32> to vector<2x8xf32>
    %365 = vector.shape_cast %364 : vector<2x8xf32> to vector<2x8x1xf32>
    %366 = vector.broadcast %365 : vector<2x8x1xf32> to vector<2x8x8xf32>
    %367 = arith.divf %363, %366 : vector<2x8x8xf32>
    "tpu.trace_start"() <{level = 10 : i32, message = "bqk,bkd->bqd"}> : () -> ()
    %cst_109 = arith.constant dense<0.000000e+00> : vector<2x8x32xf32>
    %368 = tpu.matmul %367, %355, %cst_109 {dimension_numbers = #tpu.dot_dimension_numbers<[2], [1], [1], [2], [0, 0, 0, 1, 1, 2], [0], [0]>} : vector<2x8x8xf32>, vector<2x8x32xf32>, vector<2x8x32xf32> -> vector<2x8x32xf32>
    "tpu.trace_stop"() : () -> ()
    %369 = tpu.concatenate %320, %336, %352, %368 in 2 : vector<2x8x32xf32>, vector<2x8x32xf32>, vector<2x8x32xf32>, vector<2x8x32xf32> -> vector<2x8x128xf32>
    %370 = vector.shape_cast %369 : vector<2x8x128xf32> to vector<16x128xf32>
    %371 = vector.extract_strided_slice %232 {offsets = [6, 0, 0], sizes = [1, 128, 128], strides = [1, 1, 1]} : vector<7x128x128xf32> to vector<1x128x128xf32>
    %372 = vector.shape_cast %371 : vector<1x128x128xf32> to vector<128x128xf32>
    %cst_110 = arith.constant dense<0.000000e+00> : vector<16x128xf32>
    %373 = tpu.matmul %370, %372, %cst_110 {dimension_numbers = #tpu.dot_dimension_numbers<[1], [0], [0], [1], [0, 0, 1, 1], [], []>} : vector<16x128xf32>, vector<128x128xf32>, vector<16x128xf32> -> vector<16x128xf32>
    %374 = vector.extract_strided_slice %234 {offsets = [6, 0], sizes = [1, 128], strides = [1, 1]} : vector<7x128xf32> to vector<1x128xf32>
    %375 = vector.broadcast %374 : vector<1x128xf32> to vector<16x128xf32>
    %376 = arith.addf %373, %375 : vector<16x128xf32>
    %377 = arith.addf %230, %376 : vector<16x128xf32>
    %378 = vector.extract_strided_slice %2 {offsets = [4, 0], sizes = [1, 128], strides = [1, 1]} : vector<5x128xf32> to vector<1x128xf32>
    %379 = vector.extract_strided_slice %3 {offsets = [4, 0], sizes = [1, 128], strides = [1, 1]} : vector<5x128xf32> to vector<1x128xf32>
    %cst_111 = arith.constant dense<0.000000e+00> : vector<16xf32>
    %380 = vector.multi_reduction <add>, %377, %cst_111 [1] : vector<16x128xf32> to vector<16xf32>
    %381 = vector.shape_cast %380 : vector<16xf32> to vector<16x1xf32>
    %cst_112 = arith.constant 1.280000e+02 : f32
    %382 = vector.broadcast %cst_112 : f32 to vector<16x1xf32>
    %383 = arith.divf %381, %382 : vector<16x1xf32>
    %384 = vector.broadcast %383 : vector<16x1xf32> to vector<16x128xf32>
    %385 = arith.subf %377, %384 : vector<16x128xf32>
    %386 = arith.mulf %385, %385 : vector<16x128xf32>
    %cst_113 = arith.constant dense<0.000000e+00> : vector<16xf32>
    %387 = vector.multi_reduction <add>, %386, %cst_113 [1] : vector<16x128xf32> to vector<16xf32>
    %388 = vector.shape_cast %387 : vector<16xf32> to vector<16x1xf32>
    %cst_114 = arith.constant 0.00787401571 : f32
    %389 = vector.broadcast %cst_114 : f32 to vector<16x1xf32>
    %390 = arith.mulf %388, %389 : vector<16x1xf32>
    %391 = math.sqrt %390 : vector<16x1xf32>
    %392 = vector.broadcast %378 : vector<1x128xf32> to vector<16x128xf32>
    %393 = arith.mulf %392, %385 : vector<16x128xf32>
    %cst_115 = arith.constant 9.99999997E-7 : f32
    %394 = vector.broadcast %cst_115 : f32 to vector<16x1xf32>
    %395 = arith.addf %391, %394 : vector<16x1xf32>
    %396 = vector.broadcast %395 : vector<16x1xf32> to vector<16x128xf32>
    %397 = arith.divf %393, %396 : vector<16x128xf32>
    %398 = vector.broadcast %379 : vector<1x128xf32> to vector<16x128xf32>
    %399 = arith.addf %397, %398 : vector<16x128xf32>
    %c1_116 = arith.constant 1 : index
    %c0_117 = arith.constant 0 : index
    %c0_118 = arith.constant 0 : index
    %400 = vector.load %arg5[%c1_116, %c0_117, %c0_118] : memref<2x128x256xf32, #tpu.memory_space<vmem>>, vector<1x128x256xf32>
    %401 = vector.shape_cast %400 : vector<1x128x256xf32> to vector<128x256xf32>
    %cst_119 = arith.constant dense<0.000000e+00> : vector<16x256xf32>
    %402 = tpu.matmul %399, %401, %cst_119 {dimension_numbers = #tpu.dot_dimension_numbers<[1], [0], [0], [1], [0, 0, 1, 1], [], []>} : vector<16x128xf32>, vector<128x256xf32>, vector<16x256xf32> -> vector<16x256xf32>
    %c1_120 = arith.constant 1 : index
    %c0_121 = arith.constant 0 : index
    %c0_122 = arith.constant 0 : index
    %403 = vector.load %arg6[%c1_120, %c0_121, %c0_122] : memref<2x1x256xf32, #tpu.memory_space<vmem>>, vector<1x1x256xf32>
    %404 = vector.shape_cast %403 : vector<1x1x256xf32> to vector<1x256xf32>
    %405 = vector.broadcast %404 : vector<1x256xf32> to vector<16x256xf32>
    %406 = arith.addf %402, %405 : vector<16x256xf32>
    %cst_123 = arith.constant 0.000000e+00 : f32
    %407 = vector.broadcast %cst_123 : f32 to vector<16x256xf32>
    %408 = arith.maximumf %406, %407 : vector<16x256xf32>
    %c1_124 = arith.constant 1 : index
    %c0_125 = arith.constant 0 : index
    %c0_126 = arith.constant 0 : index
    %409 = vector.load %arg7[%c1_124, %c0_125, %c0_126] : memref<2x256x128xf32, #tpu.memory_space<vmem>>, vector<1x256x128xf32>
    %410 = vector.shape_cast %409 : vector<1x256x128xf32> to vector<256x128xf32>
    %cst_127 = arith.constant dense<0.000000e+00> : vector<16x128xf32>
    %411 = tpu.matmul %408, %410, %cst_127 {dimension_numbers = #tpu.dot_dimension_numbers<[1], [0], [0], [1], [0, 0, 1, 1], [], []>} : vector<16x256xf32>, vector<256x128xf32>, vector<16x128xf32> -> vector<16x128xf32>
    %c1_128 = arith.constant 1 : index
    %c0_129 = arith.constant 0 : index
    %c0_130 = arith.constant 0 : index
    %412 = vector.load %arg8[%c1_128, %c0_129, %c0_130] : memref<2x1x128xf32, #tpu.memory_space<vmem>>, vector<1x1x128xf32>
    %413 = vector.shape_cast %412 : vector<1x1x128xf32> to vector<1x128xf32>
    %414 = vector.broadcast %413 : vector<1x128xf32> to vector<16x128xf32>
    %415 = arith.addf %411, %414 : vector<16x128xf32>
    %416 = arith.addf %377, %415 : vector<16x128xf32>
    %417 = vector.shape_cast %416 : vector<16x128xf32> to vector<2x8x128xf32>
    %c0_131 = arith.constant 0 : index
    %c0_132 = arith.constant 0 : index
    %c0_133 = arith.constant 0 : index
    %418 = vector.load %arg9[%c0_131, %c0_132, %c0_133] : memref<2x8x128xf32, #tpu.memory_space<vmem>>, vector<2x8x128xf32>
    tpu.vector_store %arg9[%c0_131, %c0_132, %c0_133], %417 {strides = array<i32>} : memref<2x8x128xf32, #tpu.memory_space<vmem>>, vector<2x8x128xf32>,
    return
  }
}

</mosaic_0001>

<llo_original>
// kernel: tpu_custom_call.1
$region0: #{tpu_custom_call.1}
  #allocation0 [shape = 'u32[]', space=smem, size = 0x4, offset = 0x4, fixed_abs, tag = 'smem constant byte address 0x4 - core index']
  #allocation1 [shape = 'u32[144,128]{1,0:T(1,128)}', space=vmem, size = 0x12000, scoped, tag = 'internal scratch']
  %s0 = inlined_call_operand.vmem [shape: f32[2,8,128], index: 0, kind: input, shape index: {}]
  %s1 = inlined_call_operand.vmem [shape: f32[5,128], index: 1, kind: input, shape index: {}]
  %s2 = inlined_call_operand.hbm [shape: f32[5,128], index: 2, kind: input, shape index: {}]
  %s3 = inlined_call_operand.hbm [shape: f32[2,7,128,128], index: 3, kind: input, shape index: {}]
  %s4 = inlined_call_operand.vmem [shape: f32[2,7,128], index: 4, kind: input, shape index: {}]
  %s5 = inlined_call_operand.hbm [shape: f32[2,128,256], index: 5, kind: input, shape index: {}]
  %s6 = inlined_call_operand.vmem [shape: f32[2,1,256], index: 6, kind: input, shape index: {}]
  %s7 = inlined_call_operand.hbm [shape: f32[2,256,128], index: 7, kind: input, shape index: {}]
  %s8 = inlined_call_operand.vmem [shape: f32[2,1,128], index: 8, kind: input, shape index: {}]
  %s9 = inlined_call_operand.hbm [shape: f32[2,8,128], index: 9, kind: output, shape index: {}]
  %s10 = sld [smem:[#allocation0]]
  $region62: #{tpu_custom_call.1} parent=0
    _
  %s12 = ssub.s32 1, %s10
  %s13 = scalar_select 0, %s12, %s10
  $region1: #{tpu_custom_call.1} parent=0
    #allocation2 [shape = 'u8[4096]{0}', space=vmem, size = 0x1000, scoped, tag = 'input window, operand 2, single buffered']
    #allocation3 [shape = 's32[1]{0}', space=sflag, size = 0x4, scoped, tag = 'scoped memory for tpu_custom_call.1']
    #allocation4 [shape = 's32[1]{0}', space=sflag, size = 0x4, scoped, tag = 'scoped memory for tpu_custom_call.1']
    #allocation5 [shape = 'u8[917504]{0}', space=vmem, size = 0xe0000, scoped, tag = 'input window, operand 3, single buffered']
    #allocation6 [shape = 's32[1]{0}', space=sflag, size = 0x4, scoped, tag = 'scoped memory for tpu_custom_call.1']
    #allocation7 [shape = 'u8[262144]{0}', space=vmem, size = 0x40000, scoped, tag = 'input window, operand 5, single buffered']
    #allocation8 [shape = 'u8[262144]{0}', space=vmem, size = 0x40000, scoped, tag = 'input window, operand 7, single buffered']
    #allocation9 [shape = 's32[1]{0}', space=sflag, size = 0x4, scoped, tag = 'scoped memory for tpu_custom_call.1']
    #allocation10 [shape = 'u8[8192]{0}', space=vmem, size = 0x2000, scoped, tag = 'output window, operand 0, single buffered']
    %14 = vsyncpa [#allocation3], 0
    %15 = vsyncpa [#allocation6], 0
    %16 = vsyncpa [#allocation9], 0
    %17 = vsyncpa [#allocation4], 0
    // Predicated region
    $region2: #{tpu_custom_call.1} parent=1 // pred_check
      _
    $region3: #{tpu_custom_call.1} parent=1 // pred_check_branch
      %19 = sbr.rel (0) target = $region5
    $region4: #{tpu_custom_call.1} parent=1 // pred_region
      _
    $region5: #{tpu_custom_call.1} parent=1 // pred_fallthru
      _
    // Predicated region
    $region6: #{tpu_custom_call.1} parent=1 // pred_check
      _
    $region7: #{tpu_custom_call.1} parent=1 // pred_check_branch
      %21 = sbr.rel (0) target = $region9
    $region8: #{tpu_custom_call.1} parent=1 // pred_region
      _
    $region9: #{tpu_custom_call.1} parent=1 // pred_fallthru
      _
    // Predicated region
    $region10: #{tpu_custom_call.1} parent=1 // pred_check
      _
    $region11: #{tpu_custom_call.1} parent=1 // pred_check_branch
      %23 = sbr.rel (0) target = $region13
    $region12: #{tpu_custom_call.1} parent=1 // pred_region
      %s25 = ssub.s32 128, 128
      %26 = vsyncadd [#allocation3], %s25
      %s28 = sshll.u32 [#allocation2], 4
      %s29 = int_to_ptr.vmem [resolvable:$true] %s28
      %31 = dma.hbm_to_vmem [thread:$0]  %s2, 128, %s29, [#allocation3]
    $region13: #{tpu_custom_call.1} parent=1 // pred_fallthru
      _
    // Predicated region
    $region14: #{tpu_custom_call.1} parent=1 // pred_check
      _
    $region15: #{tpu_custom_call.1} parent=1 // pred_check_branch
      %33 = sbr.rel (0) target = $region17
    $region16: #{tpu_custom_call.1} parent=1 // pred_region
      %s35 = ssub.s32 28672, 28672
      %36 = vsyncadd [#allocation6], %s35
      %s37 = sshll.u32 [#allocation5], 4
      %s38 = int_to_ptr.vmem [resolvable:$true] %s37
      %43 = dma.hbm_to_vmem [thread:$0]  %s3, 28672, %s38, [#allocation6], 128, 128, 8
    $region17: #{tpu_custom_call.1} parent=1 // pred_fallthru
      _
    // Predicated region
    $region18: #{tpu_custom_call.1} parent=1 // pred_check
      _
    $region19: #{tpu_custom_call.1} parent=1 // pred_check_branch
      %45 = sbr.rel (0) target = $region21
    $region20: #{tpu_custom_call.1} parent=1 // pred_region
      _
    $region21: #{tpu_custom_call.1} parent=1 // pred_fallthru
      _
    // Predicated region
    $region22: #{tpu_custom_call.1} parent=1 // pred_check
      _
    $region23: #{tpu_custom_call.1} parent=1 // pred_check_branch
      %47 = sbr.rel (0) target = $region25
    $region24: #{tpu_custom_call.1} parent=1 // pred_region
      %s49 = ssub.s32 8192, 8192
      %50 = vsyncadd [#allocation6], %s49
      %s51 = sshll.u32 [#allocation7], 4
      %s52 = int_to_ptr.vmem [resolvable:$true] %s51
      %57 = dma.hbm_to_vmem [thread:$0]  %s5, 8192, %s52, [#allocation6], 256, 256, 16
    $region25: #{tpu_custom_call.1} parent=1 // pred_fallthru
      _
    // Predicated region
    $region26: #{tpu_custom_call.1} parent=1 // pred_check
      _
    $region27: #{tpu_custom_call.1} parent=1 // pred_check_branch
      %59 = sbr.rel (0) target = $region29
    $region28: #{tpu_custom_call.1} parent=1 // pred_region
      _
    $region29: #{tpu_custom_call.1} parent=1 // pred_fallthru
      _
    // Predicated region
    $region30: #{tpu_custom_call.1} parent=1 // pred_check
      _
    $region31: #{tpu_custom_call.1} parent=1 // pred_check_branch
      %61 = sbr.rel (0) target = $region33
    $region32: #{tpu_custom_call.1} parent=1 // pred_region
      %s63 = ssub.s32 8192, 8192
      %64 = vsyncadd [#allocation9], %s63
      %s65 = sshll.u32 [#allocation8], 4
      %s66 = int_to_ptr.vmem [resolvable:$true] %s65
      %71 = dma.hbm_to_vmem [thread:$0]  %s7, 8192, %s66, [#allocation9], 128, 128, 8
    $region33: #{tpu_custom_call.1} parent=1 // pred_fallthru
      _
    // Predicated region
    $region34: #{tpu_custom_call.1} parent=1 // pred_check
      _
    $region35: #{tpu_custom_call.1} parent=1 // pred_check_branch
      %73 = sbr.rel (0) target = $region37
    $region36: #{tpu_custom_call.1} parent=1 // pred_region
      _
    $region37: #{tpu_custom_call.1} parent=1 // pred_fallthru
      _
    // Predicated region
    $region38: #{tpu_custom_call.1} parent=1 // pred_check
      _
    $region39: #{tpu_custom_call.1} parent=1 // pred_check_branch
      %75 = sbr.rel (0) target = $region41
    $region40: #{tpu_custom_call.1} parent=1 // pred_region
      %76 = dma.done [#allocation3], 128
    $region41: #{tpu_custom_call.1} parent=1 // pred_fallthru
      _
    // Predicated region
    $region42: #{tpu_custom_call.1} parent=1 // pred_check
      _
    $region43: #{tpu_custom_call.1} parent=1 // pred_check_branch
      %78 = sbr.rel (0) target = $region45
    $region44: #{tpu_custom_call.1} parent=1 // pred_region
      %79 = dma.done [#allocation6], 28672
    $region45: #{tpu_custom_call.1} parent=1 // pred_fallthru
      _
    // Predicated region
    $region46: #{tpu_custom_call.1} parent=1 // pred_check
      _
    $region47: #{tpu_custom_call.1} parent=1 // pred_check_branch
      %81 = sbr.rel (0) target = $region49
    $region48: #{tpu_custom_call.1} parent=1 // pred_region
      %82 = dma.done [#allocation6], 8192
    $region49: #{tpu_custom_call.1} parent=1 // pred_fallthru
      _
    // Predicated region
    $region50: #{tpu_custom_call.1} parent=1 // pred_check
      _
    $region51: #{tpu_custom_call.1} parent=1 // pred_check_branch
      %84 = sbr.rel (0) target = $region53
    $region52: #{tpu_custom_call.1} parent=1 // pred_region
      %85 = dma.done [#allocation9], 8192
    $region53: #{tpu_custom_call.1} parent=1 // pred_fallthru
      _
    %v86 = vld [vmem:[%s0] sm:$0xff]
    %v87 = vld [vmem:[%s0 + $0x8] sm:$0xff]
    %v88 = vld [vmem:[%s1] sm:$0x1f]
    %v89 = vld [vmem:[#allocation2] sm:$0x1f]
    %v90 = vlaneseq
    %v91 = vshrl.u32 %v90, 7
    %v92 = vadd.s32 %v91, 8
    %vm93 = vcmp.lt.s32.totalorder %v91, 0
    %v94 = vsub.s32 0, %v91
    %v95 = vsel %vm93, %v94, %v91
    %v96 = vshrl.u32 %v95, 3
    %v97 = vand.u32 %v95, 7
    %v98 = vsub.s32 0, %v97
    %v99 = vsel %vm93, %v98, %v97
    %vm100 = vcmp.lt.s32.totalorder %v92, 0
    %v101 = vsub.s32 0, %v92
    %v102 = vsel %vm100, %v101, %v92
    %v103 = vshrl.u32 %v102, 3
    %v104 = vand.u32 %v102, 7
    %v105 = vsub.s32 0, %v104
    %v106 = vsel %vm100, %v105, %v104
    %vm107 = vcmp.ne.s32.totalorder %v99, 0
    %vm108 = vcmp.ne.s32.totalorder %v106, 0
    %vm109 = vcmp.lt.s32.totalorder %v99, 0
    %vm110 = vcmp.lt.s32.totalorder %v106, 0
    %vm111 = vmand %vm109, %vm107
    %vm112 = vmand %vm110, %vm108
    %v113 = vadd.s32 %v99, 8
    %v114 = vadd.s32 %v106, 8
    %v115 = vsel %vm111, %v113, %v99
    %v116 = vsel %vm112, %v114, %v106
    %vm117 = vcmp.eq.s32.totalorder %v115, 0
    %vm118 = vcmp.eq.s32.totalorder %v116, 0
    %119 = vadd.xlane.f32.xlu0 %v86
    %v120 = vpop.xlane.xlu0 %119
    %121 = vadd.xlane.f32.xlu0 %v87
    %v122 = vpop.xlane.xlu0 %121
    %v123 = vrcp.pop 128.0
    %v124 = vmul.f32 %v120, %v123
    %v125 = vmul.f32 %v122, %v123
    %v126 = vsub.f32 %v86, %v124
    %v127 = vsub.f32 %v87, %v125
    %v128 = vmul.f32 %v126, %v126
    %v129 = vmul.f32 %v127, %v127
    %130 = vadd.xlane.f32.xlu0 %v128
    %v131 = vpop.xlane.xlu0 %130
    %132 = vadd.xlane.f32.xlu0 %v129
    %v133 = vpop.xlane.xlu0 %132
    %v134 = vmul.f32 %v131, 0.007874016
    %v135 = vmul.f32 %v133, 0.007874016
    %v136 = vrsqrt.pop %v134
    %v137 = vmul.f32 %v134, %v136
    %vm138 = vcmp.eq.f32.partialorder %v134, inf
    %v139 = vsel %vm138, %v134, %v137
    %vm140 = vcmp.eq.f32.partialorder %v134, 0.0
    %v141 = vand.u32 %v134, 2147483648
    %v142 = vsel %vm140, %v141, %v139
    %v143 = vrsqrt.pop %v135
    %v144 = vmul.f32 %v135, %v143
    %vm145 = vcmp.eq.f32.partialorder %v135, inf
    %v146 = vsel %vm145, %v135, %v144
    %vm147 = vcmp.eq.f32.partialorder %v135, 0.0
    %v148 = vand.u32 %v135, 2147483648
    %v149 = vsel %vm147, %v148, %v146
    %v150 = vlaneseq
    %v151 = vshrl.u32 %v150, 7
    %v152 = vsub.s32 0, %v151
    %v153 = vrot.slane %v88, %v152
    %v154 = vmul.f32 %v153, %v126
    %v155 = vmul.f32 %v153, %v127
    %v156 = vadd.f32 %v142, 1e-06
    %v157 = vadd.f32 %v149, 1e-06
    %v158 = vrcp.pop %v156
    %v159 = vmul.f32 %v154, %v158
    %v160 = vrcp.pop %v157
    %v161 = vmul.f32 %v155, %v160
    %v162 = vlaneseq
    %v163 = vshrl.u32 %v162, 7
    %v164 = vsub.s32 0, %v163
    %v165 = vrot.slane %v89, %v164
    %v166 = vadd.f32 %v159, %v165
    %v167 = vadd.f32 %v161, %v165
    %v168 = vld [vmem:[#allocation5] sm:$0xff]
    %v169 = vld [vmem:[#allocation5 + $0x8] sm:$0xff]
    %v170 = vld [vmem:[#allocation5 + $0x10] sm:$0xff]
    %v171 = vld [vmem:[#allocation5 + $0x18] sm:$0xff]
    %v172 = vld [vmem:[#allocation5 + $0x20] sm:$0xff]
    %v173 = vld [vmem:[#allocation5 + $0x28] sm:$0xff]
    %v174 = vld [vmem:[#allocation5 + $0x30] sm:$0xff]
    %v175 = vld [vmem:[#allocation5 + $0x38] sm:$0xff]
    %v176 = vld [vmem:[#allocation5 + $0x40] sm:$0xff]
    %v177 = vld [vmem:[#allocation5 + $0x48] sm:$0xff]
    %v178 = vld [vmem:[#allocation5 + $0x50] sm:$0xff]
    %v179 = vld [vmem:[#allocation5 + $0x58] sm:$0xff]
    %v180 = vld [vmem:[#allocation5 + $0x60] sm:$0xff]
    %v181 = vld [vmem:[#allocation5 + $0x68] sm:$0xff]
    %v182 = vld [vmem:[#allocation5 + $0x70] sm:$0xff]
    %v183 = vld [vmem:[#allocation5 + $0x78] sm:$0xff]
    %v184 = vld [vmem:[#allocation5 + $0x80] sm:$0xff]
    %v185 = vld [vmem:[#allocation5 + $0x88] sm:$0xff]
    %v186 = vld [vmem:[#allocation5 + $0x90] sm:$0xff]
    %v187 = vld [vmem:[#allocation5 + $0x98] sm:$0xff]
    %v188 = vld [vmem:[#allocation5 + $0xa0] sm:$0xff]
    %v189 = vld [vmem:[#allocation5 + $0xa8] sm:$0xff]
    %v190 = vld [vmem:[#allocation5 + $0xb0] sm:$0xff]
    %v191 = vld [vmem:[#allocation5 + $0xb8] sm:$0xff]
    %v192 = vld [vmem:[#allocation5 + $0xc0] sm:$0xff]
    %v193 = vld [vmem:[#allocation5 + $0xc8] sm:$0xff]
    %v194 = vld [vmem:[#allocation5 + $0xd0] sm:$0xff]
    %v195 = vld [vmem:[#allocation5 + $0xd8] sm:$0xff]
    %v196 = vld [vmem:[#allocation5 + $0xe0] sm:$0xff]
    %v197 = vld [vmem:[#allocation5 + $0xe8] sm:$0xff]
    %v198 = vld [vmem:[#allocation5 + $0xf0] sm:$0xff]
    %v199 = vld [vmem:[#allocation5 + $0xf8] sm:$0xff]
    %v200 = vld [vmem:[#allocation5 + $0x100] sm:$0xff]
    %v201 = vld [vmem:[#allocation5 + $0x108] sm:$0xff]
    %v202 = vld [vmem:[#allocation5 + $0x110] sm:$0xff]
    %v203 = vld [vmem:[#allocation5 + $0x118] sm:$0xff]
    %v204 = vld [vmem:[#allocation5 + $0x120] sm:$0xff]
    %v205 = vld [vmem:[#allocation5 + $0x128] sm:$0xff]
    %v206 = vld [vmem:[#allocation5 + $0x130] sm:$0xff]
    %v207 = vld [vmem:[#allocation5 + $0x138] sm:$0xff]
    %v208 = vld [vmem:[#allocation5 + $0x140] sm:$0xff]
    %v209 = vld [vmem:[#allocation5 + $0x148] sm:$0xff]
    %v210 = vld [vmem:[#allocation5 + $0x150] sm:$0xff]
    %v211 = vld [vmem:[#allocation5 + $0x158] sm:$0xff]
    %v212 = vld [vmem:[#allocation5 + $0x160] sm:$0xff]
    %v213 = vld [vmem:[#allocation5 + $0x168] sm:$0xff]
    %v214 = vld [vmem:[#allocation5 + $0x170] sm:$0xff]
    %v215 = vld [vmem:[#allocation5 + $0x178] sm:$0xff]
    %v216 = vld [vmem:[#allocation5 + $0x180] sm:$0xff]
    %v217 = vld [vmem:[#allocation5 + $0x188] sm:$0xff]
    %v218 = vld [vmem:[#allocation5 + $0x190] sm:$0xff]
    %v219 = vld [vmem:[#allocation5 + $0x198] sm:$0xff]
    %v220 = vld [vmem:[#allocation5 + $0x1a0] sm:$0xff]
    %v221 = vld [vmem:[#allocation5 + $0x1a8] sm:$0xff]
    %v222 = vld [vmem:[#allocation5 + $0x1b0] sm:$0xff]
    %v223 = vld [vmem:[#allocation5 + $0x1b8] sm:$0xff]
    %v224 = vld [vmem:[#allocation5 + $0x1c0] sm:$0xff]
    %v225 = vld [vmem:[#allocation5 + $0x1c8] sm:$0xff]
    %v226 = vld [vmem:[#allocation5 + $0x1d0] sm:$0xff]
    %v227 = vld [vmem:[#allocation5 + $0x1d8] sm:$0xff]
    %v228 = vld [vmem:[#allocation5 + $0x1e0] sm:$0xff]
    %v229 = vld [vmem:[#allocation5 + $0x1e8] sm:$0xff]
    %v230 = vld [vmem:[#allocation5 + $0x1f0] sm:$0xff]
    %v231 = vld [vmem:[#allocation5 + $0x1f8] sm:$0xff]
    %v232 = vld [vmem:[#allocation5 + $0x200] sm:$0xff]
    %v233 = vld [vmem:[#allocation5 + $0x208] sm:$0xff]
    %v234 = vld [vmem:[#allocation5 + $0x210] sm:$0xff]
    %v235 = vld [vmem:[#allocation5 + $0x218] sm:$0xff]
    %v236 = vld [vmem:[#allocation5 + $0x220] sm:$0xff]
    %v237 = vld [vmem:[#allocation5 + $0x228] sm:$0xff]
    %v238 = vld [vmem:[#allocation5 + $0x230] sm:$0xff]
    %v239 = vld [vmem:[#allocation5 + $0x238] sm:$0xff]
    %v240 = vld [vmem:[#allocation5 + $0x240] sm:$0xff]
    %v241 = vld [vmem:[#allocation5 + $0x248] sm:$0xff]
    %v242 = vld [vmem:[#allocation5 + $0x250] sm:$0xff]
    %v243 = vld [vmem:[#allocation5 + $0x258] sm:$0xff]
    %v244 = vld [vmem:[#allocation5 + $0x260] sm:$0xff]
    %v245 = vld [vmem:[#allocation5 + $0x268] sm:$0xff]
    %v246 = vld [vmem:[#allocation5 + $0x270] sm:$0xff]
    %v247 = vld [vmem:[#allocation5 + $0x278] sm:$0xff]
    %v248 = vld [vmem:[#allocation5 + $0x280] sm:$0xff]
    %v249 = vld [vmem:[#allocation5 + $0x288] sm:$0xff]
    %v250 = vld [vmem:[#allocation5 + $0x290] sm:$0xff]
    %v251 = vld [vmem:[#allocation5 + $0x298] sm:$0xff]
    %v252 = vld [vmem:[#allocation5 + $0x2a0] sm:$0xff]
    %v253 = vld [vmem:[#allocation5 + $0x2a8] sm:$0xff]
    %v254 = vld [vmem:[#allocation5 + $0x2b0] sm:$0xff]
    %v255 = vld [vmem:[#allocation5 + $0x2b8] sm:$0xff]
    %v256 = vld [vmem:[#allocation5 + $0x2c0] sm:$0xff]
    %v257 = vld [vmem:[#allocation5 + $0x2c8] sm:$0xff]
    %v258 = vld [vmem:[#allocation5 + $0x2d0] sm:$0xff]
    %v259 = vld [vmem:[#allocation5 + $0x2d8] sm:$0xff]
    %v260 = vld [vmem:[#allocation5 + $0x2e0] sm:$0xff]
    %v261 = vld [vmem:[#allocation5 + $0x2e8] sm:$0xff]
    %v262 = vld [vmem:[#allocation5 + $0x2f0] sm:$0xff]
    %v263 = vld [vmem:[#allocation5 + $0x2f8] sm:$0xff]
    %v264 = vld [vmem:[#allocation5 + $0x300] sm:$0xff]
    %v265 = vld [vmem:[#allocation5 + $0x308] sm:$0xff]
    %v266 = vld [vmem:[#allocation5 + $0x310] sm:$0xff]
    %v267 = vld [vmem:[#allocation5 + $0x318] sm:$0xff]
    %v268 = vld [vmem:[#allocation5 + $0x320] sm:$0xff]
    %v269 = vld [vmem:[#allocation5 + $0x328] sm:$0xff]
    %v270 = vld [vmem:[#allocation5 + $0x330] sm:$0xff]
    %v271 = vld [vmem:[#allocation5 + $0x338] sm:$0xff]
    %v272 = vld [vmem:[#allocation5 + $0x340] sm:$0xff]
    %v273 = vld [vmem:[#allocation5 + $0x348] sm:$0xff]
    %v274 = vld [vmem:[#allocation5 + $0x350] sm:$0xff]
    %v275 = vld [vmem:[#allocation5 + $0x358] sm:$0xff]
    %v276 = vld [vmem:[#allocation5 + $0x360] sm:$0xff]
    %v277 = vld [vmem:[#allocation5 + $0x368] sm:$0xff]
    %v278 = vld [vmem:[#allocation5 + $0x370] sm:$0xff]
    %v279 = vld [vmem:[#allocation5 + $0x378] sm:$0xff]
    %v280 = vld [vmem:[%s4] sm:$0x7f]
    %281 = vadd.xlane.f32.xlu0 %v166
    %v282 = vpop.xlane.xlu0 %281
    %283 = vadd.xlane.f32.xlu0 %v167
    %v284 = vpop.xlane.xlu0 %283
    %v285 = vmul.f32 %v282, %v123
    %v286 = vmul.f32 %v284, %v123
    %v287 = vsub.f32 %v166, %v285
    %v288 = vsub.f32 %v167, %v286
    %v289 = vmul.f32 %v287, %v287
    %v290 = vmul.f32 %v288, %v288
    %291 = vadd.xlane.f32.xlu0 %v289
    %v292 = vpop.xlane.xlu0 %291
    %293 = vadd.xlane.f32.xlu0 %v290
    %v294 = vpop.xlane.xlu0 %293
    %v295 = vmul.f32 %v292, 0.007874016
    %v296 = vmul.f32 %v294, 0.007874016
    %v297 = vrsqrt.pop %v295
    %v298 = vmul.f32 %v295, %v297
    %vm299 = vcmp.eq.f32.partialorder %v295, inf
    %v300 = vsel %vm299, %v295, %v298
    %vm301 = vcmp.eq.f32.partialorder %v295, 0.0
    %v302 = vand.u32 %v295, 2147483648
    %v303 = vsel %vm301, %v302, %v300
    %v304 = vrsqrt.pop %v296
    %v305 = vmul.f32 %v296, %v304
    %vm306 = vcmp.eq.f32.partialorder %v296, inf
    %v307 = vsel %vm306, %v296, %v305
    %vm308 = vcmp.eq.f32.partialorder %v296, 0.0
    %v309 = vand.u32 %v296, 2147483648
    %v310 = vsel %vm308, %v309, %v307
    %v311 = vlaneseq
    %v312 = vshrl.u32 %v311, 7
    %v313 = vsub.s32 1, %v312
    %v314 = vrot.slane %v88, %v313
    %v315 = vmul.f32 %v314, %v287
    %v316 = vmul.f32 %v314, %v288
    %v317 = vadd.f32 %v303, 1e-06
    %v318 = vadd.f32 %v310, 1e-06
    %v319 = vrcp.pop %v317
    %v320 = vmul.f32 %v315, %v319
    %v321 = vrcp.pop %v318
    %v322 = vmul.f32 %v316, %v321
    %v323 = vlaneseq
    %v324 = vshrl.u32 %v323, 7
    %v325 = vsub.s32 1, %v324
    %v326 = vrot.slane %v89, %v325
    %v327 = vadd.f32 %v320, %v326
    %v328 = vadd.f32 %v322, %v326
    %v329 = vlaneseq
    %v330 = vshrl.u32 %v329, 7
    %v331 = vsub.s32 0, %v330
    %v332 = vrot.slane %v280, %v331
    %333 = vmatprep.subr.mxu0 0.0
    %334 = vmatpush1.msra.mxu0 %v168
    %335 = vmatprep.subr.mxu0 0.0
    %336 = vmatpush1.msra.mxu0 %v169
    %337 = vmatprep.subr.mxu0 0.0
    %338 = vmatpush1.msra.mxu0 %v170
    %339 = vmatprep.subr.mxu0 0.0
    %340 = vmatpush1.msra.mxu0 %v171
    %341 = vmatprep.subr.mxu0 0.0
    %342 = vmatpush1.msra.mxu0 %v172
    %343 = vmatprep.subr.mxu0 0.0
    %344 = vmatpush1.msra.mxu0 %v173
    %345 = vmatprep.subr.mxu0 0.0
    %346 = vmatpush1.msra.mxu0 %v174
    %347 = vmatprep.subr.mxu0 0.0
    %348 = vmatpush1.msra.mxu0 %v175
    %349 = vmatprep.subr.mxu0 0.0
    %350 = vmatpush1.msra.mxu0 %v176
    %351 = vmatprep.subr.mxu0 0.0
    %352 = vmatpush1.msra.mxu0 %v177
    %353 = vmatprep.subr.mxu0 0.0
    %354 = vmatpush1.msra.mxu0 %v178
    %355 = vmatprep.subr.mxu0 0.0
    %356 = vmatpush1.msra.mxu0 %v179
    %357 = vmatprep.subr.mxu0 0.0
    %358 = vmatpush1.msra.mxu0 %v180
    %359 = vmatprep.subr.mxu0 0.0
    %360 = vmatpush1.msra.mxu0 %v181
    %361 = vmatprep.subr.mxu0 0.0
    %362 = vmatpush1.msra.mxu0 %v182
    %363 = vmatprep.subr.mxu0 0.0
    %364 = vmatpush1.msra.mxu0 %v183
    %365 = vmatprep.subr.mxu0 0.0
    %366 = vmatpush1.msra.mxu0 0.0
    %367 = vmatprep.subr.mxu0 0.0
    %368 = vmatpush1.msra.mxu0 0.0
    %369 = vmatprep.subr.mxu0 0.0
    %370 = vmatpush1.msra.mxu0 0.0
    %371 = vmatprep.subr.mxu0 0.0
    %372 = vmatpush1.msra.mxu0 0.0
    %373 = vmatprep.subr.mxu0 0.0
    %374 = vmatpush1.msra.mxu0 0.0
    %375 = vmatprep.subr.mxu0 0.0
    %376 = vmatpush1.msra.mxu0 0.0
    %377 = vmatprep.subr.mxu0 0.0
    %378 = vmatpush1.msra.mxu0 0.0
    %379 = vmatprep.subr.mxu0 0.0
    %380 = vmatpush1.msra.mxu0 0.0
    %381 = vmatprep.subr.mxu0 0.0
    %382 = vmatpush1.msra.mxu0 0.0
    %383 = vmatprep.subr.mxu0 0.0
    %384 = vmatpush1.msra.mxu0 0.0
    %385 = vmatprep.subr.mxu0 0.0
    %386 = vmatpush1.msra.mxu0 0.0
    %387 = vmatprep.subr.mxu0 0.0
    %388 = vmatpush1.msra.mxu0 0.0
    %389 = vmatprep.subr.mxu0 0.0
    %390 = vmatpush1.msra.mxu0 0.0
    %391 = vmatprep.subr.mxu0 0.0
    %392 = vmatpush1.msra.mxu0 0.0
    %393 = vmatprep.subr.mxu0 0.0
    %394 = vmatpush1.msra.mxu0 0.0
    %395 = vmatprep.subr.mxu0 0.0
    %396 = vmatpush1.msra.mxu0 0.0
    %397 = vmatprep.mubr.f32.mxu0 0.0
    %398 = vmatmul.mubr.f32.gmra.mrb[0].mxu0 %v327
    %v399 = vpop.f32.mrb[0].mxu0
    %v400 = vadd.f32 %v332, %v399
    %v401 = vpop.f32.mrb[0].mxu0
    %402 = vmatprep.mubr.f32.mxu0 0.0
    %403 = vmatmul.mubr.f32.gmra.mrb[0].mxu0 %v328
    %v404 = vpop.f32.mrb[0].mxu0
    %v405 = vadd.f32 %v332, %v404
    %v406 = vpop.f32.mrb[0].mxu0
    %407 = vdwg.mxu0
    %v408 = vlaneseq
    %v409 = vshrl.u32 %v408, 7
    %v410 = vsub.s32 3, %v409
    %v411 = vrot.slane %v280, %v410
    %412 = vmatprep.subr.mxu0 0.0
    %413 = vmatpush1.msra.mxu0 %v216
    %414 = vmatprep.subr.mxu0 0.0
    %415 = vmatpush1.msra.mxu0 %v217
    %416 = vmatprep.subr.mxu0 0.0
    %417 = vmatpush1.msra.mxu0 %v218
    %418 = vmatprep.subr.mxu0 0.0
    %419 = vmatpush1.msra.mxu0 %v219
    %420 = vmatprep.subr.mxu0 0.0
    %421 = vmatpush1.msra.mxu0 %v220
    %422 = vmatprep.subr.mxu0 0.0
    %423 = vmatpush1.msra.mxu0 %v221
    %424 = vmatprep.subr.mxu0 0.0
    %425 = vmatpush1.msra.mxu0 %v222
    %426 = vmatprep.subr.mxu0 0.0
    %427 = vmatpush1.msra.mxu0 %v223
    %428 = vmatprep.subr.mxu0 0.0
    %429 = vmatpush1.msra.mxu0 %v224
    %430 = vmatprep.subr.mxu0 0.0
    %431 = vmatpush1.msra.mxu0 %v225
    %432 = vmatprep.subr.mxu0 0.0
    %433 = vmatpush1.msra.mxu0 %v226
    %434 = vmatprep.subr.mxu0 0.0
    %435 = vmatpush1.msra.mxu0 %v227
    %436 = vmatprep.subr.mxu0 0.0
    %437 = vmatpush1.msra.mxu0 %v228
    %438 = vmatprep.subr.mxu0 0.0
    %439 = vmatpush1.msra.mxu0 %v229
    %440 = vmatprep.subr.mxu0 0.0
    %441 = vmatpush1.msra.mxu0 %v230
    %442 = vmatprep.subr.mxu0 0.0
    %443 = vmatpush1.msra.mxu0 %v231
    %444 = vmatprep.subr.mxu0 0.0
    %445 = vmatpush1.msra.mxu0 0.0
    %446 = vmatprep.subr.mxu0 0.0
    %447 = vmatpush1.msra.mxu0 0.0
    %448 = vmatprep.subr.mxu0 0.0
    %449 = vmatpush1.msra.mxu0 0.0
    %450 = vmatprep.subr.mxu0 0.0
    %451 = vmatpush1.msra.mxu0 0.0
    %452 = vmatprep.subr.mxu0 0.0
    %453 = vmatpush1.msra.mxu0 0.0
    %454 = vmatprep.subr.mxu0 0.0
    %455 = vmatpush1.msra.mxu0 0.0
    %456 = vmatprep.subr.mxu0 0.0
    %457 = vmatpush1.msra.mxu0 0.0
    %458 = vmatprep.subr.mxu0 0.0
    %459 = vmatpush1.msra.mxu0 0.0
    %460 = vmatprep.subr.mxu0 0.0
    %461 = vmatpush1.msra.mxu0 0.0
    %462 = vmatprep.subr.mxu0 0.0
    %463 = vmatpush1.msra.mxu0 0.0
    %464 = vmatprep.subr.mxu0 0.0
    %465 = vmatpush1.msra.mxu0 0.0
    %466 = vmatprep.subr.mxu0 0.0
    %467 = vmatpush1.msra.mxu0 0.0
    %468 = vmatprep.subr.mxu0 0.0
    %469 = vmatpush1.msra.mxu0 0.0
    %470 = vmatprep.subr.mxu0 0.0
    %471 = vmatpush1.msra.mxu0 0.0
    %472 = vmatprep.subr.mxu0 0.0
    %473 = vmatpush1.msra.mxu0 0.0
    %474 = vmatprep.subr.mxu0 0.0
    %475 = vmatpush1.msra.mxu0 0.0
    %476 = vmatprep.mubr.f32.mxu0 0.0
    %477 = vmatmul.mubr.f32.gmra.mrb[0].mxu0 %v327
    %v478 = vpop.f32.mrb[0].mxu0
    %v479 = vadd.f32 %v411, %v478
    %v480 = vpop.f32.mrb[0].mxu0
    %481 = vmatprep.mubr.f32.mxu0 0.0
    %482 = vmatmul.mubr.f32.gmra.mrb[0].mxu0 %v328
    %v483 = vpop.f32.mrb[0].mxu0
    %v484 = vadd.f32 %v411, %v483
    %v485 = vpop.f32.mrb[0].mxu0
    %486 = vdwg.mxu0
    %v487 = vsel %vm117, 1, 0
    %v488 = vsel %vm118, 1, 0
    %vm489 = vcmp.eq.s32.totalorder %v487, 1
    %vm490 = vcmp.eq.s32.totalorder %v488, 1
    %v491 = vsel %vm489, %v400, %v479
    %v492 = vsel %vm490, %v405, %v484
    %v493 = vlaneseq
    %v494 = vshrl.u32 %v493, 7
    %v495 = vsub.s32 1, %v494
    %v496 = vrot.slane %v280, %v495
    %497 = vmatprep.subr.mxu0 0.0
    %498 = vmatpush1.msra.mxu0 %v184
    %499 = vmatprep.subr.mxu0 0.0
    %500 = vmatpush1.msra.mxu0 %v185
    %501 = vmatprep.subr.mxu0 0.0
    %502 = vmatpush1.msra.mxu0 %v186
    %503 = vmatprep.subr.mxu0 0.0
    %504 = vmatpush1.msra.mxu0 %v187
    %505 = vmatprep.subr.mxu0 0.0
    %506 = vmatpush1.msra.mxu0 %v188
    %507 = vmatprep.subr.mxu0 0.0
    %508 = vmatpush1.msra.mxu0 %v189
    %509 = vmatprep.subr.mxu0 0.0
    %510 = vmatpush1.msra.mxu0 %v190
    %511 = vmatprep.subr.mxu0 0.0
    %512 = vmatpush1.msra.mxu0 %v191
    %513 = vmatprep.subr.mxu0 0.0
    %514 = vmatpush1.msra.mxu0 %v192
    %515 = vmatprep.subr.mxu0 0.0
    %516 = vmatpush1.msra.mxu0 %v193
    %517 = vmatprep.subr.mxu0 0.0
    %518 = vmatpush1.msra.mxu0 %v194
    %519 = vmatprep.subr.mxu0 0.0
    %520 = vmatpush1.msra.mxu0 %v195
    %521 = vmatprep.subr.mxu0 0.0
    %522 = vmatpush1.msra.mxu0 %v196
    %523 = vmatprep.subr.mxu0 0.0
    %524 = vmatpush1.msra.mxu0 %v197
    %525 = vmatprep.subr.mxu0 0.0
    %526 = vmatpush1.msra.mxu0 %v198
    %527 = vmatprep.subr.mxu0 0.0
    %528 = vmatpush1.msra.mxu0 %v199
    %529 = vmatprep.subr.mxu0 0.0
    %530 = vmatpush1.msra.mxu0 0.0
    %531 = vmatprep.subr.mxu0 0.0
    %532 = vmatpush1.msra.mxu0 0.0
    %533 = vmatprep.subr.mxu0 0.0
    %534 = vmatpush1.msra.mxu0 0.0
    %535 = vmatprep.subr.mxu0 0.0
    %536 = vmatpush1.msra.mxu0 0.0
    %537 = vmatprep.subr.mxu0 0.0
    %538 = vmatpush1.msra.mxu0 0.0
    %539 = vmatprep.subr.mxu0 0.0
    %540 = vmatpush1.msra.mxu0 0.0
    %541 = vmatprep.subr.mxu0 0.0
    %542 = vmatpush1.msra.mxu0 0.0
    %543 = vmatprep.subr.mxu0 0.0
    %544 = vmatpush1.msra.mxu0 0.0
    %545 = vmatprep.subr.mxu0 0.0
    %546 = vmatpush1.msra.mxu0 0.0
    %547 = vmatprep.subr.mxu0 0.0
    %548 = vmatpush1.msra.mxu0 0.0
    %549 = vmatprep.subr.mxu0 0.0
    %550 = vmatpush1.msra.mxu0 0.0
    %551 = vmatprep.subr.mxu0 0.0
    %552 = vmatpush1.msra.mxu0 0.0
    %553 = vmatprep.subr.mxu0 0.0
    %554 = vmatpush1.msra.mxu0 0.0
    %555 = vmatprep.subr.mxu0 0.0
    %556 = vmatpush1.msra.mxu0 0.0
    %557 = vmatprep.subr.mxu0 0.0
    %558 = vmatpush1.msra.mxu0 0.0
    %559 = vmatprep.subr.mxu0 0.0
    %560 = vmatpush1.msra.mxu0 0.0
    %561 = vmatprep.mubr.f32.mxu0 0.0
    %562 = vmatmul.mubr.f32.gmra.mrb[0].mxu0 %v327
    %v563 = vpop.f32.mrb[0].mxu0
    %v564 = vadd.f32 %v496, %v563
    %v565 = vpop.f32.mrb[0].mxu0
    %566 = vmatprep.mubr.f32.mxu0 0.0
    %567 = vmatmul.mubr.f32.gmra.mrb[0].mxu0 %v328
    %v568 = vpop.f32.mrb[0].mxu0
    %v569 = vadd.f32 %v496, %v568
    %v570 = vpop.f32.mrb[0].mxu0
    %571 = vdwg.mxu0
    %v572 = vlaneseq
    %v573 = vshrl.u32 %v572, 7
    %v574 = vsub.s32 4, %v573
    %v575 = vrot.slane %v280, %v574
    %576 = vmatprep.subr.mxu0 0.0
    %577 = vmatpush1.msra.mxu0 %v232
    %578 = vmatprep.subr.mxu0 0.0
    %579 = vmatpush1.msra.mxu0 %v233
    %580 = vmatprep.subr.mxu0 0.0
    %581 = vmatpush1.msra.mxu0 %v234
    %582 = vmatprep.subr.mxu0 0.0
    %583 = vmatpush1.msra.mxu0 %v235
    %584 = vmatprep.subr.mxu0 0.0
    %585 = vmatpush1.msra.mxu0 %v236
    %586 = vmatprep.subr.mxu0 0.0
    %587 = vmatpush1.msra.mxu0 %v237
    %588 = vmatprep.subr.mxu0 0.0
    %589 = vmatpush1.msra.mxu0 %v238
    %590 = vmatprep.subr.mxu0 0.0
    %591 = vmatpush1.msra.mxu0 %v239
    %592 = vmatprep.subr.mxu0 0.0
    %593 = vmatpush1.msra.mxu0 %v240
    %594 = vmatprep.subr.mxu0 0.0
    %595 = vmatpush1.msra.mxu0 %v241
    %596 = vmatprep.subr.mxu0 0.0
    %597 = vmatpush1.msra.mxu0 %v242
    %598 = vmatprep.subr.mxu0 0.0
    %599 = vmatpush1.msra.mxu0 %v243
    %600 = vmatprep.subr.mxu0 0.0
    %601 = vmatpush1.msra.mxu0 %v244
    %602 = vmatprep.subr.mxu0 0.0
    %603 = vmatpush1.msra.mxu0 %v245
    %604 = vmatprep.subr.mxu0 0.0
    %605 = vmatpush1.msra.mxu0 %v246
    %606 = vmatprep.subr.mxu0 0.0
    %607 = vmatpush1.msra.mxu0 %v247
    %608 = vmatprep.subr.mxu0 0.0
    %609 = vmatpush1.msra.mxu0 0.0
    %610 = vmatprep.subr.mxu0 0.0
    %611 = vmatpush1.msra.mxu0 0.0
    %612 = vmatprep.subr.mxu0 0.0
    %613 = vmatpush1.msra.mxu0 0.0
    %614 = vmatprep.subr.mxu0 0.0
    %615 = vmatpush1.msra.mxu0 0.0
    %616 = vmatprep.subr.mxu0 0.0
    %617 = vmatpush1.msra.mxu0 0.0
    %618 = vmatprep.subr.mxu0 0.0
    %619 = vmatpush1.msra.mxu0 0.0
    %620 = vmatprep.subr.mxu0 0.0
    %621 = vmatpush1.msra.mxu0 0.0
    %622 = vmatprep.subr.mxu0 0.0
    %623 = vmatpush1.msra.mxu0 0.0
    %624 = vmatprep.subr.mxu0 0.0
    %625 = vmatpush1.msra.mxu0 0.0
    %626 = vmatprep.subr.mxu0 0.0
    %627 = vmatpush1.msra.mxu0 0.0
    %628 = vmatprep.subr.mxu0 0.0
    %629 = vmatpush1.msra.mxu0 0.0
    %630 = vmatprep.subr.mxu0 0.0
    %631 = vmatpush1.msra.mxu0 0.0
    %632 = vmatprep.subr.mxu0 0.0
    %633 = vmatpush1.msra.mxu0 0.0
    %634 = vmatprep.subr.mxu0 0.0
    %635 = vmatpush1.msra.mxu0 0.0
    %636 = vmatprep.subr.mxu0 0.0
    %637 = vmatpush1.msra.mxu0 0.0
    %638 = vmatprep.subr.mxu0 0.0
    %639 = vmatpush1.msra.mxu0 0.0
    %640 = vmatprep.mubr.f32.mxu0 0.0
    %641 = vmatmul.mubr.f32.gmra.mrb[0].mxu0 %v327
    %v642 = vpop.f32.mrb[0].mxu0
    %v643 = vadd.f32 %v575, %v642
    %v644 = vpop.f32.mrb[0].mxu0
    %645 = vmatprep.mubr.f32.mxu0 0.0
    %646 = vmatmul.mubr.f32.gmra.mrb[0].mxu0 %v328
    %v647 = vpop.f32.mrb[0].mxu0
    %v648 = vadd.f32 %v575, %v647
    %v649 = vpop.f32.mrb[0].mxu0
    %650 = vdwg.mxu0
    %v651 = vsel %vm489, %v564, %v643
    %v652 = vsel %vm490, %v569, %v648
    %v653 = vlaneseq
    %v654 = vshrl.u32 %v653, 7
    %v655 = vsub.s32 2, %v654
    %v656 = vrot.slane %v280, %v655
    %657 = vmatprep.subr.mxu0 0.0
    %658 = vmatpush1.msra.mxu0 %v200
    %659 = vmatprep.subr.mxu0 0.0
    %660 = vmatpush1.msra.mxu0 %v201
    %661 = vmatprep.subr.mxu0 0.0
    %662 = vmatpush1.msra.mxu0 %v202
    %663 = vmatprep.subr.mxu0 0.0
    %664 = vmatpush1.msra.mxu0 %v203
    %665 = vmatprep.subr.mxu0 0.0
    %666 = vmatpush1.msra.mxu0 %v204
    %667 = vmatprep.subr.mxu0 0.0
    %668 = vmatpush1.msra.mxu0 %v205
    %669 = vmatprep.subr.mxu0 0.0
    %670 = vmatpush1.msra.mxu0 %v206
    %671 = vmatprep.subr.mxu0 0.0
    %672 = vmatpush1.msra.mxu0 %v207
    %673 = vmatprep.subr.mxu0 0.0
    %674 = vmatpush1.msra.mxu0 %v208
    %675 = vmatprep.subr.mxu0 0.0
    %676 = vmatpush1.msra.mxu0 %v209
    %677 = vmatprep.subr.mxu0 0.0
    %678 = vmatpush1.msra.mxu0 %v210
    %679 = vmatprep.subr.mxu0 0.0
    %680 = vmatpush1.msra.mxu0 %v211
    %681 = vmatprep.subr.mxu0 0.0
    %682 = vmatpush1.msra.mxu0 %v212
    %683 = vmatprep.subr.mxu0 0.0
    %684 = vmatpush1.msra.mxu0 %v213
    %685 = vmatprep.subr.mxu0 0.0
    %686 = vmatpush1.msra.mxu0 %v214
    %687 = vmatprep.subr.mxu0 0.0
    %688 = vmatpush1.msra.mxu0 %v215
    %689 = vmatprep.subr.mxu0 0.0
    %690 = vmatpush1.msra.mxu0 0.0
    %691 = vmatprep.subr.mxu0 0.0
    %692 = vmatpush1.msra.mxu0 0.0
    %693 = vmatprep.subr.mxu0 0.0
    %694 = vmatpush1.msra.mxu0 0.0
    %695 = vmatprep.subr.mxu0 0.0
    %696 = vmatpush1.msra.mxu0 0.0
    %697 = vmatprep.subr.mxu0 0.0
    %698 = vmatpush1.msra.mxu0 0.0
    %699 = vmatprep.subr.mxu0 0.0
    %700 = vmatpush1.msra.mxu0 0.0
    %701 = vmatprep.subr.mxu0 0.0
    %702 = vmatpush1.msra.mxu0 0.0
    %703 = vmatprep.subr.mxu0 0.0
    %704 = vmatpush1.msra.mxu0 0.0
    %705 = vmatprep.subr.mxu0 0.0
    %706 = vmatpush1.msra.mxu0 0.0
    %707 = vmatprep.subr.mxu0 0.0
    %708 = vmatpush1.msra.mxu0 0.0
    %709 = vmatprep.subr.mxu0 0.0
    %710 = vmatpush1.msra.mxu0 0.0
    %711 = vmatprep.subr.mxu0 0.0
    %712 = vmatpush1.msra.mxu0 0.0
    %713 = vmatprep.subr.mxu0 0.0
    %714 = vmatpush1.msra.mxu0 0.0
    %715 = vmatprep.subr.mxu0 0.0
    %716 = vmatpush1.msra.mxu0 0.0
    %717 = vmatprep.subr.mxu0 0.0
    %718 = vmatpush1.msra.mxu0 0.0
    %719 = vmatprep.subr.mxu0 0.0
    %720 = vmatpush1.msra.mxu0 0.0
    %721 = vmatprep.mubr.f32.mxu0 0.0
    %722 = vmatmul.mubr.f32.gmra.mrb[0].mxu0 %v327
    %v723 = vpop.f32.mrb[0].mxu0
    %v724 = vadd.f32 %v656, %v723
    %v725 = vpop.f32.mrb[0].mxu0
    %726 = vmatprep.mubr.f32.mxu0 0.0
    %727 = vmatmul.mubr.f32.gmra.mrb[0].mxu0 %v328
    %v728 = vpop.f32.mrb[0].mxu0
    %v729 = vadd.f32 %v656, %v728
    %v730 = vpop.f32.mrb[0].mxu0
    %731 = vdwg.mxu0
    %v732 = vlaneseq
    %v733 = vshrl.u32 %v732, 7
    %v734 = vsub.s32 5, %v733
    %v735 = vrot.slane %v280, %v734
    %736 = vmatprep.subr.mxu0 0.0
    %737 = vmatpush1.msra.mxu0 %v248
    %738 = vmatprep.subr.mxu0 0.0
    %739 = vmatpush1.msra.mxu0 %v249
    %740 = vmatprep.subr.mxu0 0.0
    %741 = vmatpush1.msra.mxu0 %v250
    %742 = vmatprep.subr.mxu0 0.0
    %743 = vmatpush1.msra.mxu0 %v251
    %744 = vmatprep.subr.mxu0 0.0
    %745 = vmatpush1.msra.mxu0 %v252
    %746 = vmatprep.subr.mxu0 0.0
    %747 = vmatpush1.msra.mxu0 %v253
    %748 = vmatprep.subr.mxu0 0.0
    %749 = vmatpush1.msra.mxu0 %v254
    %750 = vmatprep.subr.mxu0 0.0
    %751 = vmatpush1.msra.mxu0 %v255
    %752 = vmatprep.subr.mxu0 0.0
    %753 = vmatpush1.msra.mxu0 %v256
    %754 = vmatprep.subr.mxu0 0.0
    %755 = vmatpush1.msra.mxu0 %v257
    %756 = vmatprep.subr.mxu0 0.0
    %757 = vmatpush1.msra.mxu0 %v258
    %758 = vmatprep.subr.mxu0 0.0
    %759 = vmatpush1.msra.mxu0 %v259
    %760 = vmatprep.subr.mxu0 0.0
    %761 = vmatpush1.msra.mxu0 %v260
    %762 = vmatprep.subr.mxu0 0.0
    %763 = vmatpush1.msra.mxu0 %v261
    %764 = vmatprep.subr.mxu0 0.0
    %765 = vmatpush1.msra.mxu0 %v262
    %766 = vmatprep.subr.mxu0 0.0
    %767 = vmatpush1.msra.mxu0 %v263
    %768 = vmatprep.subr.mxu0 0.0
    %769 = vmatpush1.msra.mxu0 0.0
    %770 = vmatprep.subr.mxu0 0.0
    %771 = vmatpush1.msra.mxu0 0.0
    %772 = vmatprep.subr.mxu0 0.0
    %773 = vmatpush1.msra.mxu0 0.0
    %774 = vmatprep.subr.mxu0 0.0
    %775 = vmatpush1.msra.mxu0 0.0
    %776 = vmatprep.subr.mxu0 0.0
    %777 = vmatpush1.msra.mxu0 0.0
    %778 = vmatprep.subr.mxu0 0.0
    %779 = vmatpush1.msra.mxu0 0.0
    %780 = vmatprep.subr.mxu0 0.0
    %781 = vmatpush1.msra.mxu0 0.0
    %782 = vmatprep.subr.mxu0 0.0
    %783 = vmatpush1.msra.mxu0 0.0
    %784 = vmatprep.subr.mxu0 0.0
    %785 = vmatpush1.msra.mxu0 0.0
    %786 = vmatprep.subr.mxu0 0.0
    %787 = vmatpush1.msra.mxu0 0.0
    %788 = vmatprep.subr.mxu0 0.0
    %789 = vmatpush1.msra.mxu0 0.0
    %790 = vmatprep.subr.mxu0 0.0
    %791 = vmatpush1.msra.mxu0 0.0
    %792 = vmatprep.subr.mxu0 0.0
    %793 = vmatpush1.msra.mxu0 0.0
    %794 = vmatprep.subr.mxu0 0.0
    %795 = vmatpush1.msra.mxu0 0.0
    %796 = vmatprep.subr.mxu0 0.0
    %797 = vmatpush1.msra.mxu0 0.0
    %798 = vmatprep.subr.mxu0 0.0
    %799 = vmatpush1.msra.mxu0 0.0
    %800 = vmatprep.mubr.f32.mxu0 0.0
    %801 = vmatmul.mubr.f32.gmra.mrb[0].mxu0 %v327
    %v802 = vpop.f32.mrb[0].mxu0
    %v803 = vadd.f32 %v735, %v802
    %v804 = vpop.f32.mrb[0].mxu0
    %805 = vmatprep.mubr.f32.mxu0 0.0
    %806 = vmatmul.mubr.f32.gmra.mrb[0].mxu0 %v328
    %v807 = vpop.f32.mrb[0].mxu0
    %v808 = vadd.f32 %v735, %v807
    %v809 = vpop.f32.mrb[0].mxu0
    %810 = vdwg.mxu0
    %v811 = vsel %vm489, %v724, %v803
    %v812 = vsel %vm490, %v729, %v808
    %vm813 = vcmask 261120
    %v815 = vsel %vm813, %v491, 0
    %v818 = vsel %vm813, %v651, 0
    %820 = vmatprep.subr.mxu0 0.0
    %821 = vmatpush1.xpose.msra.mxu0 %v818
    %822 = vmatprep.subr.mxu0 0.0
    %823 = vmatpush1.xpose.msra.mxu0 0.0
    %824 = vmatprep.subr.mxu0 0.0
    %825 = vmatpush1.xpose.msra.mxu0 0.0
    %826 = vmatprep.subr.mxu0 0.0
    %827 = vmatpush1.xpose.msra.mxu0 0.0
    %828 = vmatprep.subr.mxu0 0.0
    %829 = vmatpush1.xpose.msra.mxu0 0.0
    %830 = vmatprep.subr.mxu0 0.0
    %831 = vmatpush1.xpose.msra.mxu0 0.0
    %832 = vmatprep.subr.mxu0 0.0
    %833 = vmatpush1.xpose.msra.mxu0 0.0
    %834 = vmatprep.subr.mxu0 0.0
    %835 = vmatpush1.xpose.msra.mxu0 0.0
    %836 = vmatprep.subr.mxu0 0.0
    %837 = vmatpush1.xpose.msra.mxu0 0.0
    %838 = vmatprep.subr.mxu0 0.0
    %839 = vmatpush1.xpose.msra.mxu0 0.0
    %840 = vmatprep.subr.mxu0 0.0
    %841 = vmatpush1.xpose.msra.mxu0 0.0
    %842 = vmatprep.subr.mxu0 0.0
    %843 = vmatpush1.xpose.msra.mxu0 0.0
    %844 = vmatprep.subr.mxu0 0.0
    %845 = vmatpush1.xpose.msra.mxu0 0.0
    %846 = vmatprep.subr.mxu0 0.0
    %847 = vmatpush1.xpose.msra.mxu0 0.0
    %848 = vmatprep.subr.mxu0 0.0
    %849 = vmatpush1.xpose.msra.mxu0 0.0
    %850 = vmatprep.subr.mxu0 0.0
    %851 = vmatpush1.xpose.msra.mxu0 0.0
    %852 = vmatprep.subr.mxu0 0.0
    %853 = vmatpush1.xpose.msra.mxu0 0.0
    %854 = vmatprep.subr.mxu0 0.0
    %855 = vmatpush1.xpose.msra.mxu0 0.0
    %856 = vmatprep.subr.mxu0 0.0
    %857 = vmatpush1.xpose.msra.mxu0 0.0
    %858 = vmatprep.subr.mxu0 0.0
    %859 = vmatpush1.xpose.msra.mxu0 0.0
    %860 = vmatprep.subr.mxu0 0.0
    %861 = vmatpush1.xpose.msra.mxu0 0.0
    %862 = vmatprep.subr.mxu0 0.0
    %863 = vmatpush1.xpose.msra.mxu0 0.0
    %864 = vmatprep.subr.mxu0 0.0
    %865 = vmatpush1.xpose.msra.mxu0 0.0
    %866 = vmatprep.subr.mxu0 0.0
    %867 = vmatpush1.xpose.msra.mxu0 0.0
    %868 = vmatprep.subr.mxu0 0.0
    %869 = vmatpush1.xpose.msra.mxu0 0.0
    %870 = vmatprep.subr.mxu0 0.0
    %871 = vmatpush1.xpose.msra.mxu0 0.0
    %872 = vmatprep.subr.mxu0 0.0
    %873 = vmatpush1.xpose.msra.mxu0 0.0
    %874 = vmatprep.subr.mxu0 0.0
    %875 = vmatpush1.xpose.msra.mxu0 0.0
    %876 = vmatprep.subr.mxu0 0.0
    %877 = vmatpush1.xpose.msra.mxu0 0.0
    %878 = vmatprep.subr.mxu0 0.0
    %879 = vmatpush1.xpose.msra.mxu0 0.0
    %880 = vmatprep.subr.mxu0 0.0
    %881 = vmatpush1.xpose.msra.mxu0 0.0
    %882 = vmatprep.subr.mxu0 0.0
    %883 = vmatpush1.xpose.msra.mxu0 0.0
    %884 = vmatprep.mubr.f32.mxu0 0.0
    %885 = vmatmul.mubr.f32.gmra.mrb[0].mxu0 %v815
    %v886 = vpop.f32.mrb[0].mxu0
    %v887 = vadd.f32 0.0, %v886
    %v888 = vpop.f32.mrb[0].mxu0
    %889 = vdwg.mxu0
    %v891 = vsel %vm813, %v492, 0
    %v894 = vsel %vm813, %v652, 0
    %896 = vmatprep.subr.mxu0 0.0
    %897 = vmatpush1.xpose.msra.mxu0 %v894
    %898 = vmatprep.subr.mxu0 0.0
    %899 = vmatpush1.xpose.msra.mxu0 0.0
    %900 = vmatprep.subr.mxu0 0.0
    %901 = vmatpush1.xpose.msra.mxu0 0.0
    %902 = vmatprep.subr.mxu0 0.0
    %903 = vmatpush1.xpose.msra.mxu0 0.0
    %904 = vmatprep.subr.mxu0 0.0
    %905 = vmatpush1.xpose.msra.mxu0 0.0
    %906 = vmatprep.subr.mxu0 0.0
    %907 = vmatpush1.xpose.msra.mxu0 0.0
    %908 = vmatprep.subr.mxu0 0.0
    %909 = vmatpush1.xpose.msra.mxu0 0.0
    %910 = vmatprep.subr.mxu0 0.0
    %911 = vmatpush1.xpose.msra.mxu0 0.0
    %912 = vmatprep.subr.mxu0 0.0
    %913 = vmatpush1.xpose.msra.mxu0 0.0
    %914 = vmatprep.subr.mxu0 0.0
    %915 = vmatpush1.xpose.msra.mxu0 0.0
    %916 = vmatprep.subr.mxu0 0.0
    %917 = vmatpush1.xpose.msra.mxu0 0.0
    %918 = vmatprep.subr.mxu0 0.0
    %919 = vmatpush1.xpose.msra.mxu0 0.0
    %920 = vmatprep.subr.mxu0 0.0
    %921 = vmatpush1.xpose.msra.mxu0 0.0
    %922 = vmatprep.subr.mxu0 0.0
    %923 = vmatpush1.xpose.msra.mxu0 0.0
    %924 = vmatprep.subr.mxu0 0.0
    %925 = vmatpush1.xpose.msra.mxu0 0.0
    %926 = vmatprep.subr.mxu0 0.0
    %927 = vmatpush1.xpose.msra.mxu0 0.0
    %928 = vmatprep.subr.mxu0 0.0
    %929 = vmatpush1.xpose.msra.mxu0 0.0
    %930 = vmatprep.subr.mxu0 0.0
    %931 = vmatpush1.xpose.msra.mxu0 0.0
    %932 = vmatprep.subr.mxu0 0.0
    %933 = vmatpush1.xpose.msra.mxu0 0.0
    %934 = vmatprep.subr.mxu0 0.0
    %935 = vmatpush1.xpose.msra.mxu0 0.0
    %936 = vmatprep.subr.mxu0 0.0
    %937 = vmatpush1.xpose.msra.mxu0 0.0
    %938 = vmatprep.subr.mxu0 0.0
    %939 = vmatpush1.xpose.msra.mxu0 0.0
    %940 = vmatprep.subr.mxu0 0.0
    %941 = vmatpush1.xpose.msra.mxu0 0.0
    %942 = vmatprep.subr.mxu0 0.0
    %943 = vmatpush1.xpose.msra.mxu0 0.0
    %944 = vmatprep.subr.mxu0 0.0
    %945 = vmatpush1.xpose.msra.mxu0 0.0
    %946 = vmatprep.subr.mxu0 0.0
    %947 = vmatpush1.xpose.msra.mxu0 0.0
    %948 = vmatprep.subr.mxu0 0.0
    %949 = vmatpush1.xpose.msra.mxu0 0.0
    %950 = vmatprep.subr.mxu0 0.0
    %951 = vmatpush1.xpose.msra.mxu0 0.0
    %952 = vmatprep.subr.mxu0 0.0
    %953 = vmatpush1.xpose.msra.mxu0 0.0
    %954 = vmatprep.subr.mxu0 0.0
    %955 = vmatpush1.xpose.msra.mxu0 0.0
    %956 = vmatprep.subr.mxu0 0.0
    %957 = vmatpush1.xpose.msra.mxu0 0.0
    %958 = vmatprep.subr.mxu0 0.0
    %959 = vmatpush1.xpose.msra.mxu0 0.0
    %960 = vmatprep.mubr.f32.mxu0 0.0
    %961 = vmatmul.mubr.f32.gmra.mrb[0].mxu0 %v891
    %v962 = vpop.f32.mrb[0].mxu0
    %v963 = vadd.f32 0.0, %v962
    %v964 = vpop.f32.mrb[0].mxu0
    %965 = vdwg.mxu0
    %v966 = vmul.f32 %v887, 0.17677669
    %v967 = vmul.f32 %v963, 0.17677669
    %vm968 = vcmask 64512
    %v969 = vsel %vm968, %v966, -inf
    %970 = vmax.xlane.f32.xlu0 %v969
    %v971 = vpop.xlane.xlu0 %970
    %v972 = vsel %vm968, %v967, -inf
    %973 = vmax.xlane.f32.xlu0 %v972
    %v974 = vpop.xlane.xlu0 %973
    %v975 = vsub.f32 %v966, %v971
    %v976 = vsub.f32 %v967, %v974
    %v977 = vmul.f32 %v975, 1.442695
    %v978 = vpow.pop %v977
    %v979 = vmul.f32 %v976, 1.442695
    %v980 = vpow.pop %v979
    %v981 = vsel %vm968, %v978, 0.0
    %982 = vadd.xlane.f32.xlu0 %v981
    %v983 = vpop.xlane.xlu0 %982
    %v984 = vsel %vm968, %v980, 0.0
    %985 = vadd.xlane.f32.xlu0 %v984
    %v986 = vpop.xlane.xlu0 %985
    %v987 = vrcp.pop %v983
    %v988 = vmul.f32 %v978, %v987
    %v989 = vrcp.pop %v986
    %v990 = vmul.f32 %v980, %v989
    %v992 = vsel %vm968, %v988, 0
    %994 = vmatprep.subr.mxu0 0.0
    %995 = vmatpush1.msra.mxu0 %v811
    %996 = vmatprep.subr.mxu0 0.0
    %997 = vmatpush1.msra.mxu0 0.0
    %998 = vmatprep.subr.mxu0 0.0
    %999 = vmatpush1.msra.mxu0 0.0
    %1000 = vmatprep.subr.mxu0 0.0
    %1001 = vmatpush1.msra.mxu0 0.0
    %1002 = vmatprep.subr.mxu0 0.0
    %1003 = vmatpush1.msra.mxu0 0.0
    %1004 = vmatprep.subr.mxu0 0.0
    %1005 = vmatpush1.msra.mxu0 0.0
    %1006 = vmatprep.subr.mxu0 0.0
    %1007 = vmatpush1.msra.mxu0 0.0
    %1008 = vmatprep.subr.mxu0 0.0
    %1009 = vmatpush1.msra.mxu0 0.0
    %1010 = vmatprep.subr.mxu0 0.0
    %1011 = vmatpush1.msra.mxu0 0.0
    %1012 = vmatprep.subr.mxu0 0.0
    %1013 = vmatpush1.msra.mxu0 0.0
    %1014 = vmatprep.subr.mxu0 0.0
    %1015 = vmatpush1.msra.mxu0 0.0
    %1016 = vmatprep.subr.mxu0 0.0
    %1017 = vmatpush1.msra.mxu0 0.0
    %1018 = vmatprep.subr.mxu0 0.0
    %1019 = vmatpush1.msra.mxu0 0.0
    %1020 = vmatprep.subr.mxu0 0.0
    %1021 = vmatpush1.msra.mxu0 0.0
    %1022 = vmatprep.subr.mxu0 0.0
    %1023 = vmatpush1.msra.mxu0 0.0
    %1024 = vmatprep.subr.mxu0 0.0
    %1025 = vmatpush1.msra.mxu0 0.0
    %1026 = vmatprep.subr.mxu0 0.0
    %1027 = vmatpush1.msra.mxu0 0.0
    %1028 = vmatprep.subr.mxu0 0.0
    %1029 = vmatpush1.msra.mxu0 0.0
    %1030 = vmatprep.subr.mxu0 0.0
    %1031 = vmatpush1.msra.mxu0 0.0
    %1032 = vmatprep.subr.mxu0 0.0
    %1033 = vmatpush1.msra.mxu0 0.0
    %1034 = vmatprep.subr.mxu0 0.0
    %1035 = vmatpush1.msra.mxu0 0.0
    %1036 = vmatprep.subr.mxu0 0.0
    %1037 = vmatpush1.msra.mxu0 0.0
    %1038 = vmatprep.subr.mxu0 0.0
    %1039 = vmatpush1.msra.mxu0 0.0
    %1040 = vmatprep.subr.mxu0 0.0
    %1041 = vmatpush1.msra.mxu0 0.0
    %1042 = vmatprep.subr.mxu0 0.0
    %1043 = vmatpush1.msra.mxu0 0.0
    %1044 = vmatprep.subr.mxu0 0.0
    %1045 = vmatpush1.msra.mxu0 0.0
    %1046 = vmatprep.subr.mxu0 0.0
    %1047 = vmatpush1.msra.mxu0 0.0
    %1048 = vmatprep.subr.mxu0 0.0
    %1049 = vmatpush1.msra.mxu0 0.0
    %1050 = vmatprep.subr.mxu0 0.0
    %1051 = vmatpush1.msra.mxu0 0.0
    %1052 = vmatprep.subr.mxu0 0.0
    %1053 = vmatpush1.msra.mxu0 0.0
    %1054 = vmatprep.subr.mxu0 0.0
    %1055 = vmatpush1.msra.mxu0 0.0
    %1056 = vmatprep.subr.mxu0 0.0
    %1057 = vmatpush1.msra.mxu0 0.0
    %1058 = vmatprep.mubr.f32.mxu0 0.0
    %1059 = vmatmul.mubr.f32.gmra.mrb[0].mxu0 %v992
    %v1060 = vpop.f32.mrb[0].mxu0
    %v1061 = vadd.f32 0.0, %v1060
    %v1062 = vpop.f32.mrb[0].mxu0
    %1063 = vdwg.mxu0
    %v1065 = vsel %vm968, %v990, 0
    %1067 = vmatprep.subr.mxu0 0.0
    %1068 = vmatpush1.msra.mxu0 %v812
    %1069 = vmatprep.subr.mxu0 0.0
    %1070 = vmatpush1.msra.mxu0 0.0
    %1071 = vmatprep.subr.mxu0 0.0
    %1072 = vmatpush1.msra.mxu0 0.0
    %1073 = vmatprep.subr.mxu0 0.0
    %1074 = vmatpush1.msra.mxu0 0.0
    %1075 = vmatprep.subr.mxu0 0.0
    %1076 = vmatpush1.msra.mxu0 0.0
    %1077 = vmatprep.subr.mxu0 0.0
    %1078 = vmatpush1.msra.mxu0 0.0
    %1079 = vmatprep.subr.mxu0 0.0
    %1080 = vmatpush1.msra.mxu0 0.0
    %1081 = vmatprep.subr.mxu0 0.0
    %1082 = vmatpush1.msra.mxu0 0.0
    %1083 = vmatprep.subr.mxu0 0.0
    %1084 = vmatpush1.msra.mxu0 0.0
    %1085 = vmatprep.subr.mxu0 0.0
    %1086 = vmatpush1.msra.mxu0 0.0
    %1087 = vmatprep.subr.mxu0 0.0
    %1088 = vmatpush1.msra.mxu0 0.0
    %1089 = vmatprep.subr.mxu0 0.0
    %1090 = vmatpush1.msra.mxu0 0.0
    %1091 = vmatprep.subr.mxu0 0.0
    %1092 = vmatpush1.msra.mxu0 0.0
    %1093 = vmatprep.subr.mxu0 0.0
    %1094 = vmatpush1.msra.mxu0 0.0
    %1095 = vmatprep.subr.mxu0 0.0
    %1096 = vmatpush1.msra.mxu0 0.0
    %1097 = vmatprep.subr.mxu0 0.0
    %1098 = vmatpush1.msra.mxu0 0.0
    %1099 = vmatprep.subr.mxu0 0.0
    %1100 = vmatpush1.msra.mxu0 0.0
    %1101 = vmatprep.subr.mxu0 0.0
    %1102 = vmatpush1.msra.mxu0 0.0
    %1103 = vmatprep.subr.mxu0 0.0
    %1104 = vmatpush1.msra.mxu0 0.0
    %1105 = vmatprep.subr.mxu0 0.0
    %1106 = vmatpush1.msra.mxu0 0.0
    %1107 = vmatprep.subr.mxu0 0.0
    %1108 = vmatpush1.msra.mxu0 0.0
    %1109 = vmatprep.subr.mxu0 0.0
    %1110 = vmatpush1.msra.mxu0 0.0
    %1111 = vmatprep.subr.mxu0 0.0
    %1112 = vmatpush1.msra.mxu0 0.0
    %1113 = vmatprep.subr.mxu0 0.0
    %1114 = vmatpush1.msra.mxu0 0.0
    %1115 = vmatprep.subr.mxu0 0.0
    %1116 = vmatpush1.msra.mxu0 0.0
    %1117 = vmatprep.subr.mxu0 0.0
    %1118 = vmatpush1.msra.mxu0 0.0
    %1119 = vmatprep.subr.mxu0 0.0
    %1120 = vmatpush1.msra.mxu0 0.0
    %1121 = vmatprep.subr.mxu0 0.0
    %1122 = vmatpush1.msra.mxu0 0.0
    %1123 = vmatprep.subr.mxu0 0.0
    %1124 = vmatpush1.msra.mxu0 0.0
    %1125 = vmatprep.subr.mxu0 0.0
    %1126 = vmatpush1.msra.mxu0 0.0
    %1127 = vmatprep.subr.mxu0 0.0
    %1128 = vmatpush1.msra.mxu0 0.0
    %1129 = vmatprep.subr.mxu0 0.0
    %1130 = vmatpush1.msra.mxu0 0.0
    %1131 = vmatprep.mubr.f32.mxu0 0.0
    %1132 = vmatmul.mubr.f32.gmra.mrb[0].mxu0 %v1065
    %v1133 = vpop.f32.mrb[0].mxu0
    %v1134 = vadd.f32 0.0, %v1133
    %v1135 = vpop.f32.mrb[0].mxu0
    %1136 = vdwg.mxu0
    %1137 = vrot.lane.b32.xlu0 %v491, 96
    %v1138 = vpop.permute.xlu0 %1137
    %1139 = vrot.lane.b32.xlu0 %v651, 96
    %v1140 = vpop.permute.xlu0 %1139
    %v1141 = vsel %vm813, %v1138, 0
    %v1143 = vsel %vm813, %v1140, 0
    %1145 = vmatprep.subr.mxu0 0.0
    %1146 = vmatpush1.xpose.msra.mxu0 %v1143
    %1147 = vmatprep.subr.mxu0 0.0
    %1148 = vmatpush1.xpose.msra.mxu0 0.0
    %1149 = vmatprep.subr.mxu0 0.0
    %1150 = vmatpush1.xpose.msra.mxu0 0.0
    %1151 = vmatprep.subr.mxu0 0.0
    %1152 = vmatpush1.xpose.msra.mxu0 0.0
    %1153 = vmatprep.subr.mxu0 0.0
    %1154 = vmatpush1.xpose.msra.mxu0 0.0
    %1155 = vmatprep.subr.mxu0 0.0
    %1156 = vmatpush1.xpose.msra.mxu0 0.0
    %1157 = vmatprep.subr.mxu0 0.0
    %1158 = vmatpush1.xpose.msra.mxu0 0.0
    %1159 = vmatprep.subr.mxu0 0.0
    %1160 = vmatpush1.xpose.msra.mxu0 0.0
    %1161 = vmatprep.subr.mxu0 0.0
    %1162 = vmatpush1.xpose.msra.mxu0 0.0
    %1163 = vmatprep.subr.mxu0 0.0
    %1164 = vmatpush1.xpose.msra.mxu0 0.0
    %1165 = vmatprep.subr.mxu0 0.0
    %1166 = vmatpush1.xpose.msra.mxu0 0.0
    %1167 = vmatprep.subr.mxu0 0.0
    %1168 = vmatpush1.xpose.msra.mxu0 0.0
    %1169 = vmatprep.subr.mxu0 0.0
    %1170 = vmatpush1.xpose.msra.mxu0 0.0
    %1171 = vmatprep.subr.mxu0 0.0
    %1172 = vmatpush1.xpose.msra.mxu0 0.0
    %1173 = vmatprep.subr.mxu0 0.0
    %1174 = vmatpush1.xpose.msra.mxu0 0.0
    %1175 = vmatprep.subr.mxu0 0.0
    %1176 = vmatpush1.xpose.msra.mxu0 0.0
    %1177 = vmatprep.subr.mxu0 0.0
    %1178 = vmatpush1.xpose.msra.mxu0 0.0
    %1179 = vmatprep.subr.mxu0 0.0
    %1180 = vmatpush1.xpose.msra.mxu0 0.0
    %1181 = vmatprep.subr.mxu0 0.0
    %1182 = vmatpush1.xpose.msra.mxu0 0.0
    %1183 = vmatprep.subr.mxu0 0.0
    %1184 = vmatpush1.xpose.msra.mxu0 0.0
    %1185 = vmatprep.subr.mxu0 0.0
    %1186 = vmatpush1.xpose.msra.mxu0 0.0
    %1187 = vmatprep.subr.mxu0 0.0
    %1188 = vmatpush1.xpose.msra.mxu0 0.0
    %1189 = vmatprep.subr.mxu0 0.0
    %1190 = vmatpush1.xpose.msra.mxu0 0.0
    %1191 = vmatprep.subr.mxu0 0.0
    %1192 = vmatpush1.xpose.msra.mxu0 0.0
    %1193 = vmatprep.subr.mxu0 0.0
    %1194 = vmatpush1.xpose.msra.mxu0 0.0
    %1195 = vmatprep.subr.mxu0 0.0
    %1196 = vmatpush1.xpose.msra.mxu0 0.0
    %1197 = vmatprep.subr.mxu0 0.0
    %1198 = vmatpush1.xpose.msra.mxu0 0.0
    %1199 = vmatprep.subr.mxu0 0.0
    %1200 = vmatpush1.xpose.msra.mxu0 0.0
    %1201 = vmatprep.subr.mxu0 0.0
    %1202 = vmatpush1.xpose.msra.mxu0 0.0
    %1203 = vmatprep.subr.mxu0 0.0
    %1204 = vmatpush1.xpose.msra.mxu0 0.0
    %1205 = vmatprep.subr.mxu0 0.0
    %1206 = vmatpush1.xpose.msra.mxu0 0.0
    %1207 = vmatprep.subr.mxu0 0.0
    %1208 = vmatpush1.xpose.msra.mxu0 0.0
    %1209 = vmatprep.mubr.f32.mxu0 0.0
    %1210 = vmatmul.mubr.f32.gmra.mrb[0].mxu0 %v1141
    %v1211 = vpop.f32.mrb[0].mxu0
    %v1212 = vadd.f32 0.0, %v1211
    %v1213 = vpop.f32.mrb[0].mxu0
    %1214 = vdwg.mxu0
    %1215 = vrot.lane.b32.xlu0 %v492, 96
    %v1216 = vpop.permute.xlu0 %1215
    %1217 = vrot.lane.b32.xlu0 %v652, 96
    %v1218 = vpop.permute.xlu0 %1217
    %v1219 = vsel %vm813, %v1216, 0
    %v1221 = vsel %vm813, %v1218, 0
    %1223 = vmatprep.subr.mxu0 0.0
    %1224 = vmatpush1.xpose.msra.mxu0 %v1221
    %1225 = vmatprep.subr.mxu0 0.0
    %1226 = vmatpush1.xpose.msra.mxu0 0.0
    %1227 = vmatprep.subr.mxu0 0.0
    %1228 = vmatpush1.xpose.msra.mxu0 0.0
    %1229 = vmatprep.subr.mxu0 0.0
    %1230 = vmatpush1.xpose.msra.mxu0 0.0
    %1231 = vmatprep.subr.mxu0 0.0
    %1232 = vmatpush1.xpose.msra.mxu0 0.0
    %1233 = vmatprep.subr.mxu0 0.0
    %1234 = vmatpush1.xpose.msra.mxu0 0.0
    %1235 = vmatprep.subr.mxu0 0.0
    %1236 = vmatpush1.xpose.msra.mxu0 0.0
    %1237 = vmatprep.subr.mxu0 0.0
    %1238 = vmatpush1.xpose.msra.mxu0 0.0
    %1239 = vmatprep.subr.mxu0 0.0
    %1240 = vmatpush1.xpose.msra.mxu0 0.0
    %1241 = vmatprep.subr.mxu0 0.0
    %1242 = vmatpush1.xpose.msra.mxu0 0.0
    %1243 = vmatprep.subr.mxu0 0.0
    %1244 = vmatpush1.xpose.msra.mxu0 0.0
    %1245 = vmatprep.subr.mxu0 0.0
    %1246 = vmatpush1.xpose.msra.mxu0 0.0
    %1247 = vmatprep.subr.mxu0 0.0
    %1248 = vmatpush1.xpose.msra.mxu0 0.0
    %1249 = vmatprep.subr.mxu0 0.0
    %1250 = vmatpush1.xpose.msra.mxu0 0.0
    %1251 = vmatprep.subr.mxu0 0.0
    %1252 = vmatpush1.xpose.msra.mxu0 0.0
    %1253 = vmatprep.subr.mxu0 0.0
    %1254 = vmatpush1.xpose.msra.mxu0 0.0
    %1255 = vmatprep.subr.mxu0 0.0
    %1256 = vmatpush1.xpose.msra.mxu0 0.0
    %1257 = vmatprep.subr.mxu0 0.0
    %1258 = vmatpush1.xpose.msra.mxu0 0.0
    %1259 = vmatprep.subr.mxu0 0.0
    %1260 = vmatpush1.xpose.msra.mxu0 0.0
    %1261 = vmatprep.subr.mxu0 0.0
    %1262 = vmatpush1.xpose.msra.mxu0 0.0
    %1263 = vmatprep.subr.mxu0 0.0
    %1264 = vmatpush1.xpose.msra.mxu0 0.0
    %1265 = vmatprep.subr.mxu0 0.0
    %1266 = vmatpush1.xpose.msra.mxu0 0.0
    %1267 = vmatprep.subr.mxu0 0.0
    %1268 = vmatpush1.xpose.msra.mxu0 0.0
    %1269 = vmatprep.subr.mxu0 0.0
    %1270 = vmatpush1.xpose.msra.mxu0 0.0
    %1271 = vmatprep.subr.mxu0 0.0
    %1272 = vmatpush1.xpose.msra.mxu0 0.0
    %1273 = vmatprep.subr.mxu0 0.0
    %1274 = vmatpush1.xpose.msra.mxu0 0.0
    %1275 = vmatprep.subr.mxu0 0.0
    %1276 = vmatpush1.xpose.msra.mxu0 0.0
    %1277 = vmatprep.subr.mxu0 0.0
    %1278 = vmatpush1.xpose.msra.mxu0 0.0
    %1279 = vmatprep.subr.mxu0 0.0
    %1280 = vmatpush1.xpose.msra.mxu0 0.0
    %1281 = vmatprep.subr.mxu0 0.0
    %1282 = vmatpush1.xpose.msra.mxu0 0.0
    %1283 = vmatprep.subr.mxu0 0.0
    %1284 = vmatpush1.xpose.msra.mxu0 0.0
    %1285 = vmatprep.subr.mxu0 0.0
    %1286 = vmatpush1.xpose.msra.mxu0 0.0
    %1287 = vmatprep.mubr.f32.mxu0 0.0
    %1288 = vmatmul.mubr.f32.gmra.mrb[0].mxu0 %v1219
    %v1289 = vpop.f32.mrb[0].mxu0
    %v1290 = vadd.f32 0.0, %v1289
    %v1291 = vpop.f32.mrb[0].mxu0
    %1292 = vdwg.mxu0
    %v1293 = vmul.f32 %v1212, 0.17677669
    %v1294 = vmul.f32 %v1290, 0.17677669
    %v1295 = vsel %vm968, %v1293, -inf
    %1296 = vmax.xlane.f32.xlu0 %v1295
    %v1297 = vpop.xlane.xlu0 %1296
    %v1298 = vsel %vm968, %v1294, -inf
    %1299 = vmax.xlane.f32.xlu0 %v1298
    %v1300 = vpop.xlane.xlu0 %1299
    %v1301 = vsub.f32 %v1293, %v1297
    %v1302 = vsub.f32 %v1294, %v1300
    %v1303 = vmul.f32 %v1301, 1.442695
    %v1304 = vpow.pop %v1303
    %v1305 = vmul.f32 %v1302, 1.442695
    %v1306 = vpow.pop %v1305
    %v1307 = vsel %vm968, %v1304, 0.0
    %1308 = vadd.xlane.f32.xlu0 %v1307
    %v1309 = vpop.xlane.xlu0 %1308
    %v1310 = vsel %vm968, %v1306, 0.0
    %1311 = vadd.xlane.f32.xlu0 %v1310
    %v1312 = vpop.xlane.xlu0 %1311
    %v1313 = vrcp.pop %v1309
    %v1314 = vmul.f32 %v1304, %v1313
    %v1315 = vrcp.pop %v1312
    %v1316 = vmul.f32 %v1306, %v1315
    %1318 = vrot.lane.b32.xlu0 %v811, 96
    %v1319 = vpop.permute.xlu0 %1318
    %v1322 = vsel %vm968, %v1314, 0
    %1324 = vmatprep.subr.mxu0 0.0
    %1325 = vmatpush1.msra.mxu0 %v1319
    %1326 = vmatprep.subr.mxu0 0.0
    %1327 = vmatpush1.msra.mxu0 0.0
    %1328 = vmatprep.subr.mxu0 0.0
    %1329 = vmatpush1.msra.mxu0 0.0
    %1330 = vmatprep.subr.mxu0 0.0
    %1331 = vmatpush1.msra.mxu0 0.0
    %1332 = vmatprep.subr.mxu0 0.0
    %1333 = vmatpush1.msra.mxu0 0.0
    %1334 = vmatprep.subr.mxu0 0.0
    %1335 = vmatpush1.msra.mxu0 0.0
    %1336 = vmatprep.subr.mxu0 0.0
    %1337 = vmatpush1.msra.mxu0 0.0
    %1338 = vmatprep.subr.mxu0 0.0
    %1339 = vmatpush1.msra.mxu0 0.0
    %1340 = vmatprep.subr.mxu0 0.0
    %1341 = vmatpush1.msra.mxu0 0.0
    %1342 = vmatprep.subr.mxu0 0.0
    %1343 = vmatpush1.msra.mxu0 0.0
    %1344 = vmatprep.subr.mxu0 0.0
    %1345 = vmatpush1.msra.mxu0 0.0
    %1346 = vmatprep.subr.mxu0 0.0
    %1347 = vmatpush1.msra.mxu0 0.0
    %1348 = vmatprep.subr.mxu0 0.0
    %1349 = vmatpush1.msra.mxu0 0.0
    %1350 = vmatprep.subr.mxu0 0.0
    %1351 = vmatpush1.msra.mxu0 0.0
    %1352 = vmatprep.subr.mxu0 0.0
    %1353 = vmatpush1.msra.mxu0 0.0
    %1354 = vmatprep.subr.mxu0 0.0
    %1355 = vmatpush1.msra.mxu0 0.0
    %1356 = vmatprep.subr.mxu0 0.0
    %1357 = vmatpush1.msra.mxu0 0.0
    %1358 = vmatprep.subr.mxu0 0.0
    %1359 = vmatpush1.msra.mxu0 0.0
    %1360 = vmatprep.subr.mxu0 0.0
    %1361 = vmatpush1.msra.mxu0 0.0
    %1362 = vmatprep.subr.mxu0 0.0
    %1363 = vmatpush1.msra.mxu0 0.0
    %1364 = vmatprep.subr.mxu0 0.0
    %1365 = vmatpush1.msra.mxu0 0.0
    %1366 = vmatprep.subr.mxu0 0.0
    %1367 = vmatpush1.msra.mxu0 0.0
    %1368 = vmatprep.subr.mxu0 0.0
    %1369 = vmatpush1.msra.mxu0 0.0
    %1370 = vmatprep.subr.mxu0 0.0
    %1371 = vmatpush1.msra.mxu0 0.0
    %1372 = vmatprep.subr.mxu0 0.0
    %1373 = vmatpush1.msra.mxu0 0.0
    %1374 = vmatprep.subr.mxu0 0.0
    %1375 = vmatpush1.msra.mxu0 0.0
    %1376 = vmatprep.subr.mxu0 0.0
    %1377 = vmatpush1.msra.mxu0 0.0
    %1378 = vmatprep.subr.mxu0 0.0
    %1379 = vmatpush1.msra.mxu0 0.0
    %1380 = vmatprep.subr.mxu0 0.0
    %1381 = vmatpush1.msra.mxu0 0.0
    %1382 = vmatprep.subr.mxu0 0.0
    %1383 = vmatpush1.msra.mxu0 0.0
    %1384 = vmatprep.subr.mxu0 0.0
    %1385 = vmatpush1.msra.mxu0 0.0
    %1386 = vmatprep.subr.mxu0 0.0
    %1387 = vmatpush1.msra.mxu0 0.0
    %1388 = vmatprep.mubr.f32.mxu0 0.0
    %1389 = vmatmul.mubr.f32.gmra.mrb[0].mxu0 %v1322
    %v1390 = vpop.f32.mrb[0].mxu0
    %v1391 = vadd.f32 0.0, %v1390
    %v1392 = vpop.f32.mrb[0].mxu0
    %1393 = vdwg.mxu0
    %1395 = vrot.lane.b32.xlu0 %v812, 96
    %v1396 = vpop.permute.xlu0 %1395
    %v1399 = vsel %vm968, %v1316, 0
    %1401 = vmatprep.subr.mxu0 0.0
    %1402 = vmatpush1.msra.mxu0 %v1396
    %1403 = vmatprep.subr.mxu0 0.0
    %1404 = vmatpush1.msra.mxu0 0.0
    %1405 = vmatprep.subr.mxu0 0.0
    %1406 = vmatpush1.msra.mxu0 0.0
    %1407 = vmatprep.subr.mxu0 0.0
    %1408 = vmatpush1.msra.mxu0 0.0
    %1409 = vmatprep.subr.mxu0 0.0
    %1410 = vmatpush1.msra.mxu0 0.0
    %1411 = vmatprep.subr.mxu0 0.0
    %1412 = vmatpush1.msra.mxu0 0.0
    %1413 = vmatprep.subr.mxu0 0.0
    %1414 = vmatpush1.msra.mxu0 0.0
    %1415 = vmatprep.subr.mxu0 0.0
    %1416 = vmatpush1.msra.mxu0 0.0
    %1417 = vmatprep.subr.mxu0 0.0
    %1418 = vmatpush1.msra.mxu0 0.0
    %1419 = vmatprep.subr.mxu0 0.0
    %1420 = vmatpush1.msra.mxu0 0.0
    %1421 = vmatprep.subr.mxu0 0.0
    %1422 = vmatpush1.msra.mxu0 0.0
    %1423 = vmatprep.subr.mxu0 0.0
    %1424 = vmatpush1.msra.mxu0 0.0
    %1425 = vmatprep.subr.mxu0 0.0
    %1426 = vmatpush1.msra.mxu0 0.0
    %1427 = vmatprep.subr.mxu0 0.0
    %1428 = vmatpush1.msra.mxu0 0.0
    %1429 = vmatprep.subr.mxu0 0.0
    %1430 = vmatpush1.msra.mxu0 0.0
    %1431 = vmatprep.subr.mxu0 0.0
    %1432 = vmatpush1.msra.mxu0 0.0
    %1433 = vmatprep.subr.mxu0 0.0
    %1434 = vmatpush1.msra.mxu0 0.0
    %1435 = vmatprep.subr.mxu0 0.0
    %1436 = vmatpush1.msra.mxu0 0.0
    %1437 = vmatprep.subr.mxu0 0.0
    %1438 = vmatpush1.msra.mxu0 0.0
    %1439 = vmatprep.subr.mxu0 0.0
    %1440 = vmatpush1.msra.mxu0 0.0
    %1441 = vmatprep.subr.mxu0 0.0
    %1442 = vmatpush1.msra.mxu0 0.0
    %1443 = vmatprep.subr.mxu0 0.0
    %1444 = vmatpush1.msra.mxu0 0.0
    %1445 = vmatprep.subr.mxu0 0.0
    %1446 = vmatpush1.msra.mxu0 0.0
    %1447 = vmatprep.subr.mxu0 0.0
    %1448 = vmatpush1.msra.mxu0 0.0
    %1449 = vmatprep.subr.mxu0 0.0
    %1450 = vmatpush1.msra.mxu0 0.0
    %1451 = vmatprep.subr.mxu0 0.0
    %1452 = vmatpush1.msra.mxu0 0.0
    %1453 = vmatprep.subr.mxu0 0.0
    %1454 = vmatpush1.msra.mxu0 0.0
    %1455 = vmatprep.subr.mxu0 0.0
    %1456 = vmatpush1.msra.mxu0 0.0
    %1457 = vmatprep.subr.mxu0 0.0
    %1458 = vmatpush1.msra.mxu0 0.0
    %1459 = vmatprep.subr.mxu0 0.0
    %1460 = vmatpush1.msra.mxu0 0.0
    %1461 = vmatprep.subr.mxu0 0.0
    %1462 = vmatpush1.msra.mxu0 0.0
    %1463 = vmatprep.subr.mxu0 0.0
    %1464 = vmatpush1.msra.mxu0 0.0
    %1465 = vmatprep.mubr.f32.mxu0 0.0
    %1466 = vmatmul.mubr.f32.gmra.mrb[0].mxu0 %v1399
    %v1467 = vpop.f32.mrb[0].mxu0
    %v1468 = vadd.f32 0.0, %v1467
    %v1469 = vpop.f32.mrb[0].mxu0
    %1470 = vdwg.mxu0
    %1471 = vrot.lane.b32.xlu0 %v491, 64
    %v1472 = vpop.permute.xlu0 %1471
    %1473 = vrot.lane.b32.xlu0 %v651, 64
    %v1474 = vpop.permute.xlu0 %1473
    %v1475 = vsel %vm813, %v1472, 0
    %v1477 = vsel %vm813, %v1474, 0
    %1479 = vmatprep.subr.mxu0 0.0
    %1480 = vmatpush1.xpose.msra.mxu0 %v1477
    %1481 = vmatprep.subr.mxu0 0.0
    %1482 = vmatpush1.xpose.msra.mxu0 0.0
    %1483 = vmatprep.subr.mxu0 0.0
    %1484 = vmatpush1.xpose.msra.mxu0 0.0
    %1485 = vmatprep.subr.mxu0 0.0
    %1486 = vmatpush1.xpose.msra.mxu0 0.0
    %1487 = vmatprep.subr.mxu0 0.0
    %1488 = vmatpush1.xpose.msra.mxu0 0.0
    %1489 = vmatprep.subr.mxu0 0.0
    %1490 = vmatpush1.xpose.msra.mxu0 0.0
    %1491 = vmatprep.subr.mxu0 0.0
    %1492 = vmatpush1.xpose.msra.mxu0 0.0
    %1493 = vmatprep.subr.mxu0 0.0
    %1494 = vmatpush1.xpose.msra.mxu0 0.0
    %1495 = vmatprep.subr.mxu0 0.0
    %1496 = vmatpush1.xpose.msra.mxu0 0.0
    %1497 = vmatprep.subr.mxu0 0.0
    %1498 = vmatpush1.xpose.msra.mxu0 0.0
    %1499 = vmatprep.subr.mxu0 0.0
    %1500 = vmatpush1.xpose.msra.mxu0 0.0
    %1501 = vmatprep.subr.mxu0 0.0
    %1502 = vmatpush1.xpose.msra.mxu0 0.0
    %1503 = vmatprep.subr.mxu0 0.0
    %1504 = vmatpush1.xpose.msra.mxu0 0.0
    %1505 = vmatprep.subr.mxu0 0.0
    %1506 = vmatpush1.xpose.msra.mxu0 0.0
    %1507 = vmatprep.subr.mxu0 0.0
    %1508 = vmatpush1.xpose.msra.mxu0 0.0
    %1509 = vmatprep.subr.mxu0 0.0
    %1510 = vmatpush1.xpose.msra.mxu0 0.0
    %1511 = vmatprep.subr.mxu0 0.0
    %1512 = vmatpush1.xpose.msra.mxu0 0.0
    %1513 = vmatprep.subr.mxu0 0.0
    %1514 = vmatpush1.xpose.msra.mxu0 0.0
    %1515 = vmatprep.subr.mxu0 0.0
    %1516 = vmatpush1.xpose.msra.mxu0 0.0
    %1517 = vmatprep.subr.mxu0 0.0
    %1518 = vmatpush1.xpose.msra.mxu0 0.0
    %1519 = vmatprep.subr.mxu0 0.0
    %1520 = vmatpush1.xpose.msra.mxu0 0.0
    %1521 = vmatprep.subr.mxu0 0.0
    %1522 = vmatpush1.xpose.msra.mxu0 0.0
    %1523 = vmatprep.subr.mxu0 0.0
    %1524 = vmatpush1.xpose.msra.mxu0 0.0
    %1525 = vmatprep.subr.mxu0 0.0
    %1526 = vmatpush1.xpose.msra.mxu0 0.0
    %1527 = vmatprep.subr.mxu0 0.0
    %1528 = vmatpush1.xpose.msra.mxu0 0.0
    %1529 = vmatprep.subr.mxu0 0.0
    %1530 = vmatpush1.xpose.msra.mxu0 0.0
    %1531 = vmatprep.subr.mxu0 0.0
    %1532 = vmatpush1.xpose.msra.mxu0 0.0
    %1533 = vmatprep.subr.mxu0 0.0
    %1534 = vmatpush1.xpose.msra.mxu0 0.0
    %1535 = vmatprep.subr.mxu0 0.0
    %1536 = vmatpush1.xpose.msra.mxu0 0.0
    %1537 = vmatprep.subr.mxu0 0.0
    %1538 = vmatpush1.xpose.msra.mxu0 0.0
    %1539 = vmatprep.subr.mxu0 0.0
    %1540 = vmatpush1.xpose.msra.mxu0 0.0
    %1541 = vmatprep.subr.mxu0 0.0
    %1542 = vmatpush1.xpose.msra.mxu0 0.0
    %1543 = vmatprep.mubr.f32.mxu0 0.0
    %1544 = vmatmul.mubr.f32.gmra.mrb[0].mxu0 %v1475
    %v1545 = vpop.f32.mrb[0].mxu0
    %v1546 = vadd.f32 0.0, %v1545
    %v1547 = vpop.f32.mrb[0].mxu0
    %1548 = vdwg.mxu0
    %1549 = vrot.lane.b32.xlu0 %v492, 64
    %v1550 = vpop.permute.xlu0 %1549
    %1551 = vrot.lane.b32.xlu0 %v652, 64
    %v1552 = vpop.permute.xlu0 %1551
    %v1553 = vsel %vm813, %v1550, 0
    %v1555 = vsel %vm813, %v1552, 0
    %1557 = vmatprep.subr.mxu0 0.0
    %1558 = vmatpush1.xpose.msra.mxu0 %v1555
    %1559 = vmatprep.subr.mxu0 0.0
    %1560 = vmatpush1.xpose.msra.mxu0 0.0
    %1561 = vmatprep.subr.mxu0 0.0
    %1562 = vmatpush1.xpose.msra.mxu0 0.0
    %1563 = vmatprep.subr.mxu0 0.0
    %1564 = vmatpush1.xpose.msra.mxu0 0.0
    %1565 = vmatprep.subr.mxu0 0.0
    %1566 = vmatpush1.xpose.msra.mxu0 0.0
    %1567 = vmatprep.subr.mxu0 0.0
    %1568 = vmatpush1.xpose.msra.mxu0 0.0
    %1569 = vmatprep.subr.mxu0 0.0
    %1570 = vmatpush1.xpose.msra.mxu0 0.0
    %1571 = vmatprep.subr.mxu0 0.0
    %1572 = vmatpush1.xpose.msra.mxu0 0.0
    %1573 = vmatprep.subr.mxu0 0.0
    %1574 = vmatpush1.xpose.msra.mxu0 0.0
    %1575 = vmatprep.subr.mxu0 0.0
    %1576 = vmatpush1.xpose.msra.mxu0 0.0
    %1577 = vmatprep.subr.mxu0 0.0
    %1578 = vmatpush1.xpose.msra.mxu0 0.0
    %1579 = vmatprep.subr.mxu0 0.0
    %1580 = vmatpush1.xpose.msra.mxu0 0.0
    %1581 = vmatprep.subr.mxu0 0.0
    %1582 = vmatpush1.xpose.msra.mxu0 0.0
    %1583 = vmatprep.subr.mxu0 0.0
    %1584 = vmatpush1.xpose.msra.mxu0 0.0
    %1585 = vmatprep.subr.mxu0 0.0
    %1586 = vmatpush1.xpose.msra.mxu0 0.0
    %1587 = vmatprep.subr.mxu0 0.0
    %1588 = vmatpush1.xpose.msra.mxu0 0.0
    %1589 = vmatprep.subr.mxu0 0.0
    %1590 = vmatpush1.xpose.msra.mxu0 0.0
    %1591 = vmatprep.subr.mxu0 0.0
    %1592 = vmatpush1.xpose.msra.mxu0 0.0
    %1593 = vmatprep.subr.mxu0 0.0
    %1594 = vmatpush1.xpose.msra.mxu0 0.0
    %1595 = vmatprep.subr.mxu0 0.0
    %1596 = vmatpush1.xpose.msra.mxu0 0.0
    %1597 = vmatprep.subr.mxu0 0.0
    %1598 = vmatpush1.xpose.msra.mxu0 0.0
    %1599 = vmatprep.subr.mxu0 0.0
    %1600 = vmatpush1.xpose.msra.mxu0 0.0
    %1601 = vmatprep.subr.mxu0 0.0
    %1602 = vmatpush1.xpose.msra.mxu0 0.0
    %1603 = vmatprep.subr.mxu0 0.0
    %1604 = vmatpush1.xpose.msra.mxu0 0.0
    %1605 = vmatprep.subr.mxu0 0.0
    %1606 = vmatpush1.xpose.msra.mxu0 0.0
    %1607 = vmatprep.subr.mxu0 0.0
    %1608 = vmatpush1.xpose.msra.mxu0 0.0
    %1609 = vmatprep.subr.mxu0 0.0
    %1610 = vmatpush1.xpose.msra.mxu0 0.0
    %1611 = vmatprep.subr.mxu0 0.0
    %1612 = vmatpush1.xpose.msra.mxu0 0.0
    %1613 = vmatprep.subr.mxu0 0.0
    %1614 = vmatpush1.xpose.msra.mxu0 0.0
    %1615 = vmatprep.subr.mxu0 0.0
    %1616 = vmatpush1.xpose.msra.mxu0 0.0
    %1617 = vmatprep.subr.mxu0 0.0
    %1618 = vmatpush1.xpose.msra.mxu0 0.0
    %1619 = vmatprep.subr.mxu0 0.0
    %1620 = vmatpush1.xpose.msra.mxu0 0.0
    %1621 = vmatprep.mubr.f32.mxu0 0.0
    %1622 = vmatmul.mubr.f32.gmra.mrb[0].mxu0 %v1553
    %v1623 = vpop.f32.mrb[0].mxu0
    %v1624 = vadd.f32 0.0, %v1623
    %v1625 = vpop.f32.mrb[0].mxu0
    %1626 = vdwg.mxu0
    %v1627 = vmul.f32 %v1546, 0.17677669
    %v1628 = vmul.f32 %v1624, 0.17677669
    %v1629 = vsel %vm968, %v1627, -inf
    %1630 = vmax.xlane.f32.xlu0 %v1629
    %v1631 = vpop.xlane.xlu0 %1630
    %v1632 = vsel %vm968, %v1628, -inf
    %1633 = vmax.xlane.f32.xlu0 %v1632
    %v1634 = vpop.xlane.xlu0 %1633
    %v1635 = vsub.f32 %v1627, %v1631
    %v1636 = vsub.f32 %v1628, %v1634
    %v1637 = vmul.f32 %v1635, 1.442695
    %v1638 = vpow.pop %v1637
    %v1639 = vmul.f32 %v1636, 1.442695
    %v1640 = vpow.pop %v1639
    %v1641 = vsel %vm968, %v1638, 0.0
    %1642 = vadd.xlane.f32.xlu0 %v1641
    %v1643 = vpop.xlane.xlu0 %1642
    %v1644 = vsel %vm968, %v1640, 0.0
    %1645 = vadd.xlane.f32.xlu0 %v1644
    %v1646 = vpop.xlane.xlu0 %1645
    %v1647 = vrcp.pop %v1643
    %v1648 = vmul.f32 %v1638, %v1647
    %v1649 = vrcp.pop %v1646
    %v1650 = vmul.f32 %v1640, %v1649
    %1651 = vrot.lane.b32.xlu0 %v811, 64
    %v1652 = vpop.permute.xlu0 %1651
    %v1655 = vsel %vm968, %v1648, 0
    %1657 = vmatprep.subr.mxu0 0.0
    %1658 = vmatpush1.msra.mxu0 %v1652
    %1659 = vmatprep.subr.mxu0 0.0
    %1660 = vmatpush1.msra.mxu0 0.0
    %1661 = vmatprep.subr.mxu0 0.0
    %1662 = vmatpush1.msra.mxu0 0.0
    %1663 = vmatprep.subr.mxu0 0.0
    %1664 = vmatpush1.msra.mxu0 0.0
    %1665 = vmatprep.subr.mxu0 0.0
    %1666 = vmatpush1.msra.mxu0 0.0
    %1667 = vmatprep.subr.mxu0 0.0
    %1668 = vmatpush1.msra.mxu0 0.0
    %1669 = vmatprep.subr.mxu0 0.0
    %1670 = vmatpush1.msra.mxu0 0.0
    %1671 = vmatprep.subr.mxu0 0.0
    %1672 = vmatpush1.msra.mxu0 0.0
    %1673 = vmatprep.subr.mxu0 0.0
    %1674 = vmatpush1.msra.mxu0 0.0
    %1675 = vmatprep.subr.mxu0 0.0
    %1676 = vmatpush1.msra.mxu0 0.0
    %1677 = vmatprep.subr.mxu0 0.0
    %1678 = vmatpush1.msra.mxu0 0.0
    %1679 = vmatprep.subr.mxu0 0.0
    %1680 = vmatpush1.msra.mxu0 0.0
    %1681 = vmatprep.subr.mxu0 0.0
    %1682 = vmatpush1.msra.mxu0 0.0
    %1683 = vmatprep.subr.mxu0 0.0
    %1684 = vmatpush1.msra.mxu0 0.0
    %1685 = vmatprep.subr.mxu0 0.0
    %1686 = vmatpush1.msra.mxu0 0.0
    %1687 = vmatprep.subr.mxu0 0.0
    %1688 = vmatpush1.msra.mxu0 0.0
    %1689 = vmatprep.subr.mxu0 0.0
    %1690 = vmatpush1.msra.mxu0 0.0
    %1691 = vmatprep.subr.mxu0 0.0
    %1692 = vmatpush1.msra.mxu0 0.0
    %1693 = vmatprep.subr.mxu0 0.0
    %1694 = vmatpush1.msra.mxu0 0.0
    %1695 = vmatprep.subr.mxu0 0.0
    %1696 = vmatpush1.msra.mxu0 0.0
    %1697 = vmatprep.subr.mxu0 0.0
    %1698 = vmatpush1.msra.mxu0 0.0
    %1699 = vmatprep.subr.mxu0 0.0
    %1700 = vmatpush1.msra.mxu0 0.0
    %1701 = vmatprep.subr.mxu0 0.0
    %1702 = vmatpush1.msra.mxu0 0.0
    %1703 = vmatprep.subr.mxu0 0.0
    %1704 = vmatpush1.msra.mxu0 0.0
    %1705 = vmatprep.subr.mxu0 0.0
    %1706 = vmatpush1.msra.mxu0 0.0
    %1707 = vmatprep.subr.mxu0 0.0
    %1708 = vmatpush1.msra.mxu0 0.0
    %1709 = vmatprep.subr.mxu0 0.0
    %1710 = vmatpush1.msra.mxu0 0.0
    %1711 = vmatprep.subr.mxu0 0.0
    %1712 = vmatpush1.msra.mxu0 0.0
    %1713 = vmatprep.subr.mxu0 0.0
    %1714 = vmatpush1.msra.mxu0 0.0
    %1715 = vmatprep.subr.mxu0 0.0
    %1716 = vmatpush1.msra.mxu0 0.0
    %1717 = vmatprep.subr.mxu0 0.0
    %1718 = vmatpush1.msra.mxu0 0.0
    %1719 = vmatprep.subr.mxu0 0.0
    %1720 = vmatpush1.msra.mxu0 0.0
    %1721 = vmatprep.mubr.f32.mxu0 0.0
    %1722 = vmatmul.mubr.f32.gmra.mrb[0].mxu0 %v1655
    %v1723 = vpop.f32.mrb[0].mxu0
    %v1724 = vadd.f32 0.0, %v1723
    %v1725 = vpop.f32.mrb[0].mxu0
    %1726 = vdwg.mxu0
    %1727 = vrot.lane.b32.xlu0 %v812, 64
    %v1728 = vpop.permute.xlu0 %1727
    %v1731 = vsel %vm968, %v1650, 0
    %1733 = vmatprep.subr.mxu0 0.0
    %1734 = vmatpush1.msra.mxu0 %v1728
    %1735 = vmatprep.subr.mxu0 0.0
    %1736 = vmatpush1.msra.mxu0 0.0
    %1737 = vmatprep.subr.mxu0 0.0
    %1738 = vmatpush1.msra.mxu0 0.0
    %1739 = vmatprep.subr.mxu0 0.0
    %1740 = vmatpush1.msra.mxu0 0.0
    %1741 = vmatprep.subr.mxu0 0.0
    %1742 = vmatpush1.msra.mxu0 0.0
    %1743 = vmatprep.subr.mxu0 0.0
    %1744 = vmatpush1.msra.mxu0 0.0
    %1745 = vmatprep.subr.mxu0 0.0
    %1746 = vmatpush1.msra.mxu0 0.0
    %1747 = vmatprep.subr.mxu0 0.0
    %1748 = vmatpush1.msra.mxu0 0.0
    %1749 = vmatprep.subr.mxu0 0.0
    %1750 = vmatpush1.msra.mxu0 0.0
    %1751 = vmatprep.subr.mxu0 0.0
    %1752 = vmatpush1.msra.mxu0 0.0
    %1753 = vmatprep.subr.mxu0 0.0
    %1754 = vmatpush1.msra.mxu0 0.0
    %1755 = vmatprep.subr.mxu0 0.0
    %1756 = vmatpush1.msra.mxu0 0.0
    %1757 = vmatprep.subr.mxu0 0.0
    %1758 = vmatpush1.msra.mxu0 0.0
    %1759 = vmatprep.subr.mxu0 0.0
    %1760 = vmatpush1.msra.mxu0 0.0
    %1761 = vmatprep.subr.mxu0 0.0
    %1762 = vmatpush1.msra.mxu0 0.0
    %1763 = vmatprep.subr.mxu0 0.0
    %1764 = vmatpush1.msra.mxu0 0.0
    %1765 = vmatprep.subr.mxu0 0.0
    %1766 = vmatpush1.msra.mxu0 0.0
    %1767 = vmatprep.subr.mxu0 0.0
    %1768 = vmatpush1.msra.mxu0 0.0
    %1769 = vmatprep.subr.mxu0 0.0
    %1770 = vmatpush1.msra.mxu0 0.0
    %1771 = vmatprep.subr.mxu0 0.0
    %1772 = vmatpush1.msra.mxu0 0.0
    %1773 = vmatprep.subr.mxu0 0.0
    %1774 = vmatpush1.msra.mxu0 0.0
    %1775 = vmatprep.subr.mxu0 0.0
    %1776 = vmatpush1.msra.mxu0 0.0
    %1777 = vmatprep.subr.mxu0 0.0
    %1778 = vmatpush1.msra.mxu0 0.0
    %1779 = vmatprep.subr.mxu0 0.0
    %1780 = vmatpush1.msra.mxu0 0.0
    %1781 = vmatprep.subr.mxu0 0.0
    %1782 = vmatpush1.msra.mxu0 0.0
    %1783 = vmatprep.subr.mxu0 0.0
    %1784 = vmatpush1.msra.mxu0 0.0
    %1785 = vmatprep.subr.mxu0 0.0
    %1786 = vmatpush1.msra.mxu0 0.0
    %1787 = vmatprep.subr.mxu0 0.0
    %1788 = vmatpush1.msra.mxu0 0.0
    %1789 = vmatprep.subr.mxu0 0.0
    %1790 = vmatpush1.msra.mxu0 0.0
    %1791 = vmatprep.subr.mxu0 0.0
    %1792 = vmatpush1.msra.mxu0 0.0
    %1793 = vmatprep.subr.mxu0 0.0
    %1794 = vmatpush1.msra.mxu0 0.0
    %1795 = vmatprep.subr.mxu0 0.0
    %1796 = vmatpush1.msra.mxu0 0.0
    %1797 = vmatprep.mubr.f32.mxu0 0.0
    %1798 = vmatmul.mubr.f32.gmra.mrb[0].mxu0 %v1731
    %v1799 = vpop.f32.mrb[0].mxu0
    %v1800 = vadd.f32 0.0, %v1799
    %v1801 = vpop.f32.mrb[0].mxu0
    %1802 = vdwg.mxu0
    %1803 = vrot.lane.b32.xlu0 %v491, 32
    %v1804 = vpop.permute.xlu0 %1803
    %1805 = vrot.lane.b32.xlu0 %v651, 32
    %v1806 = vpop.permute.xlu0 %1805
    %v1807 = vsel %vm813, %v1804, 0
    %v1809 = vsel %vm813, %v1806, 0
    %1811 = vmatprep.subr.mxu0 0.0
    %1812 = vmatpush1.xpose.msra.mxu0 %v1809
    %1813 = vmatprep.subr.mxu0 0.0
    %1814 = vmatpush1.xpose.msra.mxu0 0.0
    %1815 = vmatprep.subr.mxu0 0.0
    %1816 = vmatpush1.xpose.msra.mxu0 0.0
    %1817 = vmatprep.subr.mxu0 0.0
    %1818 = vmatpush1.xpose.msra.mxu0 0.0
    %1819 = vmatprep.subr.mxu0 0.0
    %1820 = vmatpush1.xpose.msra.mxu0 0.0
    %1821 = vmatprep.subr.mxu0 0.0
    %1822 = vmatpush1.xpose.msra.mxu0 0.0
    %1823 = vmatprep.subr.mxu0 0.0
    %1824 = vmatpush1.xpose.msra.mxu0 0.0
    %1825 = vmatprep.subr.mxu0 0.0
    %1826 = vmatpush1.xpose.msra.mxu0 0.0
    %1827 = vmatprep.subr.mxu0 0.0
    %1828 = vmatpush1.xpose.msra.mxu0 0.0
    %1829 = vmatprep.subr.mxu0 0.0
    %1830 = vmatpush1.xpose.msra.mxu0 0.0
    %1831 = vmatprep.subr.mxu0 0.0
    %1832 = vmatpush1.xpose.msra.mxu0 0.0
    %1833 = vmatprep.subr.mxu0 0.0
    %1834 = vmatpush1.xpose.msra.mxu0 0.0
    %1835 = vmatprep.subr.mxu0 0.0
    %1836 = vmatpush1.xpose.msra.mxu0 0.0
    %1837 = vmatprep.subr.mxu0 0.0
    %1838 = vmatpush1.xpose.msra.mxu0 0.0
    %1839 = vmatprep.subr.mxu0 0.0
    %1840 = vmatpush1.xpose.msra.mxu0 0.0
    %1841 = vmatprep.subr.mxu0 0.0
    %1842 = vmatpush1.xpose.msra.mxu0 0.0
    %1843 = vmatprep.subr.mxu0 0.0
    %1844 = vmatpush1.xpose.msra.mxu0 0.0
    %1845 = vmatprep.subr.mxu0 0.0
    %1846 = vmatpush1.xpose.msra.mxu0 0.0
    %1847 = vmatprep.subr.mxu0 0.0
    %1848 = vmatpush1.xpose.msra.mxu0 0.0
    %1849 = vmatprep.subr.mxu0 0.0
    %1850 = vmatpush1.xpose.msra.mxu0 0.0
    %1851 = vmatprep.subr.mxu0 0.0
    %1852 = vmatpush1.xpose.msra.mxu0 0.0
    %1853 = vmatprep.subr.mxu0 0.0
    %1854 = vmatpush1.xpose.msra.mxu0 0.0
    %1855 = vmatprep.subr.mxu0 0.0
    %1856 = vmatpush1.xpose.msra.mxu0 0.0
    %1857 = vmatprep.subr.mxu0 0.0
    %1858 = vmatpush1.xpose.msra.mxu0 0.0
    %1859 = vmatprep.subr.mxu0 0.0
    %1860 = vmatpush1.xpose.msra.mxu0 0.0
    %1861 = vmatprep.subr.mxu0 0.0
    %1862 = vmatpush1.xpose.msra.mxu0 0.0
    %1863 = vmatprep.subr.mxu0 0.0
    %1864 = vmatpush1.xpose.msra.mxu0 0.0
    %1865 = vmatprep.subr.mxu0 0.0
    %1866 = vmatpush1.xpose.msra.mxu0 0.0
    %1867 = vmatprep.subr.mxu0 0.0
    %1868 = vmatpush1.xpose.msra.mxu0 0.0
    %1869 = vmatprep.subr.mxu0 0.0
    %1870 = vmatpush1.xpose.msra.mxu0 0.0
    %1871 = vmatprep.subr.mxu0 0.0
    %1872 = vmatpush1.xpose.msra.mxu0 0.0
    %1873 = vmatprep.subr.mxu0 0.0
    %1874 = vmatpush1.xpose.msra.mxu0 0.0
    %1875 = vmatprep.mubr.f32.mxu0 0.0
    %1876 = vmatmul.mubr.f32.gmra.mrb[0].mxu0 %v1807
    %v1877 = vpop.f32.mrb[0].mxu0
    %v1878 = vadd.f32 0.0, %v1877
    %v1879 = vpop.f32.mrb[0].mxu0
    %1880 = vdwg.mxu0
    %1881 = vrot.lane.b32.xlu0 %v492, 32
    %v1882 = vpop.permute.xlu0 %1881
    %1883 = vrot.lane.b32.xlu0 %v652, 32
    %v1884 = vpop.permute.xlu0 %1883
    %v1885 = vsel %vm813, %v1882, 0
    %v1887 = vsel %vm813, %v1884, 0
    %1889 = vmatprep.subr.mxu0 0.0
    %1890 = vmatpush1.xpose.msra.mxu0 %v1887
    %1891 = vmatprep.subr.mxu0 0.0
    %1892 = vmatpush1.xpose.msra.mxu0 0.0
    %1893 = vmatprep.subr.mxu0 0.0
    %1894 = vmatpush1.xpose.msra.mxu0 0.0
    %1895 = vmatprep.subr.mxu0 0.0
    %1896 = vmatpush1.xpose.msra.mxu0 0.0
    %1897 = vmatprep.subr.mxu0 0.0
    %1898 = vmatpush1.xpose.msra.mxu0 0.0
    %1899 = vmatprep.subr.mxu0 0.0
    %1900 = vmatpush1.xpose.msra.mxu0 0.0
    %1901 = vmatprep.subr.mxu0 0.0
    %1902 = vmatpush1.xpose.msra.mxu0 0.0
    %1903 = vmatprep.subr.mxu0 0.0
    %1904 = vmatpush1.xpose.msra.mxu0 0.0
    %1905 = vmatprep.subr.mxu0 0.0
    %1906 = vmatpush1.xpose.msra.mxu0 0.0
    %1907 = vmatprep.subr.mxu0 0.0
    %1908 = vmatpush1.xpose.msra.mxu0 0.0
    %1909 = vmatprep.subr.mxu0 0.0
    %1910 = vmatpush1.xpose.msra.mxu0 0.0
    %1911 = vmatprep.subr.mxu0 0.0
    %1912 = vmatpush1.xpose.msra.mxu0 0.0
    %1913 = vmatprep.subr.mxu0 0.0
    %1914 = vmatpush1.xpose.msra.mxu0 0.0
    %1915 = vmatprep.subr.mxu0 0.0
    %1916 = vmatpush1.xpose.msra.mxu0 0.0
    %1917 = vmatprep.subr.mxu0 0.0
    %1918 = vmatpush1.xpose.msra.mxu0 0.0
    %1919 = vmatprep.subr.mxu0 0.0
    %1920 = vmatpush1.xpose.msra.mxu0 0.0
    %1921 = vmatprep.subr.mxu0 0.0
    %1922 = vmatpush1.xpose.msra.mxu0 0.0
    %1923 = vmatprep.subr.mxu0 0.0
    %1924 = vmatpush1.xpose.msra.mxu0 0.0
    %1925 = vmatprep.subr.mxu0 0.0
    %1926 = vmatpush1.xpose.msra.mxu0 0.0
    %1927 = vmatprep.subr.mxu0 0.0
    %1928 = vmatpush1.xpose.msra.mxu0 0.0
    %1929 = vmatprep.subr.mxu0 0.0
    %1930 = vmatpush1.xpose.msra.mxu0 0.0
    %1931 = vmatprep.subr.mxu0 0.0
    %1932 = vmatpush1.xpose.msra.mxu0 0.0
    %1933 = vmatprep.subr.mxu0 0.0
    %1934 = vmatpush1.xpose.msra.mxu0 0.0
    %1935 = vmatprep.subr.mxu0 0.0
    %1936 = vmatpush1.xpose.msra.mxu0 0.0
    %1937 = vmatprep.subr.mxu0 0.0
    %1938 = vmatpush1.xpose.msra.mxu0 0.0
    %1939 = vmatprep.subr.mxu0 0.0
    %1940 = vmatpush1.xpose.msra.mxu0 0.0
    %1941 = vmatprep.subr.mxu0 0.0
    %1942 = vmatpush1.xpose.msra.mxu0 0.0
    %1943 = vmatprep.subr.mxu0 0.0
    %1944 = vmatpush1.xpose.msra.mxu0 0.0
    %1945 = vmatprep.subr.mxu0 0.0
    %1946 = vmatpush1.xpose.msra.mxu0 0.0
    %1947 = vmatprep.subr.mxu0 0.0
    %1948 = vmatpush1.xpose.msra.mxu0 0.0
    %1949 = vmatprep.subr.mxu0 0.0
    %1950 = vmatpush1.xpose.msra.mxu0 0.0
    %1951 = vmatprep.subr.mxu0 0.0
    %1952 = vmatpush1.xpose.msra.mxu0 0.0
    %1953 = vmatprep.mubr.f32.mxu0 0.0
    %1954 = vmatmul.mubr.f32.gmra.mrb[0].mxu0 %v1885
    %v1955 = vpop.f32.mrb[0].mxu0
    %v1956 = vadd.f32 0.0, %v1955
    %v1957 = vpop.f32.mrb[0].mxu0
    %1958 = vdwg.mxu0
    %v1959 = vmul.f32 %v1878, 0.17677669
    %v1960 = vmul.f32 %v1956, 0.17677669
    %v1961 = vsel %vm968, %v1959, -inf
    %1962 = vmax.xlane.f32.xlu0 %v1961
    %v1963 = vpop.xlane.xlu0 %1962
    %v1964 = vsel %vm968, %v1960, -inf
    %1965 = vmax.xlane.f32.xlu0 %v1964
    %v1966 = vpop.xlane.xlu0 %1965
    %v1967 = vsub.f32 %v1959, %v1963
    %v1968 = vsub.f32 %v1960, %v1966
    %v1969 = vmul.f32 %v1967, 1.442695
    %v1970 = vpow.pop %v1969
    %v1971 = vmul.f32 %v1968, 1.442695
    %v1972 = vpow.pop %v1971
    %v1973 = vsel %vm968, %v1970, 0.0
    %1974 = vadd.xlane.f32.xlu0 %v1973
    %v1975 = vpop.xlane.xlu0 %1974
    %v1976 = vsel %vm968, %v1972, 0.0
    %1977 = vadd.xlane.f32.xlu0 %v1976
    %v1978 = vpop.xlane.xlu0 %1977
    %v1979 = vrcp.pop %v1975
    %v1980 = vmul.f32 %v1970, %v1979
    %v1981 = vrcp.pop %v1978
    %v1982 = vmul.f32 %v1972, %v1981
    %1983 = vrot.lane.b32.xlu0 %v811, 32
    %v1984 = vpop.permute.xlu0 %1983
    %v1987 = vsel %vm968, %v1980, 0
    %1989 = vmatprep.subr.mxu0 0.0
    %1990 = vmatpush1.msra.mxu0 %v1984
    %1991 = vmatprep.subr.mxu0 0.0
    %1992 = vmatpush1.msra.mxu0 0.0
    %1993 = vmatprep.subr.mxu0 0.0
    %1994 = vmatpush1.msra.mxu0 0.0
    %1995 = vmatprep.subr.mxu0 0.0
    %1996 = vmatpush1.msra.mxu0 0.0
    %1997 = vmatprep.subr.mxu0 0.0
    %1998 = vmatpush1.msra.mxu0 0.0
    %1999 = vmatprep.subr.mxu0 0.0
    %2000 = vmatpush1.msra.mxu0 0.0
    %2001 = vmatprep.subr.mxu0 0.0
    %2002 = vmatpush1.msra.mxu0 0.0
    %2003 = vmatprep.subr.mxu0 0.0
    %2004 = vmatpush1.msra.mxu0 0.0
    %2005 = vmatprep.subr.mxu0 0.0
    %2006 = vmatpush1.msra.mxu0 0.0
    %2007 = vmatprep.subr.mxu0 0.0
    %2008 = vmatpush1.msra.mxu0 0.0
    %2009 = vmatprep.subr.mxu0 0.0
    %2010 = vmatpush1.msra.mxu0 0.0
    %2011 = vmatprep.subr.mxu0 0.0
    %2012 = vmatpush1.msra.mxu0 0.0
    %2013 = vmatprep.subr.mxu0 0.0
    %2014 = vmatpush1.msra.mxu0 0.0
    %2015 = vmatprep.subr.mxu0 0.0
    %2016 = vmatpush1.msra.mxu0 0.0
    %2017 = vmatprep.subr.mxu0 0.0
    %2018 = vmatpush1.msra.mxu0 0.0
    %2019 = vmatprep.subr.mxu0 0.0
    %2020 = vmatpush1.msra.mxu0 0.0
    %2021 = vmatprep.subr.mxu0 0.0
    %2022 = vmatpush1.msra.mxu0 0.0
    %2023 = vmatprep.subr.mxu0 0.0
    %2024 = vmatpush1.msra.mxu0 0.0
    %2025 = vmatprep.subr.mxu0 0.0
    %2026 = vmatpush1.msra.mxu0 0.0
    %2027 = vmatprep.subr.mxu0 0.0
    %2028 = vmatpush1.msra.mxu0 0.0
    %2029 = vmatprep.subr.mxu0 0.0
    %2030 = vmatpush1.msra.mxu0 0.0
    %2031 = vmatprep.subr.mxu0 0.0
    %2032 = vmatpush1.msra.mxu0 0.0
    %2033 = vmatprep.subr.mxu0 0.0
    %2034 = vmatpush1.msra.mxu0 0.0
    %2035 = vmatprep.subr.mxu0 0.0
    %2036 = vmatpush1.msra.mxu0 0.0
    %2037 = vmatprep.subr.mxu0 0.0
    %2038 = vmatpush1.msra.mxu0 0.0
    %2039 = vmatprep.subr.mxu0 0.0
    %2040 = vmatpush1.msra.mxu0 0.0
    %2041 = vmatprep.subr.mxu0 0.0
    %2042 = vmatpush1.msra.mxu0 0.0
    %2043 = vmatprep.subr.mxu0 0.0
    %2044 = vmatpush1.msra.mxu0 0.0
    %2045 = vmatprep.subr.mxu0 0.0
    %2046 = vmatpush1.msra.mxu0 0.0
    %2047 = vmatprep.subr.mxu0 0.0
    %2048 = vmatpush1.msra.mxu0 0.0
    %2049 = vmatprep.subr.mxu0 0.0
    %2050 = vmatpush1.msra.mxu0 0.0
    %2051 = vmatprep.subr.mxu0 0.0
    %2052 = vmatpush1.msra.mxu0 0.0
    %2053 = vmatprep.mubr.f32.mxu0 0.0
    %2054 = vmatmul.mubr.f32.gmra.mrb[0].mxu0 %v1987
    %v2055 = vpop.f32.mrb[0].mxu0
    %v2056 = vadd.f32 0.0, %v2055
    %v2057 = vpop.f32.mrb[0].mxu0
    %2058 = vdwg.mxu0
    %2059 = vrot.lane.b32.xlu0 %v812, 32
    %v2060 = vpop.permute.xlu0 %2059
    %v2063 = vsel %vm968, %v1982, 0
    %2065 = vmatprep.subr.mxu0 0.0
    %2066 = vmatpush1.msra.mxu0 %v2060
    %2067 = vmatprep.subr.mxu0 0.0
    %2068 = vmatpush1.msra.mxu0 0.0
    %2069 = vmatprep.subr.mxu0 0.0
    %2070 = vmatpush1.msra.mxu0 0.0
    %2071 = vmatprep.subr.mxu0 0.0
    %2072 = vmatpush1.msra.mxu0 0.0
    %2073 = vmatprep.subr.mxu0 0.0
    %2074 = vmatpush1.msra.mxu0 0.0
    %2075 = vmatprep.subr.mxu0 0.0
    %2076 = vmatpush1.msra.mxu0 0.0
    %2077 = vmatprep.subr.mxu0 0.0
    %2078 = vmatpush1.msra.mxu0 0.0
    %2079 = vmatprep.subr.mxu0 0.0
    %2080 = vmatpush1.msra.mxu0 0.0
    %2081 = vmatprep.subr.mxu0 0.0
    %2082 = vmatpush1.msra.mxu0 0.0
    %2083 = vmatprep.subr.mxu0 0.0
    %2084 = vmatpush1.msra.mxu0 0.0
    %2085 = vmatprep.subr.mxu0 0.0
    %2086 = vmatpush1.msra.mxu0 0.0
    %2087 = vmatprep.subr.mxu0 0.0
    %2088 = vmatpush1.msra.mxu0 0.0
    %2089 = vmatprep.subr.mxu0 0.0
    %2090 = vmatpush1.msra.mxu0 0.0
    %2091 = vmatprep.subr.mxu0 0.0
    %2092 = vmatpush1.msra.mxu0 0.0
    %2093 = vmatprep.subr.mxu0 0.0
    %2094 = vmatpush1.msra.mxu0 0.0
    %2095 = vmatprep.subr.mxu0 0.0
    %2096 = vmatpush1.msra.mxu0 0.0
    %2097 = vmatprep.subr.mxu0 0.0
    %2098 = vmatpush1.msra.mxu0 0.0
    %2099 = vmatprep.subr.mxu0 0.0
    %2100 = vmatpush1.msra.mxu0 0.0
    %2101 = vmatprep.subr.mxu0 0.0
    %2102 = vmatpush1.msra.mxu0 0.0
    %2103 = vmatprep.subr.mxu0 0.0
    %2104 = vmatpush1.msra.mxu0 0.0
    %2105 = vmatprep.subr.mxu0 0.0
    %2106 = vmatpush1.msra.mxu0 0.0
    %2107 = vmatprep.subr.mxu0 0.0
    %2108 = vmatpush1.msra.mxu0 0.0
    %2109 = vmatprep.subr.mxu0 0.0
    %2110 = vmatpush1.msra.mxu0 0.0
    %2111 = vmatprep.subr.mxu0 0.0
    %2112 = vmatpush1.msra.mxu0 0.0
    %2113 = vmatprep.subr.mxu0 0.0
    %2114 = vmatpush1.msra.mxu0 0.0
    %2115 = vmatprep.subr.mxu0 0.0
    %2116 = vmatpush1.msra.mxu0 0.0
    %2117 = vmatprep.subr.mxu0 0.0
    %2118 = vmatpush1.msra.mxu0 0.0
    %2119 = vmatprep.subr.mxu0 0.0
    %2120 = vmatpush1.msra.mxu0 0.0
    %2121 = vmatprep.subr.mxu0 0.0
    %2122 = vmatpush1.msra.mxu0 0.0
    %2123 = vmatprep.subr.mxu0 0.0
    %2124 = vmatpush1.msra.mxu0 0.0
    %2125 = vmatprep.subr.mxu0 0.0
    %2126 = vmatpush1.msra.mxu0 0.0
    %2127 = vmatprep.subr.mxu0 0.0
    %2128 = vmatpush1.msra.mxu0 0.0
    %2129 = vmatprep.mubr.f32.mxu0 0.0
    %2130 = vmatmul.mubr.f32.gmra.mrb[0].mxu0 %v2063
    %v2131 = vpop.f32.mrb[0].mxu0
    %v2132 = vadd.f32 0.0, %v2131
    %v2133 = vpop.f32.mrb[0].mxu0
    %2134 = vdwg.mxu0
    %2137 = vrot.lane.b32.xlu0 %v1391, 32
    %v2138 = vpop.permute.xlu0 %2137
    %2139 = vrot.lane.b32.xlu0 %v1468, 32
    %v2140 = vpop.permute.xlu0 %2139
    %2145 = vrot.lane.b32.xlu0 %v1724, 64
    %v2146 = vpop.permute.xlu0 %2145
    %2147 = vrot.lane.b32.xlu0 %v1800, 64
    %v2148 = vpop.permute.xlu0 %2147
    %2153 = vrot.lane.b32.xlu0 %v2056, 96
    %v2154 = vpop.permute.xlu0 %2153
    %2155 = vrot.lane.b32.xlu0 %v2132, 96
    %v2156 = vpop.permute.xlu0 %2155
    %v2159 = vsel %vm813, %v1061, %v2138
    %v2160 = vsel %vm813, %v1134, %v2140
    %vm2161 = vcmask 523264
    %v2162 = vsel %vm2161, %v2159, %v2146
    %v2163 = vsel %vm2161, %v2160, %v2148
    %vm2164 = vcmask 785408
    %v2165 = vsel %vm2164, %v2162, %v2154
    %v2166 = vsel %vm2164, %v2163, %v2156
    %v2167 = vlaneseq
    %v2168 = vshrl.u32 %v2167, 7
    %v2169 = vsub.s32 6, %v2168
    %v2170 = vrot.slane %v280, %v2169
    %2171 = vmatprep.subr.mxu0 0.0
    %2172 = vmatpush1.msra.mxu0 %v264
    %2173 = vmatprep.subr.mxu0 0.0
    %2174 = vmatpush1.msra.mxu0 %v265
    %2175 = vmatprep.subr.mxu0 0.0
    %2176 = vmatpush1.msra.mxu0 %v266
    %2177 = vmatprep.subr.mxu0 0.0
    %2178 = vmatpush1.msra.mxu0 %v267
    %2179 = vmatprep.subr.mxu0 0.0
    %2180 = vmatpush1.msra.mxu0 %v268
    %2181 = vmatprep.subr.mxu0 0.0
    %2182 = vmatpush1.msra.mxu0 %v269
    %2183 = vmatprep.subr.mxu0 0.0
    %2184 = vmatpush1.msra.mxu0 %v270
    %2185 = vmatprep.subr.mxu0 0.0
    %2186 = vmatpush1.msra.mxu0 %v271
    %2187 = vmatprep.subr.mxu0 0.0
    %2188 = vmatpush1.msra.mxu0 %v272
    %2189 = vmatprep.subr.mxu0 0.0
    %2190 = vmatpush1.msra.mxu0 %v273
    %2191 = vmatprep.subr.mxu0 0.0
    %2192 = vmatpush1.msra.mxu0 %v274
    %2193 = vmatprep.subr.mxu0 0.0
    %2194 = vmatpush1.msra.mxu0 %v275
    %2195 = vmatprep.subr.mxu0 0.0
    %2196 = vmatpush1.msra.mxu0 %v276
    %2197 = vmatprep.subr.mxu0 0.0
    %2198 = vmatpush1.msra.mxu0 %v277
    %2199 = vmatprep.subr.mxu0 0.0
    %2200 = vmatpush1.msra.mxu0 %v278
    %2201 = vmatprep.subr.mxu0 0.0
    %2202 = vmatpush1.msra.mxu0 %v279
    %2203 = vmatprep.subr.mxu0 0.0
    %2204 = vmatpush1.msra.mxu0 0.0
    %2205 = vmatprep.subr.mxu0 0.0
    %2206 = vmatpush1.msra.mxu0 0.0
    %2207 = vmatprep.subr.mxu0 0.0
    %2208 = vmatpush1.msra.mxu0 0.0
    %2209 = vmatprep.subr.mxu0 0.0
    %2210 = vmatpush1.msra.mxu0 0.0
    %2211 = vmatprep.subr.mxu0 0.0
    %2212 = vmatpush1.msra.mxu0 0.0
    %2213 = vmatprep.subr.mxu0 0.0
    %2214 = vmatpush1.msra.mxu0 0.0
    %2215 = vmatprep.subr.mxu0 0.0
    %2216 = vmatpush1.msra.mxu0 0.0
    %2217 = vmatprep.subr.mxu0 0.0
    %2218 = vmatpush1.msra.mxu0 0.0
    %2219 = vmatprep.subr.mxu0 0.0
    %2220 = vmatpush1.msra.mxu0 0.0
    %2221 = vmatprep.subr.mxu0 0.0
    %2222 = vmatpush1.msra.mxu0 0.0
    %2223 = vmatprep.subr.mxu0 0.0
    %2224 = vmatpush1.msra.mxu0 0.0
    %2225 = vmatprep.subr.mxu0 0.0
    %2226 = vmatpush1.msra.mxu0 0.0
    %2227 = vmatprep.subr.mxu0 0.0
    %2228 = vmatpush1.msra.mxu0 0.0
    %2229 = vmatprep.subr.mxu0 0.0
    %2230 = vmatpush1.msra.mxu0 0.0
    %2231 = vmatprep.subr.mxu0 0.0
    %2232 = vmatpush1.msra.mxu0 0.0
    %2233 = vmatprep.subr.mxu0 0.0
    %2234 = vmatpush1.msra.mxu0 0.0
    %2235 = vmatprep.mubr.f32.mxu0 0.0
    %2236 = vmatmul.mubr.f32.gmra.mrb[0].mxu0 %v2165
    %v2237 = vpop.f32.mrb[0].mxu0
    %v2238 = vadd.f32 %v2170, %v2237
    %v2239 = vpop.f32.mrb[0].mxu0
    %2240 = vmatprep.mubr.f32.mxu0 0.0
    %2241 = vmatmul.mubr.f32.gmra.mrb[0].mxu0 %v2166
    %v2242 = vpop.f32.mrb[0].mxu0
    %v2243 = vadd.f32 %v2170, %v2242
    %v2244 = vpop.f32.mrb[0].mxu0
    %2245 = vdwg.mxu0
    %v2246 = vadd.f32 %v166, %v2238
    %v2247 = vadd.f32 %v167, %v2243
    %2248 = vadd.xlane.f32.xlu0 %v2246
    %v2249 = vpop.xlane.xlu0 %2248
    %2250 = vadd.xlane.f32.xlu0 %v2247
    %v2251 = vpop.xlane.xlu0 %2250
    %v2252 = vmul.f32 %v2249, %v123
    %v2253 = vmul.f32 %v2251, %v123
    %v2254 = vsub.f32 %v2246, %v2252
    %v2255 = vsub.f32 %v2247, %v2253
    %v2256 = vmul.f32 %v2254, %v2254
    %v2257 = vmul.f32 %v2255, %v2255
    %2258 = vadd.xlane.f32.xlu0 %v2256
    %v2259 = vpop.xlane.xlu0 %2258
    %2260 = vadd.xlane.f32.xlu0 %v2257
    %v2261 = vpop.xlane.xlu0 %2260
    %v2262 = vmul.f32 %v2259, 0.007874016
    %v2263 = vmul.f32 %v2261, 0.007874016
    %v2264 = vrsqrt.pop %v2262
    %v2265 = vmul.f32 %v2262, %v2264
    %vm2266 = vcmp.eq.f32.partialorder %v2262, inf
    %v2267 = vsel %vm2266, %v2262, %v2265
    %vm2268 = vcmp.eq.f32.partialorder %v2262, 0.0
    %v2269 = vand.u32 %v2262, 2147483648
    %v2270 = vsel %vm2268, %v2269, %v2267
    %v2271 = vrsqrt.pop %v2263
    %v2272 = vmul.f32 %v2263, %v2271
    %vm2273 = vcmp.eq.f32.partialorder %v2263, inf
    %v2274 = vsel %vm2273, %v2263, %v2272
    %vm2275 = vcmp.eq.f32.partialorder %v2263, 0.0
    %v2276 = vand.u32 %v2263, 2147483648
    %v2277 = vsel %vm2275, %v2276, %v2274
    %v2278 = vlaneseq
    %v2279 = vshrl.u32 %v2278, 7
    %v2280 = vsub.s32 2, %v2279
    %v2281 = vrot.slane %v88, %v2280
    %v2282 = vmul.f32 %v2281, %v2254
    %v2283 = vmul.f32 %v2281, %v2255
    %v2284 = vadd.f32 %v2270, 1e-06
    %v2285 = vadd.f32 %v2277, 1e-06
    %v2286 = vrcp.pop %v2284
    %v2287 = vmul.f32 %v2282, %v2286
    %v2288 = vrcp.pop %v2285
    %v2289 = vmul.f32 %v2283, %v2288
    %v2290 = vlaneseq
    %v2291 = vshrl.u32 %v2290, 7
    %v2292 = vsub.s32 2, %v2291
    %v2293 = vrot.slane %v89, %v2292
    %v2294 = vadd.f32 %v2287, %v2293
    %v2295 = vadd.f32 %v2289, %v2293
    %v2296 = vld [vmem:[#allocation7] sm:$0xff]
    %v2297 = vld [vmem:[#allocation7 + $0x8] sm:$0xff]
    %v2298 = vld [vmem:[#allocation7 + $0x10] sm:$0xff]
    %v2299 = vld [vmem:[#allocation7 + $0x18] sm:$0xff]
    %v2300 = vld [vmem:[#allocation7 + $0x20] sm:$0xff]
    %v2301 = vld [vmem:[#allocation7 + $0x28] sm:$0xff]
    %v2302 = vld [vmem:[#allocation7 + $0x30] sm:$0xff]
    %v2303 = vld [vmem:[#allocation7 + $0x38] sm:$0xff]
    %v2304 = vld [vmem:[#allocation7 + $0x40] sm:$0xff]
    %v2305 = vld [vmem:[#allocation7 + $0x48] sm:$0xff]
    %v2306 = vld [vmem:[#allocation7 + $0x50] sm:$0xff]
    %v2307 = vld [vmem:[#allocation7 + $0x58] sm:$0xff]
    %v2308 = vld [vmem:[#allocation7 + $0x60] sm:$0xff]
    %v2309 = vld [vmem:[#allocation7 + $0x68] sm:$0xff]
    %v2310 = vld [vmem:[#allocation7 + $0x70] sm:$0xff]
    %v2311 = vld [vmem:[#allocation7 + $0x78] sm:$0xff]
    %v2312 = vld [vmem:[#allocation7 + $0x80] sm:$0xff]
    %v2313 = vld [vmem:[#allocation7 + $0x88] sm:$0xff]
    %v2314 = vld [vmem:[#allocation7 + $0x90] sm:$0xff]
    %v2315 = vld [vmem:[#allocation7 + $0x98] sm:$0xff]
    %v2316 = vld [vmem:[#allocation7 + $0xa0] sm:$0xff]
    %v2317 = vld [vmem:[#allocation7 + $0xa8] sm:$0xff]
    %v2318 = vld [vmem:[#allocation7 + $0xb0] sm:$0xff]
    %v2319 = vld [vmem:[#allocation7 + $0xb8] sm:$0xff]
    %v2320 = vld [vmem:[#allocation7 + $0xc0] sm:$0xff]
    %v2321 = vld [vmem:[#allocation7 + $0xc8] sm:$0xff]
    %v2322 = vld [vmem:[#allocation7 + $0xd0] sm:$0xff]
    %v2323 = vld [vmem:[#allocation7 + $0xd8] sm:$0xff]
    %v2324 = vld [vmem:[#allocation7 + $0xe0] sm:$0xff]
    %v2325 = vld [vmem:[#allocation7 + $0xe8] sm:$0xff]
    %v2326 = vld [vmem:[#allocation7 + $0xf0] sm:$0xff]
    %v2327 = vld [vmem:[#allocation7 + $0xf8] sm:$0xff]
    %v2328 = vld [vmem:[%s6] sm:$0x3]
    %v2330 = vlaneseq
    %v2331 = vshrl.u32 %v2330, 7
    %v2332 = vsub.s32 0, %v2331
    %v2333 = vrot.slane %v2328, %v2332
    %v2334 = vlaneseq
    %v2335 = vshrl.u32 %v2334, 7
    %v2336 = vsub.s32 1, %v2335
    %v2337 = vrot.slane %v2328, %v2336
    %2340 = vmatprep.subr.mxu0 %v2297
    %2341 = vmatpush1.msra.mxu0 %v2296
    %2342 = vmatprep.subr.mxu0 %v2299
    %2343 = vmatpush1.msra.mxu0 %v2298
    %2344 = vmatprep.subr.mxu0 %v2301
    %2345 = vmatpush1.msra.mxu0 %v2300
    %2346 = vmatprep.subr.mxu0 %v2303
    %2347 = vmatpush1.msra.mxu0 %v2302
    %2348 = vmatprep.subr.mxu0 %v2305
    %2349 = vmatpush1.msra.mxu0 %v2304
    %2350 = vmatprep.subr.mxu0 %v2307
    %2351 = vmatpush1.msra.mxu0 %v2306
    %2352 = vmatprep.subr.mxu0 %v2309
    %2353 = vmatpush1.msra.mxu0 %v2308
    %2354 = vmatprep.subr.mxu0 %v2311
    %2355 = vmatpush1.msra.mxu0 %v2310
    %2356 = vmatprep.subr.mxu0 %v2313
    %2357 = vmatpush1.msra.mxu0 %v2312
    %2358 = vmatprep.subr.mxu0 %v2315
    %2359 = vmatpush1.msra.mxu0 %v2314
    %2360 = vmatprep.subr.mxu0 %v2317
    %2361 = vmatpush1.msra.mxu0 %v2316
    %2362 = vmatprep.subr.mxu0 %v2319
    %2363 = vmatpush1.msra.mxu0 %v2318
    %2364 = vmatprep.subr.mxu0 %v2321
    %2365 = vmatpush1.msra.mxu0 %v2320
    %2366 = vmatprep.subr.mxu0 %v2323
    %2367 = vmatpush1.msra.mxu0 %v2322
    %2368 = vmatprep.subr.mxu0 %v2325
    %2369 = vmatpush1.msra.mxu0 %v2324
    %2370 = vmatprep.subr.mxu0 %v2327
    %2371 = vmatpush1.msra.mxu0 %v2326
    %2372 = vmatprep.subr.mxu0 0.0
    %2373 = vmatpush1.msra.mxu0 0.0
    %2374 = vmatprep.subr.mxu0 0.0
    %2375 = vmatpush1.msra.mxu0 0.0
    %2376 = vmatprep.subr.mxu0 0.0
    %2377 = vmatpush1.msra.mxu0 0.0
    %2378 = vmatprep.subr.mxu0 0.0
    %2379 = vmatpush1.msra.mxu0 0.0
    %2380 = vmatprep.subr.mxu0 0.0
    %2381 = vmatpush1.msra.mxu0 0.0
    %2382 = vmatprep.subr.mxu0 0.0
    %2383 = vmatpush1.msra.mxu0 0.0
    %2384 = vmatprep.subr.mxu0 0.0
    %2385 = vmatpush1.msra.mxu0 0.0
    %2386 = vmatprep.subr.mxu0 0.0
    %2387 = vmatpush1.msra.mxu0 0.0
    %2388 = vmatprep.subr.mxu0 0.0
    %2389 = vmatpush1.msra.mxu0 0.0
    %2390 = vmatprep.subr.mxu0 0.0
    %2391 = vmatpush1.msra.mxu0 0.0
    %2392 = vmatprep.subr.mxu0 0.0
    %2393 = vmatpush1.msra.mxu0 0.0
    %2394 = vmatprep.subr.mxu0 0.0
    %2395 = vmatpush1.msra.mxu0 0.0
    %2396 = vmatprep.subr.mxu0 0.0
    %2397 = vmatpush1.msra.mxu0 0.0
    %2398 = vmatprep.subr.mxu0 0.0
    %2399 = vmatpush1.msra.mxu0 0.0
    %2400 = vmatprep.subr.mxu0 0.0
    %2401 = vmatpush1.msra.mxu0 0.0
    %2402 = vmatprep.subr.mxu0 0.0
    %2403 = vmatpush1.msra.mxu0 0.0
    %2404 = vmatprep.mubr.f32.mxu0 0.0
    %2405 = vmatmul.mubr.f32.gmra.mrb[0].mxu0 %v2294
    %v2406 = vpop.f32.mrb[0].mxu0
    %v2407 = vadd.f32 %v2333, %v2406
    %v2408 = vpop.f32.mrb[0].mxu0
    %v2409 = vadd.f32 %v2337, %v2408
    %2410 = vmatprep.mubr.f32.mxu0 0.0
    %2411 = vmatmul.mubr.f32.gmra.mrb[0].mxu0 %v2295
    %v2412 = vpop.f32.mrb[0].mxu0
    %v2413 = vadd.f32 %v2333, %v2412
    %v2414 = vpop.f32.mrb[0].mxu0
    %v2415 = vadd.f32 %v2337, %v2414
    %2416 = vdwg.mxu0
    %v2417 = vmax.f32 %v2407, 0.0
    %v2418 = vmax.f32 %v2409, 0.0
    %v2419 = vmax.f32 %v2413, 0.0
    %v2420 = vmax.f32 %v2415, 0.0
    %v2421 = vld [vmem:[#allocation8] sm:$0xff]
    %v2422 = vld [vmem:[#allocation8 + $0x8] sm:$0xff]
    %v2423 = vld [vmem:[#allocation8 + $0x10] sm:$0xff]
    %v2424 = vld [vmem:[#allocation8 + $0x18] sm:$0xff]
    %v2425 = vld [vmem:[#allocation8 + $0x20] sm:$0xff]
    %v2426 = vld [vmem:[#allocation8 + $0x28] sm:$0xff]
    %v2427 = vld [vmem:[#allocation8 + $0x30] sm:$0xff]
    %v2428 = vld [vmem:[#allocation8 + $0x38] sm:$0xff]
    %v2429 = vld [vmem:[#allocation8 + $0x40] sm:$0xff]
    %v2430 = vld [vmem:[#allocation8 + $0x48] sm:$0xff]
    %v2431 = vld [vmem:[#allocation8 + $0x50] sm:$0xff]
    %v2432 = vld [vmem:[#allocation8 + $0x58] sm:$0xff]
    %v2433 = vld [vmem:[#allocation8 + $0x60] sm:$0xff]
    %v2434 = vld [vmem:[#allocation8 + $0x68] sm:$0xff]
    %v2435 = vld [vmem:[#allocation8 + $0x70] sm:$0xff]
    %v2436 = vld [vmem:[#allocation8 + $0x78] sm:$0xff]
    %v2437 = vld [vmem:[#allocation8 + $0x80] sm:$0xff]
    %v2438 = vld [vmem:[#allocation8 + $0x88] sm:$0xff]
    %v2439 = vld [vmem:[#allocation8 + $0x90] sm:$0xff]
    %v2440 = vld [vmem:[#allocation8 + $0x98] sm:$0xff]
    %v2441 = vld [vmem:[#allocation8 + $0xa0] sm:$0xff]
    %v2442 = vld [vmem:[#allocation8 + $0xa8] sm:$0xff]
    %v2443 = vld [vmem:[#allocation8 + $0xb0] sm:$0xff]
    %v2444 = vld [vmem:[#allocation8 + $0xb8] sm:$0xff]
    %v2445 = vld [vmem:[#allocation8 + $0xc0] sm:$0xff]
    %v2446 = vld [vmem:[#allocation8 + $0xc8] sm:$0xff]
    %v2447 = vld [vmem:[#allocation8 + $0xd0] sm:$0xff]
    %v2448 = vld [vmem:[#allocation8 + $0xd8] sm:$0xff]
    %v2449 = vld [vmem:[#allocation8 + $0xe0] sm:$0xff]
    %v2450 = vld [vmem:[#allocation8 + $0xe8] sm:$0xff]
    %v2451 = vld [vmem:[#allocation8 + $0xf0] sm:$0xff]
    %v2452 = vld [vmem:[#allocation8 + $0xf8] sm:$0xff]
    %v2453 = vld [vmem:[%s8] sm:$0x1]
    %v2455 = vlaneseq
    %v2456 = vshrl.u32 %v2455, 7
    %v2457 = vsub.s32 0, %v2456
    %v2458 = vrot.slane %v2453, %v2457
    %2460 = vmatprep.subr.mxu0 0.0
    %2461 = vmatpush1.msra.mxu0 %v2421
    %2462 = vmatprep.subr.mxu0 0.0
    %2463 = vmatpush1.msra.mxu0 %v2422
    %2464 = vmatprep.subr.mxu0 0.0
    %2465 = vmatpush1.msra.mxu0 %v2423
    %2466 = vmatprep.subr.mxu0 0.0
    %2467 = vmatpush1.msra.mxu0 %v2424
    %2468 = vmatprep.subr.mxu0 0.0
    %2469 = vmatpush1.msra.mxu0 %v2425
    %2470 = vmatprep.subr.mxu0 0.0
    %2471 = vmatpush1.msra.mxu0 %v2426
    %2472 = vmatprep.subr.mxu0 0.0
    %2473 = vmatpush1.msra.mxu0 %v2427
    %2474 = vmatprep.subr.mxu0 0.0
    %2475 = vmatpush1.msra.mxu0 %v2428
    %2476 = vmatprep.subr.mxu0 0.0
    %2477 = vmatpush1.msra.mxu0 %v2429
    %2478 = vmatprep.subr.mxu0 0.0
    %2479 = vmatpush1.msra.mxu0 %v2430
    %2480 = vmatprep.subr.mxu0 0.0
    %2481 = vmatpush1.msra.mxu0 %v2431
    %2482 = vmatprep.subr.mxu0 0.0
    %2483 = vmatpush1.msra.mxu0 %v2432
    %2484 = vmatprep.subr.mxu0 0.0
    %2485 = vmatpush1.msra.mxu0 %v2433
    %2486 = vmatprep.subr.mxu0 0.0
    %2487 = vmatpush1.msra.mxu0 %v2434
    %2488 = vmatprep.subr.mxu0 0.0
    %2489 = vmatpush1.msra.mxu0 %v2435
    %2490 = vmatprep.subr.mxu0 0.0
    %2491 = vmatpush1.msra.mxu0 %v2436
    %2492 = vmatprep.subr.mxu0 0.0
    %2493 = vmatpush1.msra.mxu0 %v2437
    %2494 = vmatprep.subr.mxu0 0.0
    %2495 = vmatpush1.msra.mxu0 %v2438
    %2496 = vmatprep.subr.mxu0 0.0
    %2497 = vmatpush1.msra.mxu0 %v2439
    %2498 = vmatprep.subr.mxu0 0.0
    %2499 = vmatpush1.msra.mxu0 %v2440
    %2500 = vmatprep.subr.mxu0 0.0
    %2501 = vmatpush1.msra.mxu0 %v2441
    %2502 = vmatprep.subr.mxu0 0.0
    %2503 = vmatpush1.msra.mxu0 %v2442
    %2504 = vmatprep.subr.mxu0 0.0
    %2505 = vmatpush1.msra.mxu0 %v2443
    %2506 = vmatprep.subr.mxu0 0.0
    %2507 = vmatpush1.msra.mxu0 %v2444
    %2508 = vmatprep.subr.mxu0 0.0
    %2509 = vmatpush1.msra.mxu0 %v2445
    %2510 = vmatprep.subr.mxu0 0.0
    %2511 = vmatpush1.msra.mxu0 %v2446
    %2512 = vmatprep.subr.mxu0 0.0
    %2513 = vmatpush1.msra.mxu0 %v2447
    %2514 = vmatprep.subr.mxu0 0.0
    %2515 = vmatpush1.msra.mxu0 %v2448
    %2516 = vmatprep.subr.mxu0 0.0
    %2517 = vmatpush1.msra.mxu0 %v2449
    %2518 = vmatprep.subr.mxu0 0.0
    %2519 = vmatpush1.msra.mxu0 %v2450
    %2520 = vmatprep.subr.mxu0 0.0
    %2521 = vmatpush1.msra.mxu0 %v2451
    %2522 = vmatprep.subr.mxu0 0.0
    %2523 = vmatpush1.msra.mxu0 %v2452
    %2524 = vmatprep.mubr.f32.mxu0 %v2418
    %2525 = vmatmul.mubr.f32.gmra.mrb[0].mxu0 %v2417
    %v2526 = vpop.f32.mrb[0].mxu0
    %v2527 = vadd.f32 %v2458, %v2526
    %v2528 = vpop.f32.mrb[0].mxu0
    %2529 = vmatprep.mubr.f32.mxu0 %v2420
    %2530 = vmatmul.mubr.f32.gmra.mrb[0].mxu0 %v2419
    %v2531 = vpop.f32.mrb[0].mxu0
    %v2532 = vadd.f32 %v2458, %v2531
    %v2533 = vpop.f32.mrb[0].mxu0
    %2534 = vdwg.mxu0
    %v2535 = vadd.f32 %v2246, %v2527
    %v2536 = vadd.f32 %v2247, %v2532
    %s2537 = scalar_lea.vmem [#allocation5], 896
    %v2538 = vld [vmem:[%s2537] sm:$0xff]
    %v2539 = vld [vmem:[%s2537 + $0x8] sm:$0xff]
    %v2540 = vld [vmem:[%s2537 + $0x10] sm:$0xff]
    %v2541 = vld [vmem:[%s2537 + $0x18] sm:$0xff]
    %v2542 = vld [vmem:[%s2537 + $0x20] sm:$0xff]
    %v2543 = vld [vmem:[%s2537 + $0x28] sm:$0xff]
    %v2544 = vld [vmem:[%s2537 + $0x30] sm:$0xff]
    %v2545 = vld [vmem:[%s2537 + $0x38] sm:$0xff]
    %v2546 = vld [vmem:[%s2537 + $0x40] sm:$0xff]
    %v2547 = vld [vmem:[%s2537 + $0x48] sm:$0xff]
    %v2548 = vld [vmem:[%s2537 + $0x50] sm:$0xff]
    %v2549 = vld [vmem:[%s2537 + $0x58] sm:$0xff]
    %v2550 = vld [vmem:[%s2537 + $0x60] sm:$0xff]
    %v2551 = vld [vmem:[%s2537 + $0x68] sm:$0xff]
    %v2552 = vld [vmem:[%s2537 + $0x70] sm:$0xff]
    %v2553 = vld [vmem:[%s2537 + $0x78] sm:$0xff]
    %v2554 = vld [vmem:[%s2537 + $0x80] sm:$0xff]
    %v2555 = vld [vmem:[%s2537 + $0x88] sm:$0xff]
    %v2556 = vld [vmem:[%s2537 + $0x90] sm:$0xff]
    %v2557 = vld [vmem:[%s2537 + $0x98] sm:$0xff]
    %v2558 = vld [vmem:[%s2537 + $0xa0] sm:$0xff]
    %v2559 = vld [vmem:[%s2537 + $0xa8] sm:$0xff]
    %v2560 = vld [vmem:[%s2537 + $0xb0] sm:$0xff]
    %v2561 = vld [vmem:[%s2537 + $0xb8] sm:$0xff]
    %v2562 = vld [vmem:[%s2537 + $0xc0] sm:$0xff]
    %v2563 = vld [vmem:[%s2537 + $0xc8] sm:$0xff]
    %v2564 = vld [vmem:[%s2537 + $0xd0] sm:$0xff]
    %v2565 = vld [vmem:[%s2537 + $0xd8] sm:$0xff]
    %v2566 = vld [vmem:[%s2537 + $0xe0] sm:$0xff]
    %v2567 = vld [vmem:[%s2537 + $0xe8] sm:$0xff]
    %v2568 = vld [vmem:[%s2537 + $0xf0] sm:$0xff]
    %v2569 = vld [vmem:[%s2537 + $0xf8] sm:$0xff]
    %v2570 = vld [vmem:[%s2537 + $0x100] sm:$0xff]
    %v2571 = vld [vmem:[%s2537 + $0x108] sm:$0xff]
    %v2572 = vld [vmem:[%s2537 + $0x110] sm:$0xff]
    %v2573 = vld [vmem:[%s2537 + $0x118] sm:$0xff]
    %v2574 = vld [vmem:[%s2537 + $0x120] sm:$0xff]
    %v2575 = vld [vmem:[%s2537 + $0x128] sm:$0xff]
    %v2576 = vld [vmem:[%s2537 + $0x130] sm:$0xff]
    %v2577 = vld [vmem:[%s2537 + $0x138] sm:$0xff]
    %v2578 = vld [vmem:[%s2537 + $0x140] sm:$0xff]
    %v2579 = vld [vmem:[%s2537 + $0x148] sm:$0xff]
    %v2580 = vld [vmem:[%s2537 + $0x150] sm:$0xff]
    %v2581 = vld [vmem:[%s2537 + $0x158] sm:$0xff]
    %v2582 = vld [vmem:[%s2537 + $0x160] sm:$0xff]
    %v2583 = vld [vmem:[%s2537 + $0x168] sm:$0xff]
    %v2584 = vld [vmem:[%s2537 + $0x170] sm:$0xff]
    %v2585 = vld [vmem:[%s2537 + $0x178] sm:$0xff]
    %v2586 = vld [vmem:[%s2537 + $0x180] sm:$0xff]
    %v2587 = vld [vmem:[%s2537 + $0x188] sm:$0xff]
    %v2588 = vld [vmem:[%s2537 + $0x190] sm:$0xff]
    %v2589 = vld [vmem:[%s2537 + $0x198] sm:$0xff]
    %v2590 = vld [vmem:[%s2537 + $0x1a0] sm:$0xff]
    %v2591 = vld [vmem:[%s2537 + $0x1a8] sm:$0xff]
    %v2592 = vld [vmem:[%s2537 + $0x1b0] sm:$0xff]
    %v2593 = vld [vmem:[%s2537 + $0x1b8] sm:$0xff]
    %v2594 = vld [vmem:[%s2537 + $0x1c0] sm:$0xff]
    %v2595 = vld [vmem:[%s2537 + $0x1c8] sm:$0xff]
    %v2596 = vld [vmem:[%s2537 + $0x1d0] sm:$0xff]
    %v2597 = vld [vmem:[%s2537 + $0x1d8] sm:$0xff]
    %v2598 = vld [vmem:[%s2537 + $0x1e0] sm:$0xff]
    %v2599 = vld [vmem:[%s2537 + $0x1e8] sm:$0xff]
    %v2600 = vld [vmem:[%s2537 + $0x1f0] sm:$0xff]
    %v2601 = vld [vmem:[%s2537 + $0x1f8] sm:$0xff]
    %v2602 = vld [vmem:[%s2537 + $0x200] sm:$0xff]
    %v2603 = vld [vmem:[%s2537 + $0x208] sm:$0xff]
    %v2604 = vld [vmem:[%s2537 + $0x210] sm:$0xff]
    %v2605 = vld [vmem:[%s2537 + $0x218] sm:$0xff]
    %v2606 = vld [vmem:[%s2537 + $0x220] sm:$0xff]
    %v2607 = vld [vmem:[%s2537 + $0x228] sm:$0xff]
    %v2608 = vld [vmem:[%s2537 + $0x230] sm:$0xff]
    %v2609 = vld [vmem:[%s2537 + $0x238] sm:$0xff]
    %v2610 = vld [vmem:[%s2537 + $0x240] sm:$0xff]
    %v2611 = vld [vmem:[%s2537 + $0x248] sm:$0xff]
    %v2612 = vld [vmem:[%s2537 + $0x250] sm:$0xff]
    %v2613 = vld [vmem:[%s2537 + $0x258] sm:$0xff]
    %v2614 = vld [vmem:[%s2537 + $0x260] sm:$0xff]
    %v2615 = vld [vmem:[%s2537 + $0x268] sm:$0xff]
    %v2616 = vld [vmem:[%s2537 + $0x270] sm:$0xff]
    %v2617 = vld [vmem:[%s2537 + $0x278] sm:$0xff]
    %v2618 = vld [vmem:[%s2537 + $0x280] sm:$0xff]
    %v2619 = vld [vmem:[%s2537 + $0x288] sm:$0xff]
    %v2620 = vld [vmem:[%s2537 + $0x290] sm:$0xff]
    %v2621 = vld [vmem:[%s2537 + $0x298] sm:$0xff]
    %v2622 = vld [vmem:[%s2537 + $0x2a0] sm:$0xff]
    %v2623 = vld [vmem:[%s2537 + $0x2a8] sm:$0xff]
    %v2624 = vld [vmem:[%s2537 + $0x2b0] sm:$0xff]
    %v2625 = vld [vmem:[%s2537 + $0x2b8] sm:$0xff]
    %v2626 = vld [vmem:[%s2537 + $0x2c0] sm:$0xff]
    %v2627 = vld [vmem:[%s2537 + $0x2c8] sm:$0xff]
    %v2628 = vld [vmem:[%s2537 + $0x2d0] sm:$0xff]
    %v2629 = vld [vmem:[%s2537 + $0x2d8] sm:$0xff]
    %v2630 = vld [vmem:[%s2537 + $0x2e0] sm:$0xff]
    %v2631 = vld [vmem:[%s2537 + $0x2e8] sm:$0xff]
    %v2632 = vld [vmem:[%s2537 + $0x2f0] sm:$0xff]
    %v2633 = vld [vmem:[%s2537 + $0x2f8] sm:$0xff]
    %v2634 = vld [vmem:[%s2537 + $0x300] sm:$0xff]
    %v2635 = vld [vmem:[%s2537 + $0x308] sm:$0xff]
    %v2636 = vld [vmem:[%s2537 + $0x310] sm:$0xff]
    %v2637 = vld [vmem:[%s2537 + $0x318] sm:$0xff]
    %v2638 = vld [vmem:[%s2537 + $0x320] sm:$0xff]
    %v2639 = vld [vmem:[%s2537 + $0x328] sm:$0xff]
    %v2640 = vld [vmem:[%s2537 + $0x330] sm:$0xff]
    %v2641 = vld [vmem:[%s2537 + $0x338] sm:$0xff]
    %v2642 = vld [vmem:[%s2537 + $0x340] sm:$0xff]
    %v2643 = vld [vmem:[%s2537 + $0x348] sm:$0xff]
    %v2644 = vld [vmem:[%s2537 + $0x350] sm:$0xff]
    %v2645 = vld [vmem:[%s2537 + $0x358] sm:$0xff]
    %v2646 = vld [vmem:[%s2537 + $0x360] sm:$0xff]
    %v2647 = vld [vmem:[%s2537 + $0x368] sm:$0xff]
    %v2648 = vld [vmem:[%s2537 + $0x370] sm:$0xff]
    %v2649 = vld [vmem:[%s2537 + $0x378] sm:$0xff]
    %s2650 = scalar_lea.vmem %s4, 8
    %v2651 = vld [vmem:[%s2650] sm:$0x7f]
    %2652 = vadd.xlane.f32.xlu0 %v2535
    %v2653 = vpop.xlane.xlu0 %2652
    %2654 = vadd.xlane.f32.xlu0 %v2536
    %v2655 = vpop.xlane.xlu0 %2654
    %v2656 = vmul.f32 %v2653, %v123
    %v2657 = vmul.f32 %v2655, %v123
    %v2658 = vsub.f32 %v2535, %v2656
    %v2659 = vsub.f32 %v2536, %v2657
    %v2660 = vmul.f32 %v2658, %v2658
    %v2661 = vmul.f32 %v2659, %v2659
    %2662 = vadd.xlane.f32.xlu0 %v2660
    %v2663 = vpop.xlane.xlu0 %2662
    %2664 = vadd.xlane.f32.xlu0 %v2661
    %v2665 = vpop.xlane.xlu0 %2664
    %v2666 = vmul.f32 %v2663, 0.007874016
    %v2667 = vmul.f32 %v2665, 0.007874016
    %v2668 = vrsqrt.pop %v2666
    %v2669 = vmul.f32 %v2666, %v2668
    %vm2670 = vcmp.eq.f32.partialorder %v2666, inf
    %v2671 = vsel %vm2670, %v2666, %v2669
    %vm2672 = vcmp.eq.f32.partialorder %v2666, 0.0
    %v2673 = vand.u32 %v2666, 2147483648
    %v2674 = vsel %vm2672, %v2673, %v2671
    %v2675 = vrsqrt.pop %v2667
    %v2676 = vmul.f32 %v2667, %v2675
    %vm2677 = vcmp.eq.f32.partialorder %v2667, inf
    %v2678 = vsel %vm2677, %v2667, %v2676
    %vm2679 = vcmp.eq.f32.partialorder %v2667, 0.0
    %v2680 = vand.u32 %v2667, 2147483648
    %v2681 = vsel %vm2679, %v2680, %v2678
    %v2682 = vlaneseq
    %v2683 = vshrl.u32 %v2682, 7
    %v2684 = vsub.s32 3, %v2683
    %v2685 = vrot.slane %v88, %v2684
    %v2686 = vmul.f32 %v2685, %v2658
    %v2687 = vmul.f32 %v2685, %v2659
    %v2688 = vadd.f32 %v2674, 1e-06
    %v2689 = vadd.f32 %v2681, 1e-06
    %v2690 = vrcp.pop %v2688
    %v2691 = vmul.f32 %v2686, %v2690
    %v2692 = vrcp.pop %v2689
    %v2693 = vmul.f32 %v2687, %v2692
    %v2694 = vlaneseq
    %v2695 = vshrl.u32 %v2694, 7
    %v2696 = vsub.s32 3, %v2695
    %v2697 = vrot.slane %v89, %v2696
    %v2698 = vadd.f32 %v2691, %v2697
    %v2699 = vadd.f32 %v2693, %v2697
    %v2700 = vlaneseq
    %v2701 = vshrl.u32 %v2700, 7
    %v2702 = vsub.s32 0, %v2701
    %v2703 = vrot.slane %v2651, %v2702
    %2704 = vmatprep.subr.mxu0 0.0
    %2705 = vmatpush1.msra.mxu0 %v2538
    %2706 = vmatprep.subr.mxu0 0.0
    %2707 = vmatpush1.msra.mxu0 %v2539
    %2708 = vmatprep.subr.mxu0 0.0
    %2709 = vmatpush1.msra.mxu0 %v2540
    %2710 = vmatprep.subr.mxu0 0.0
    %2711 = vmatpush1.msra.mxu0 %v2541
    %2712 = vmatprep.subr.mxu0 0.0
    %2713 = vmatpush1.msra.mxu0 %v2542
    %2714 = vmatprep.subr.mxu0 0.0
    %2715 = vmatpush1.msra.mxu0 %v2543
    %2716 = vmatprep.subr.mxu0 0.0
    %2717 = vmatpush1.msra.mxu0 %v2544
    %2718 = vmatprep.subr.mxu0 0.0
    %2719 = vmatpush1.msra.mxu0 %v2545
    %2720 = vmatprep.subr.mxu0 0.0
    %2721 = vmatpush1.msra.mxu0 %v2546
    %2722 = vmatprep.subr.mxu0 0.0
    %2723 = vmatpush1.msra.mxu0 %v2547
    %2724 = vmatprep.subr.mxu0 0.0
    %2725 = vmatpush1.msra.mxu0 %v2548
    %2726 = vmatprep.subr.mxu0 0.0
    %2727 = vmatpush1.msra.mxu0 %v2549
    %2728 = vmatprep.subr.mxu0 0.0
    %2729 = vmatpush1.msra.mxu0 %v2550
    %2730 = vmatprep.subr.mxu0 0.0
    %2731 = vmatpush1.msra.mxu0 %v2551
    %2732 = vmatprep.subr.mxu0 0.0
    %2733 = vmatpush1.msra.mxu0 %v2552
    %2734 = vmatprep.subr.mxu0 0.0
    %2735 = vmatpush1.msra.mxu0 %v2553
    %2736 = vmatprep.subr.mxu0 0.0
    %2737 = vmatpush1.msra.mxu0 0.0
    %2738 = vmatprep.subr.mxu0 0.0
    %2739 = vmatpush1.msra.mxu0 0.0
    %2740 = vmatprep.subr.mxu0 0.0
    %2741 = vmatpush1.msra.mxu0 0.0
    %2742 = vmatprep.subr.mxu0 0.0
    %2743 = vmatpush1.msra.mxu0 0.0
    %2744 = vmatprep.subr.mxu0 0.0
    %2745 = vmatpush1.msra.mxu0 0.0
    %2746 = vmatprep.subr.mxu0 0.0
    %2747 = vmatpush1.msra.mxu0 0.0
    %2748 = vmatprep.subr.mxu0 0.0
    %2749 = vmatpush1.msra.mxu0 0.0
    %2750 = vmatprep.subr.mxu0 0.0
    %2751 = vmatpush1.msra.mxu0 0.0
    %2752 = vmatprep.subr.mxu0 0.0
    %2753 = vmatpush1.msra.mxu0 0.0
    %2754 = vmatprep.subr.mxu0 0.0
    %2755 = vmatpush1.msra.mxu0 0.0
    %2756 = vmatprep.subr.mxu0 0.0
    %2757 = vmatpush1.msra.mxu0 0.0
    %2758 = vmatprep.subr.mxu0 0.0
    %2759 = vmatpush1.msra.mxu0 0.0
    %2760 = vmatprep.subr.mxu0 0.0
    %2761 = vmatpush1.msra.mxu0 0.0
    %2762 = vmatprep.subr.mxu0 0.0
    %2763 = vmatpush1.msra.mxu0 0.0
    %2764 = vmatprep.subr.mxu0 0.0
    %2765 = vmatpush1.msra.mxu0 0.0
    %2766 = vmatprep.subr.mxu0 0.0
    %2767 = vmatpush1.msra.mxu0 0.0
    %2768 = vmatprep.mubr.f32.mxu0 0.0
    %2769 = vmatmul.mubr.f32.gmra.mrb[0].mxu0 %v2698
    %v2770 = vpop.f32.mrb[0].mxu0
    %v2771 = vadd.f32 %v2703, %v2770
    %v2772 = vpop.f32.mrb[0].mxu0
    %2773 = vmatprep.mubr.f32.mxu0 0.0
    %2774 = vmatmul.mubr.f32.gmra.mrb[0].mxu0 %v2699
    %v2775 = vpop.f32.mrb[0].mxu0
    %v2776 = vadd.f32 %v2703, %v2775
    %v2777 = vpop.f32.mrb[0].mxu0
    %2778 = vdwg.mxu0
    %v2779 = vlaneseq
    %v2780 = vshrl.u32 %v2779, 7
    %v2781 = vsub.s32 3, %v2780
    %v2782 = vrot.slane %v2651, %v2781
    %2783 = vmatprep.subr.mxu0 0.0
    %2784 = vmatpush1.msra.mxu0 %v2586
    %2785 = vmatprep.subr.mxu0 0.0
    %2786 = vmatpush1.msra.mxu0 %v2587
    %2787 = vmatprep.subr.mxu0 0.0
    %2788 = vmatpush1.msra.mxu0 %v2588
    %2789 = vmatprep.subr.mxu0 0.0
    %2790 = vmatpush1.msra.mxu0 %v2589
    %2791 = vmatprep.subr.mxu0 0.0
    %2792 = vmatpush1.msra.mxu0 %v2590
    %2793 = vmatprep.subr.mxu0 0.0
    %2794 = vmatpush1.msra.mxu0 %v2591
    %2795 = vmatprep.subr.mxu0 0.0
    %2796 = vmatpush1.msra.mxu0 %v2592
    %2797 = vmatprep.subr.mxu0 0.0
    %2798 = vmatpush1.msra.mxu0 %v2593
    %2799 = vmatprep.subr.mxu0 0.0
    %2800 = vmatpush1.msra.mxu0 %v2594
    %2801 = vmatprep.subr.mxu0 0.0
    %2802 = vmatpush1.msra.mxu0 %v2595
    %2803 = vmatprep.subr.mxu0 0.0
    %2804 = vmatpush1.msra.mxu0 %v2596
    %2805 = vmatprep.subr.mxu0 0.0
    %2806 = vmatpush1.msra.mxu0 %v2597
    %2807 = vmatprep.subr.mxu0 0.0
    %2808 = vmatpush1.msra.mxu0 %v2598
    %2809 = vmatprep.subr.mxu0 0.0
    %2810 = vmatpush1.msra.mxu0 %v2599
    %2811 = vmatprep.subr.mxu0 0.0
    %2812 = vmatpush1.msra.mxu0 %v2600
    %2813 = vmatprep.subr.mxu0 0.0
    %2814 = vmatpush1.msra.mxu0 %v2601
    %2815 = vmatprep.subr.mxu0 0.0
    %2816 = vmatpush1.msra.mxu0 0.0
    %2817 = vmatprep.subr.mxu0 0.0
    %2818 = vmatpush1.msra.mxu0 0.0
    %2819 = vmatprep.subr.mxu0 0.0
    %2820 = vmatpush1.msra.mxu0 0.0
    %2821 = vmatprep.subr.mxu0 0.0
    %2822 = vmatpush1.msra.mxu0 0.0
    %2823 = vmatprep.subr.mxu0 0.0
    %2824 = vmatpush1.msra.mxu0 0.0
    %2825 = vmatprep.subr.mxu0 0.0
    %2826 = vmatpush1.msra.mxu0 0.0
    %2827 = vmatprep.subr.mxu0 0.0
    %2828 = vmatpush1.msra.mxu0 0.0
    %2829 = vmatprep.subr.mxu0 0.0
    %2830 = vmatpush1.msra.mxu0 0.0
    %2831 = vmatprep.subr.mxu0 0.0
    %2832 = vmatpush1.msra.mxu0 0.0
    %2833 = vmatprep.subr.mxu0 0.0
    %2834 = vmatpush1.msra.mxu0 0.0
    %2835 = vmatprep.subr.mxu0 0.0
    %2836 = vmatpush1.msra.mxu0 0.0
    %2837 = vmatprep.subr.mxu0 0.0
    %2838 = vmatpush1.msra.mxu0 0.0
    %2839 = vmatprep.subr.mxu0 0.0
    %2840 = vmatpush1.msra.mxu0 0.0
    %2841 = vmatprep.subr.mxu0 0.0
    %2842 = vmatpush1.msra.mxu0 0.0
    %2843 = vmatprep.subr.mxu0 0.0
    %2844 = vmatpush1.msra.mxu0 0.0
    %2845 = vmatprep.subr.mxu0 0.0
    %2846 = vmatpush1.msra.mxu0 0.0
    %2847 = vmatprep.mubr.f32.mxu0 0.0
    %2848 = vmatmul.mubr.f32.gmra.mrb[0].mxu0 %v2698
    %v2849 = vpop.f32.mrb[0].mxu0
    %v2850 = vadd.f32 %v2782, %v2849
    %v2851 = vpop.f32.mrb[0].mxu0
    %2852 = vmatprep.mubr.f32.mxu0 0.0
    %2853 = vmatmul.mubr.f32.gmra.mrb[0].mxu0 %v2699
    %v2854 = vpop.f32.mrb[0].mxu0
    %v2855 = vadd.f32 %v2782, %v2854
    %v2856 = vpop.f32.mrb[0].mxu0
    %2857 = vdwg.mxu0
    %v2858 = vsel %vm489, %v2771, %v2850
    %v2859 = vsel %vm490, %v2776, %v2855
    %v2860 = vlaneseq
    %v2861 = vshrl.u32 %v2860, 7
    %v2862 = vsub.s32 1, %v2861
    %v2863 = vrot.slane %v2651, %v2862
    %2864 = vmatprep.subr.mxu0 0.0
    %2865 = vmatpush1.msra.mxu0 %v2554
    %2866 = vmatprep.subr.mxu0 0.0
    %2867 = vmatpush1.msra.mxu0 %v2555
    %2868 = vmatprep.subr.mxu0 0.0
    %2869 = vmatpush1.msra.mxu0 %v2556
    %2870 = vmatprep.subr.mxu0 0.0
    %2871 = vmatpush1.msra.mxu0 %v2557
    %2872 = vmatprep.subr.mxu0 0.0
    %2873 = vmatpush1.msra.mxu0 %v2558
    %2874 = vmatprep.subr.mxu0 0.0
    %2875 = vmatpush1.msra.mxu0 %v2559
    %2876 = vmatprep.subr.mxu0 0.0
    %2877 = vmatpush1.msra.mxu0 %v2560
    %2878 = vmatprep.subr.mxu0 0.0
    %2879 = vmatpush1.msra.mxu0 %v2561
    %2880 = vmatprep.subr.mxu0 0.0
    %2881 = vmatpush1.msra.mxu0 %v2562
    %2882 = vmatprep.subr.mxu0 0.0
    %2883 = vmatpush1.msra.mxu0 %v2563
    %2884 = vmatprep.subr.mxu0 0.0
    %2885 = vmatpush1.msra.mxu0 %v2564
    %2886 = vmatprep.subr.mxu0 0.0
    %2887 = vmatpush1.msra.mxu0 %v2565
    %2888 = vmatprep.subr.mxu0 0.0
    %2889 = vmatpush1.msra.mxu0 %v2566
    %2890 = vmatprep.subr.mxu0 0.0
    %2891 = vmatpush1.msra.mxu0 %v2567
    %2892 = vmatprep.subr.mxu0 0.0
    %2893 = vmatpush1.msra.mxu0 %v2568
    %2894 = vmatprep.subr.mxu0 0.0
    %2895 = vmatpush1.msra.mxu0 %v2569
    %2896 = vmatprep.subr.mxu0 0.0
    %2897 = vmatpush1.msra.mxu0 0.0
    %2898 = vmatprep.subr.mxu0 0.0
    %2899 = vmatpush1.msra.mxu0 0.0
    %2900 = vmatprep.subr.mxu0 0.0
    %2901 = vmatpush1.msra.mxu0 0.0
    %2902 = vmatprep.subr.mxu0 0.0
    %2903 = vmatpush1.msra.mxu0 0.0
    %2904 = vmatprep.subr.mxu0 0.0
    %2905 = vmatpush1.msra.mxu0 0.0
    %2906 = vmatprep.subr.mxu0 0.0
    %2907 = vmatpush1.msra.mxu0 0.0
    %2908 = vmatprep.subr.mxu0 0.0
    %2909 = vmatpush1.msra.mxu0 0.0
    %2910 = vmatprep.subr.mxu0 0.0
    %2911 = vmatpush1.msra.mxu0 0.0
    %2912 = vmatprep.subr.mxu0 0.0
    %2913 = vmatpush1.msra.mxu0 0.0
    %2914 = vmatprep.subr.mxu0 0.0
    %2915 = vmatpush1.msra.mxu0 0.0
    %2916 = vmatprep.subr.mxu0 0.0
    %2917 = vmatpush1.msra.mxu0 0.0
    %2918 = vmatprep.subr.mxu0 0.0
    %2919 = vmatpush1.msra.mxu0 0.0
    %2920 = vmatprep.subr.mxu0 0.0
    %2921 = vmatpush1.msra.mxu0 0.0
    %2922 = vmatprep.subr.mxu0 0.0
    %2923 = vmatpush1.msra.mxu0 0.0
    %2924 = vmatprep.subr.mxu0 0.0
    %2925 = vmatpush1.msra.mxu0 0.0
    %2926 = vmatprep.subr.mxu0 0.0
    %2927 = vmatpush1.msra.mxu0 0.0
    %2928 = vmatprep.mubr.f32.mxu0 0.0
    %2929 = vmatmul.mubr.f32.gmra.mrb[0].mxu0 %v2698
    %v2930 = vpop.f32.mrb[0].mxu0
    %v2931 = vadd.f32 %v2863, %v2930
    %v2932 = vpop.f32.mrb[0].mxu0
    %2933 = vmatprep.mubr.f32.mxu0 0.0
    %2934 = vmatmul.mubr.f32.gmra.mrb[0].mxu0 %v2699
    %v2935 = vpop.f32.mrb[0].mxu0
    %v2936 = vadd.f32 %v2863, %v2935
    %v2937 = vpop.f32.mrb[0].mxu0
    %2938 = vdwg.mxu0
    %v2939 = vlaneseq
    %v2940 = vshrl.u32 %v2939, 7
    %v2941 = vsub.s32 4, %v2940
    %v2942 = vrot.slane %v2651, %v2941
    %2943 = vmatprep.subr.mxu0 0.0
    %2944 = vmatpush1.msra.mxu0 %v2602
    %2945 = vmatprep.subr.mxu0 0.0
    %2946 = vmatpush1.msra.mxu0 %v2603
    %2947 = vmatprep.subr.mxu0 0.0
    %2948 = vmatpush1.msra.mxu0 %v2604
    %2949 = vmatprep.subr.mxu0 0.0
    %2950 = vmatpush1.msra.mxu0 %v2605
    %2951 = vmatprep.subr.mxu0 0.0
    %2952 = vmatpush1.msra.mxu0 %v2606
    %2953 = vmatprep.subr.mxu0 0.0
    %2954 = vmatpush1.msra.mxu0 %v2607
    %2955 = vmatprep.subr.mxu0 0.0
    %2956 = vmatpush1.msra.mxu0 %v2608
    %2957 = vmatprep.subr.mxu0 0.0
    %2958 = vmatpush1.msra.mxu0 %v2609
    %2959 = vmatprep.subr.mxu0 0.0
    %2960 = vmatpush1.msra.mxu0 %v2610
    %2961 = vmatprep.subr.mxu0 0.0
    %2962 = vmatpush1.msra.mxu0 %v2611
    %2963 = vmatprep.subr.mxu0 0.0
    %2964 = vmatpush1.msra.mxu0 %v2612
    %2965 = vmatprep.subr.mxu0 0.0
    %2966 = vmatpush1.msra.mxu0 %v2613
    %2967 = vmatprep.subr.mxu0 0.0
    %2968 = vmatpush1.msra.mxu0 %v2614
    %2969 = vmatprep.subr.mxu0 0.0
    %2970 = vmatpush1.msra.mxu0 %v2615
    %2971 = vmatprep.subr.mxu0 0.0
    %2972 = vmatpush1.msra.mxu0 %v2616
    %2973 = vmatprep.subr.mxu0 0.0
    %2974 = vmatpush1.msra.mxu0 %v2617
    %2975 = vmatprep.subr.mxu0 0.0
    %2976 = vmatpush1.msra.mxu0 0.0
    %2977 = vmatprep.subr.mxu0 0.0
    %2978 = vmatpush1.msra.mxu0 0.0
    %2979 = vmatprep.subr.mxu0 0.0
    %2980 = vmatpush1.msra.mxu0 0.0
    %2981 = vmatprep.subr.mxu0 0.0
    %2982 = vmatpush1.msra.mxu0 0.0
    %2983 = vmatprep.subr.mxu0 0.0
    %2984 = vmatpush1.msra.mxu0 0.0
    %2985 = vmatprep.subr.mxu0 0.0
    %2986 = vmatpush1.msra.mxu0 0.0
    %2987 = vmatprep.subr.mxu0 0.0
    %2988 = vmatpush1.msra.mxu0 0.0
    %2989 = vmatprep.subr.mxu0 0.0
    %2990 = vmatpush1.msra.mxu0 0.0
    %2991 = vmatprep.subr.mxu0 0.0
    %2992 = vmatpush1.msra.mxu0 0.0
    %2993 = vmatprep.subr.mxu0 0.0
    %2994 = vmatpush1.msra.mxu0 0.0
    %2995 = vmatprep.subr.mxu0 0.0
    %2996 = vmatpush1.msra.mxu0 0.0
    %2997 = vmatprep.subr.mxu0 0.0
    %2998 = vmatpush1.msra.mxu0 0.0
    %2999 = vmatprep.subr.mxu0 0.0
    %3000 = vmatpush1.msra.mxu0 0.0
    %3001 = vmatprep.subr.mxu0 0.0
    %3002 = vmatpush1.msra.mxu0 0.0
    %3003 = vmatprep.subr.mxu0 0.0
    %3004 = vmatpush1.msra.mxu0 0.0
    %3005 = vmatprep.subr.mxu0 0.0
    %3006 = vmatpush1.msra.mxu0 0.0
    %3007 = vmatprep.mubr.f32.mxu0 0.0
    %3008 = vmatmul.mubr.f32.gmra.mrb[0].mxu0 %v2698
    %v3009 = vpop.f32.mrb[0].mxu0
    %v3010 = vadd.f32 %v2942, %v3009
    %v3011 = vpop.f32.mrb[0].mxu0
    %3012 = vmatprep.mubr.f32.mxu0 0.0
    %3013 = vmatmul.mubr.f32.gmra.mrb[0].mxu0 %v2699
    %v3014 = vpop.f32.mrb[0].mxu0
    %v3015 = vadd.f32 %v2942, %v3014
    %v3016 = vpop.f32.mrb[0].mxu0
    %3017 = vdwg.mxu0
    %v3018 = vsel %vm489, %v2931, %v3010
    %v3019 = vsel %vm490, %v2936, %v3015
    %v3020 = vlaneseq
    %v3021 = vshrl.u32 %v3020, 7
    %v3022 = vsub.s32 2, %v3021
    %v3023 = vrot.slane %v2651, %v3022
    %3024 = vmatprep.subr.mxu0 0.0
    %3025 = vmatpush1.msra.mxu0 %v2570
    %3026 = vmatprep.subr.mxu0 0.0
    %3027 = vmatpush1.msra.mxu0 %v2571
    %3028 = vmatprep.subr.mxu0 0.0
    %3029 = vmatpush1.msra.mxu0 %v2572
    %3030 = vmatprep.subr.mxu0 0.0
    %3031 = vmatpush1.msra.mxu0 %v2573
    %3032 = vmatprep.subr.mxu0 0.0
    %3033 = vmatpush1.msra.mxu0 %v2574
    %3034 = vmatprep.subr.mxu0 0.0
    %3035 = vmatpush1.msra.mxu0 %v2575
    %3036 = vmatprep.subr.mxu0 0.0
    %3037 = vmatpush1.msra.mxu0 %v2576
    %3038 = vmatprep.subr.mxu0 0.0
    %3039 = vmatpush1.msra.mxu0 %v2577
    %3040 = vmatprep.subr.mxu0 0.0
    %3041 = vmatpush1.msra.mxu0 %v2578
    %3042 = vmatprep.subr.mxu0 0.0
    %3043 = vmatpush1.msra.mxu0 %v2579
    %3044 = vmatprep.subr.mxu0 0.0
    %3045 = vmatpush1.msra.mxu0 %v2580
    %3046 = vmatprep.subr.mxu0 0.0
    %3047 = vmatpush1.msra.mxu0 %v2581
    %3048 = vmatprep.subr.mxu0 0.0
    %3049 = vmatpush1.msra.mxu0 %v2582
    %3050 = vmatprep.subr.mxu0 0.0
    %3051 = vmatpush1.msra.mxu0 %v2583
    %3052 = vmatprep.subr.mxu0 0.0
    %3053 = vmatpush1.msra.mxu0 %v2584
    %3054 = vmatprep.subr.mxu0 0.0
    %3055 = vmatpush1.msra.mxu0 %v2585
    %3056 = vmatprep.subr.mxu0 0.0
    %3057 = vmatpush1.msra.mxu0 0.0
    %3058 = vmatprep.subr.mxu0 0.0
    %3059 = vmatpush1.msra.mxu0 0.0
    %3060 = vmatprep.subr.mxu0 0.0
    %3061 = vmatpush1.msra.mxu0 0.0
    %3062 = vmatprep.subr.mxu0 0.0
    %3063 = vmatpush1.msra.mxu0 0.0
    %3064 = vmatprep.subr.mxu0 0.0
    %3065 = vmatpush1.msra.mxu0 0.0
    %3066 = vmatprep.subr.mxu0 0.0
    %3067 = vmatpush1.msra.mxu0 0.0
    %3068 = vmatprep.subr.mxu0 0.0
    %3069 = vmatpush1.msra.mxu0 0.0
    %3070 = vmatprep.subr.mxu0 0.0
    %3071 = vmatpush1.msra.mxu0 0.0
    %3072 = vmatprep.subr.mxu0 0.0
    %3073 = vmatpush1.msra.mxu0 0.0
    %3074 = vmatprep.subr.mxu0 0.0
    %3075 = vmatpush1.msra.mxu0 0.0
    %3076 = vmatprep.subr.mxu0 0.0
    %3077 = vmatpush1.msra.mxu0 0.0
    %3078 = vmatprep.subr.mxu0 0.0
    %3079 = vmatpush1.msra.mxu0 0.0
    %3080 = vmatprep.subr.mxu0 0.0
    %3081 = vmatpush1.msra.mxu0 0.0
    %3082 = vmatprep.subr.mxu0 0.0
    %3083 = vmatpush1.msra.mxu0 0.0
    %3084 = vmatprep.subr.mxu0 0.0
    %3085 = vmatpush1.msra.mxu0 0.0
    %3086 = vmatprep.subr.mxu0 0.0
    %3087 = vmatpush1.msra.mxu0 0.0
    %3088 = vmatprep.mubr.f32.mxu0 0.0
    %3089 = vmatmul.mubr.f32.gmra.mrb[0].mxu0 %v2698
    %v3090 = vpop.f32.mrb[0].mxu0
    %v3091 = vadd.f32 %v3023, %v3090
    %v3092 = vpop.f32.mrb[0].mxu0
    %3093 = vmatprep.mubr.f32.mxu0 0.0
    %3094 = vmatmul.mubr.f32.gmra.mrb[0].mxu0 %v2699
    %v3095 = vpop.f32.mrb[0].mxu0
    %v3096 = vadd.f32 %v3023, %v3095
    %v3097 = vpop.f32.mrb[0].mxu0
    %3098 = vdwg.mxu0
    %v3099 = vlaneseq
    %v3100 = vshrl.u32 %v3099, 7
    %v3101 = vsub.s32 5, %v3100
    %v3102 = vrot.slane %v2651, %v3101
    %3103 = vmatprep.subr.mxu0 0.0
    %3104 = vmatpush1.msra.mxu0 %v2618
    %3105 = vmatprep.subr.mxu0 0.0
    %3106 = vmatpush1.msra.mxu0 %v2619
    %3107 = vmatprep.subr.mxu0 0.0
    %3108 = vmatpush1.msra.mxu0 %v2620
    %3109 = vmatprep.subr.mxu0 0.0
    %3110 = vmatpush1.msra.mxu0 %v2621
    %3111 = vmatprep.subr.mxu0 0.0
    %3112 = vmatpush1.msra.mxu0 %v2622
    %3113 = vmatprep.subr.mxu0 0.0
    %3114 = vmatpush1.msra.mxu0 %v2623
    %3115 = vmatprep.subr.mxu0 0.0
    %3116 = vmatpush1.msra.mxu0 %v2624
    %3117 = vmatprep.subr.mxu0 0.0
    %3118 = vmatpush1.msra.mxu0 %v2625
    %3119 = vmatprep.subr.mxu0 0.0
    %3120 = vmatpush1.msra.mxu0 %v2626
    %3121 = vmatprep.subr.mxu0 0.0
    %3122 = vmatpush1.msra.mxu0 %v2627
    %3123 = vmatprep.subr.mxu0 0.0
    %3124 = vmatpush1.msra.mxu0 %v2628
    %3125 = vmatprep.subr.mxu0 0.0
    %3126 = vmatpush1.msra.mxu0 %v2629
    %3127 = vmatprep.subr.mxu0 0.0
    %3128 = vmatpush1.msra.mxu0 %v2630
    %3129 = vmatprep.subr.mxu0 0.0
    %3130 = vmatpush1.msra.mxu0 %v2631
    %3131 = vmatprep.subr.mxu0 0.0
    %3132 = vmatpush1.msra.mxu0 %v2632
    %3133 = vmatprep.subr.mxu0 0.0
    %3134 = vmatpush1.msra.mxu0 %v2633
    %3135 = vmatprep.subr.mxu0 0.0
    %3136 = vmatpush1.msra.mxu0 0.0
    %3137 = vmatprep.subr.mxu0 0.0
    %3138 = vmatpush1.msra.mxu0 0.0
    %3139 = vmatprep.subr.mxu0 0.0
    %3140 = vmatpush1.msra.mxu0 0.0
    %3141 = vmatprep.subr.mxu0 0.0
    %3142 = vmatpush1.msra.mxu0 0.0
    %3143 = vmatprep.subr.mxu0 0.0
    %3144 = vmatpush1.msra.mxu0 0.0
    %3145 = vmatprep.subr.mxu0 0.0
    %3146 = vmatpush1.msra.mxu0 0.0
    %3147 = vmatprep.subr.mxu0 0.0
    %3148 = vmatpush1.msra.mxu0 0.0
    %3149 = vmatprep.subr.mxu0 0.0
    %3150 = vmatpush1.msra.mxu0 0.0
    %3151 = vmatprep.subr.mxu0 0.0
    %3152 = vmatpush1.msra.mxu0 0.0
    %3153 = vmatprep.subr.mxu0 0.0
    %3154 = vmatpush1.msra.mxu0 0.0
    %3155 = vmatprep.subr.mxu0 0.0
    %3156 = vmatpush1.msra.mxu0 0.0
    %3157 = vmatprep.subr.mxu0 0.0
    %3158 = vmatpush1.msra.mxu0 0.0
    %3159 = vmatprep.subr.mxu0 0.0
    %3160 = vmatpush1.msra.mxu0 0.0
    %3161 = vmatprep.subr.mxu0 0.0
    %3162 = vmatpush1.msra.mxu0 0.0
    %3163 = vmatprep.subr.mxu0 0.0
    %3164 = vmatpush1.msra.mxu0 0.0
    %3165 = vmatprep.subr.mxu0 0.0
    %3166 = vmatpush1.msra.mxu0 0.0
    %3167 = vmatprep.mubr.f32.mxu0 0.0
    %3168 = vmatmul.mubr.f32.gmra.mrb[0].mxu0 %v2698
    %v3169 = vpop.f32.mrb[0].mxu0
    %v3170 = vadd.f32 %v3102, %v3169
    %v3171 = vpop.f32.mrb[0].mxu0
    %3172 = vmatprep.mubr.f32.mxu0 0.0
    %3173 = vmatmul.mubr.f32.gmra.mrb[0].mxu0 %v2699
    %v3174 = vpop.f32.mrb[0].mxu0
    %v3175 = vadd.f32 %v3102, %v3174
    %v3176 = vpop.f32.mrb[0].mxu0
    %3177 = vdwg.mxu0
    %v3178 = vsel %vm489, %v3091, %v3170
    %v3179 = vsel %vm490, %v3096, %v3175
    %v3181 = vsel %vm813, %v2858, 0
    %v3184 = vsel %vm813, %v3018, 0
    %3186 = vmatprep.subr.mxu0 0.0
    %3187 = vmatpush1.xpose.msra.mxu0 %v3184
    %3188 = vmatprep.subr.mxu0 0.0
    %3189 = vmatpush1.xpose.msra.mxu0 0.0
    %3190 = vmatprep.subr.mxu0 0.0
    %3191 = vmatpush1.xpose.msra.mxu0 0.0
    %3192 = vmatprep.subr.mxu0 0.0
    %3193 = vmatpush1.xpose.msra.mxu0 0.0
    %3194 = vmatprep.subr.mxu0 0.0
    %3195 = vmatpush1.xpose.msra.mxu0 0.0
    %3196 = vmatprep.subr.mxu0 0.0
    %3197 = vmatpush1.xpose.msra.mxu0 0.0
    %3198 = vmatprep.subr.mxu0 0.0
    %3199 = vmatpush1.xpose.msra.mxu0 0.0
    %3200 = vmatprep.subr.mxu0 0.0
    %3201 = vmatpush1.xpose.msra.mxu0 0.0
    %3202 = vmatprep.subr.mxu0 0.0
    %3203 = vmatpush1.xpose.msra.mxu0 0.0
    %3204 = vmatprep.subr.mxu0 0.0
    %3205 = vmatpush1.xpose.msra.mxu0 0.0
    %3206 = vmatprep.subr.mxu0 0.0
    %3207 = vmatpush1.xpose.msra.mxu0 0.0
    %3208 = vmatprep.subr.mxu0 0.0
    %3209 = vmatpush1.xpose.msra.mxu0 0.0
    %3210 = vmatprep.subr.mxu0 0.0
    %3211 = vmatpush1.xpose.msra.mxu0 0.0
    %3212 = vmatprep.subr.mxu0 0.0
    %3213 = vmatpush1.xpose.msra.mxu0 0.0
    %3214 = vmatprep.subr.mxu0 0.0
    %3215 = vmatpush1.xpose.msra.mxu0 0.0
    %3216 = vmatprep.subr.mxu0 0.0
    %3217 = vmatpush1.xpose.msra.mxu0 0.0
    %3218 = vmatprep.subr.mxu0 0.0
    %3219 = vmatpush1.xpose.msra.mxu0 0.0
    %3220 = vmatprep.subr.mxu0 0.0
    %3221 = vmatpush1.xpose.msra.mxu0 0.0
    %3222 = vmatprep.subr.mxu0 0.0
    %3223 = vmatpush1.xpose.msra.mxu0 0.0
    %3224 = vmatprep.subr.mxu0 0.0
    %3225 = vmatpush1.xpose.msra.mxu0 0.0
    %3226 = vmatprep.subr.mxu0 0.0
    %3227 = vmatpush1.xpose.msra.mxu0 0.0
    %3228 = vmatprep.subr.mxu0 0.0
    %3229 = vmatpush1.xpose.msra.mxu0 0.0
    %3230 = vmatprep.subr.mxu0 0.0
    %3231 = vmatpush1.xpose.msra.mxu0 0.0
    %3232 = vmatprep.subr.mxu0 0.0
    %3233 = vmatpush1.xpose.msra.mxu0 0.0
    %3234 = vmatprep.subr.mxu0 0.0
    %3235 = vmatpush1.xpose.msra.mxu0 0.0
    %3236 = vmatprep.subr.mxu0 0.0
    %3237 = vmatpush1.xpose.msra.mxu0 0.0
    %3238 = vmatprep.subr.mxu0 0.0
    %3239 = vmatpush1.xpose.msra.mxu0 0.0
    %3240 = vmatprep.subr.mxu0 0.0
    %3241 = vmatpush1.xpose.msra.mxu0 0.0
    %3242 = vmatprep.subr.mxu0 0.0
    %3243 = vmatpush1.xpose.msra.mxu0 0.0
    %3244 = vmatprep.subr.mxu0 0.0
    %3245 = vmatpush1.xpose.msra.mxu0 0.0
    %3246 = vmatprep.subr.mxu0 0.0
    %3247 = vmatpush1.xpose.msra.mxu0 0.0
    %3248 = vmatprep.subr.mxu0 0.0
    %3249 = vmatpush1.xpose.msra.mxu0 0.0
    %3250 = vmatprep.mubr.f32.mxu0 0.0
    %3251 = vmatmul.mubr.f32.gmra.mrb[0].mxu0 %v3181
    %v3252 = vpop.f32.mrb[0].mxu0
    %v3253 = vadd.f32 0.0, %v3252
    %v3254 = vpop.f32.mrb[0].mxu0
    %3255 = vdwg.mxu0
    %v3257 = vsel %vm813, %v2859, 0
    %v3260 = vsel %vm813, %v3019, 0
    %3262 = vmatprep.subr.mxu0 0.0
    %3263 = vmatpush1.xpose.msra.mxu0 %v3260
    %3264 = vmatprep.subr.mxu0 0.0
    %3265 = vmatpush1.xpose.msra.mxu0 0.0
    %3266 = vmatprep.subr.mxu0 0.0
    %3267 = vmatpush1.xpose.msra.mxu0 0.0
    %3268 = vmatprep.subr.mxu0 0.0
    %3269 = vmatpush1.xpose.msra.mxu0 0.0
    %3270 = vmatprep.subr.mxu0 0.0
    %3271 = vmatpush1.xpose.msra.mxu0 0.0
    %3272 = vmatprep.subr.mxu0 0.0
    %3273 = vmatpush1.xpose.msra.mxu0 0.0
    %3274 = vmatprep.subr.mxu0 0.0
    %3275 = vmatpush1.xpose.msra.mxu0 0.0
    %3276 = vmatprep.subr.mxu0 0.0
    %3277 = vmatpush1.xpose.msra.mxu0 0.0
    %3278 = vmatprep.subr.mxu0 0.0
    %3279 = vmatpush1.xpose.msra.mxu0 0.0
    %3280 = vmatprep.subr.mxu0 0.0
    %3281 = vmatpush1.xpose.msra.mxu0 0.0
    %3282 = vmatprep.subr.mxu0 0.0
    %3283 = vmatpush1.xpose.msra.mxu0 0.0
    %3284 = vmatprep.subr.mxu0 0.0
    %3285 = vmatpush1.xpose.msra.mxu0 0.0
    %3286 = vmatprep.subr.mxu0 0.0
    %3287 = vmatpush1.xpose.msra.mxu0 0.0
    %3288 = vmatprep.subr.mxu0 0.0
    %3289 = vmatpush1.xpose.msra.mxu0 0.0
    %3290 = vmatprep.subr.mxu0 0.0
    %3291 = vmatpush1.xpose.msra.mxu0 0.0
    %3292 = vmatprep.subr.mxu0 0.0
    %3293 = vmatpush1.xpose.msra.mxu0 0.0
    %3294 = vmatprep.subr.mxu0 0.0
    %3295 = vmatpush1.xpose.msra.mxu0 0.0
    %3296 = vmatprep.subr.mxu0 0.0
    %3297 = vmatpush1.xpose.msra.mxu0 0.0
    %3298 = vmatprep.subr.mxu0 0.0
    %3299 = vmatpush1.xpose.msra.mxu0 0.0
    %3300 = vmatprep.subr.mxu0 0.0
    %3301 = vmatpush1.xpose.msra.mxu0 0.0
    %3302 = vmatprep.subr.mxu0 0.0
    %3303 = vmatpush1.xpose.msra.mxu0 0.0
    %3304 = vmatprep.subr.mxu0 0.0
    %3305 = vmatpush1.xpose.msra.mxu0 0.0
    %3306 = vmatprep.subr.mxu0 0.0
    %3307 = vmatpush1.xpose.msra.mxu0 0.0
    %3308 = vmatprep.subr.mxu0 0.0
    %3309 = vmatpush1.xpose.msra.mxu0 0.0
    %3310 = vmatprep.subr.mxu0 0.0
    %3311 = vmatpush1.xpose.msra.mxu0 0.0
    %3312 = vmatprep.subr.mxu0 0.0
    %3313 = vmatpush1.xpose.msra.mxu0 0.0
    %3314 = vmatprep.subr.mxu0 0.0
    %3315 = vmatpush1.xpose.msra.mxu0 0.0
    %3316 = vmatprep.subr.mxu0 0.0
    %3317 = vmatpush1.xpose.msra.mxu0 0.0
    %3318 = vmatprep.subr.mxu0 0.0
    %3319 = vmatpush1.xpose.msra.mxu0 0.0
    %3320 = vmatprep.subr.mxu0 0.0
    %3321 = vmatpush1.xpose.msra.mxu0 0.0
    %3322 = vmatprep.subr.mxu0 0.0
    %3323 = vmatpush1.xpose.msra.mxu0 0.0
    %3324 = vmatprep.subr.mxu0 0.0
    %3325 = vmatpush1.xpose.msra.mxu0 0.0
    %3326 = vmatprep.mubr.f32.mxu0 0.0
    %3327 = vmatmul.mubr.f32.gmra.mrb[0].mxu0 %v3257
    %v3328 = vpop.f32.mrb[0].mxu0
    %v3329 = vadd.f32 0.0, %v3328
    %v3330 = vpop.f32.mrb[0].mxu0
    %3331 = vdwg.mxu0
    %v3332 = vmul.f32 %v3253, 0.17677669
    %v3333 = vmul.f32 %v3329, 0.17677669
    %v3334 = vsel %vm968, %v3332, -inf
    %3335 = vmax.xlane.f32.xlu0 %v3334
    %v3336 = vpop.xlane.xlu0 %3335
    %v3337 = vsel %vm968, %v3333, -inf
    %3338 = vmax.xlane.f32.xlu0 %v3337
    %v3339 = vpop.xlane.xlu0 %3338
    %v3340 = vsub.f32 %v3332, %v3336
    %v3341 = vsub.f32 %v3333, %v3339
    %v3342 = vmul.f32 %v3340, 1.442695
    %v3343 = vpow.pop %v3342
    %v3344 = vmul.f32 %v3341, 1.442695
    %v3345 = vpow.pop %v3344
    %v3346 = vsel %vm968, %v3343, 0.0
    %3347 = vadd.xlane.f32.xlu0 %v3346
    %v3348 = vpop.xlane.xlu0 %3347
    %v3349 = vsel %vm968, %v3345, 0.0
    %3350 = vadd.xlane.f32.xlu0 %v3349
    %v3351 = vpop.xlane.xlu0 %3350
    %v3352 = vrcp.pop %v3348
    %v3353 = vmul.f32 %v3343, %v3352
    %v3354 = vrcp.pop %v3351
    %v3355 = vmul.f32 %v3345, %v3354
    %v3357 = vsel %vm968, %v3353, 0
    %3359 = vmatprep.subr.mxu0 0.0
    %3360 = vmatpush1.msra.mxu0 %v3178
    %3361 = vmatprep.subr.mxu0 0.0
    %3362 = vmatpush1.msra.mxu0 0.0
    %3363 = vmatprep.subr.mxu0 0.0
    %3364 = vmatpush1.msra.mxu0 0.0
    %3365 = vmatprep.subr.mxu0 0.0
    %3366 = vmatpush1.msra.mxu0 0.0
    %3367 = vmatprep.subr.mxu0 0.0
    %3368 = vmatpush1.msra.mxu0 0.0
    %3369 = vmatprep.subr.mxu0 0.0
    %3370 = vmatpush1.msra.mxu0 0.0
    %3371 = vmatprep.subr.mxu0 0.0
    %3372 = vmatpush1.msra.mxu0 0.0
    %3373 = vmatprep.subr.mxu0 0.0
    %3374 = vmatpush1.msra.mxu0 0.0
    %3375 = vmatprep.subr.mxu0 0.0
    %3376 = vmatpush1.msra.mxu0 0.0
    %3377 = vmatprep.subr.mxu0 0.0
    %3378 = vmatpush1.msra.mxu0 0.0
    %3379 = vmatprep.subr.mxu0 0.0
    %3380 = vmatpush1.msra.mxu0 0.0
    %3381 = vmatprep.subr.mxu0 0.0
    %3382 = vmatpush1.msra.mxu0 0.0
    %3383 = vmatprep.subr.mxu0 0.0
    %3384 = vmatpush1.msra.mxu0 0.0
    %3385 = vmatprep.subr.mxu0 0.0
    %3386 = vmatpush1.msra.mxu0 0.0
    %3387 = vmatprep.subr.mxu0 0.0
    %3388 = vmatpush1.msra.mxu0 0.0
    %3389 = vmatprep.subr.mxu0 0.0
    %3390 = vmatpush1.msra.mxu0 0.0
    %3391 = vmatprep.subr.mxu0 0.0
    %3392 = vmatpush1.msra.mxu0 0.0
    %3393 = vmatprep.subr.mxu0 0.0
    %3394 = vmatpush1.msra.mxu0 0.0
    %3395 = vmatprep.subr.mxu0 0.0
    %3396 = vmatpush1.msra.mxu0 0.0
    %3397 = vmatprep.subr.mxu0 0.0
    %3398 = vmatpush1.msra.mxu0 0.0
    %3399 = vmatprep.subr.mxu0 0.0
    %3400 = vmatpush1.msra.mxu0 0.0
    %3401 = vmatprep.subr.mxu0 0.0
    %3402 = vmatpush1.msra.mxu0 0.0
    %3403 = vmatprep.subr.mxu0 0.0
    %3404 = vmatpush1.msra.mxu0 0.0
    %3405 = vmatprep.subr.mxu0 0.0
    %3406 = vmatpush1.msra.mxu0 0.0
    %3407 = vmatprep.subr.mxu0 0.0
    %3408 = vmatpush1.msra.mxu0 0.0
    %3409 = vmatprep.subr.mxu0 0.0
    %3410 = vmatpush1.msra.mxu0 0.0
    %3411 = vmatprep.subr.mxu0 0.0
    %3412 = vmatpush1.msra.mxu0 0.0
    %3413 = vmatprep.subr.mxu0 0.0
    %3414 = vmatpush1.msra.mxu0 0.0
    %3415 = vmatprep.subr.mxu0 0.0
    %3416 = vmatpush1.msra.mxu0 0.0
    %3417 = vmatprep.subr.mxu0 0.0
    %3418 = vmatpush1.msra.mxu0 0.0
    %3419 = vmatprep.subr.mxu0 0.0
    %3420 = vmatpush1.msra.mxu0 0.0
    %3421 = vmatprep.subr.mxu0 0.0
    %3422 = vmatpush1.msra.mxu0 0.0
    %3423 = vmatprep.mubr.f32.mxu0 0.0
    %3424 = vmatmul.mubr.f32.gmra.mrb[0].mxu0 %v3357
    %v3425 = vpop.f32.mrb[0].mxu0
    %v3426 = vadd.f32 0.0, %v3425
    %v3427 = vpop.f32.mrb[0].mxu0
    %3428 = vdwg.mxu0
    %v3430 = vsel %vm968, %v3355, 0
    %3432 = vmatprep.subr.mxu0 0.0
    %3433 = vmatpush1.msra.mxu0 %v3179
    %3434 = vmatprep.subr.mxu0 0.0
    %3435 = vmatpush1.msra.mxu0 0.0
    %3436 = vmatprep.subr.mxu0 0.0
    %3437 = vmatpush1.msra.mxu0 0.0
    %3438 = vmatprep.subr.mxu0 0.0
    %3439 = vmatpush1.msra.mxu0 0.0
    %3440 = vmatprep.subr.mxu0 0.0
    %3441 = vmatpush1.msra.mxu0 0.0
    %3442 = vmatprep.subr.mxu0 0.0
    %3443 = vmatpush1.msra.mxu0 0.0
    %3444 = vmatprep.subr.mxu0 0.0
    %3445 = vmatpush1.msra.mxu0 0.0
    %3446 = vmatprep.subr.mxu0 0.0
    %3447 = vmatpush1.msra.mxu0 0.0
    %3448 = vmatprep.subr.mxu0 0.0
    %3449 = vmatpush1.msra.mxu0 0.0
    %3450 = vmatprep.subr.mxu0 0.0
    %3451 = vmatpush1.msra.mxu0 0.0
    %3452 = vmatprep.subr.mxu0 0.0
    %3453 = vmatpush1.msra.mxu0 0.0
    %3454 = vmatprep.subr.mxu0 0.0
    %3455 = vmatpush1.msra.mxu0 0.0
    %3456 = vmatprep.subr.mxu0 0.0
    %3457 = vmatpush1.msra.mxu0 0.0
    %3458 = vmatprep.subr.mxu0 0.0
    %3459 = vmatpush1.msra.mxu0 0.0
    %3460 = vmatprep.subr.mxu0 0.0
    %3461 = vmatpush1.msra.mxu0 0.0
    %3462 = vmatprep.subr.mxu0 0.0
    %3463 = vmatpush1.msra.mxu0 0.0
    %3464 = vmatprep.subr.mxu0 0.0
    %3465 = vmatpush1.msra.mxu0 0.0
    %3466 = vmatprep.subr.mxu0 0.0
    %3467 = vmatpush1.msra.mxu0 0.0
    %3468 = vmatprep.subr.mxu0 0.0
    %3469 = vmatpush1.msra.mxu0 0.0
    %3470 = vmatprep.subr.mxu0 0.0
    %3471 = vmatpush1.msra.mxu0 0.0
    %3472 = vmatprep.subr.mxu0 0.0
    %3473 = vmatpush1.msra.mxu0 0.0
    %3474 = vmatprep.subr.mxu0 0.0
    %3475 = vmatpush1.msra.mxu0 0.0
    %3476 = vmatprep.subr.mxu0 0.0
    %3477 = vmatpush1.msra.mxu0 0.0
    %3478 = vmatprep.subr.mxu0 0.0
    %3479 = vmatpush1.msra.mxu0 0.0
    %3480 = vmatprep.subr.mxu0 0.0
    %3481 = vmatpush1.msra.mxu0 0.0
    %3482 = vmatprep.subr.mxu0 0.0
    %3483 = vmatpush1.msra.mxu0 0.0
    %3484 = vmatprep.subr.mxu0 0.0
    %3485 = vmatpush1.msra.mxu0 0.0
    %3486 = vmatprep.subr.mxu0 0.0
    %3487 = vmatpush1.msra.mxu0 0.0
    %3488 = vmatprep.subr.mxu0 0.0
    %3489 = vmatpush1.msra.mxu0 0.0
    %3490 = vmatprep.subr.mxu0 0.0
    %3491 = vmatpush1.msra.mxu0 0.0
    %3492 = vmatprep.subr.mxu0 0.0
    %3493 = vmatpush1.msra.mxu0 0.0
    %3494 = vmatprep.subr.mxu0 0.0
    %3495 = vmatpush1.msra.mxu0 0.0
    %3496 = vmatprep.mubr.f32.mxu0 0.0
    %3497 = vmatmul.mubr.f32.gmra.mrb[0].mxu0 %v3430
    %v3498 = vpop.f32.mrb[0].mxu0
    %v3499 = vadd.f32 0.0, %v3498
    %v3500 = vpop.f32.mrb[0].mxu0
    %3501 = vdwg.mxu0
    %3502 = vrot.lane.b32.xlu0 %v2858, 96
    %v3503 = vpop.permute.xlu0 %3502
    %3504 = vrot.lane.b32.xlu0 %v3018, 96
    %v3505 = vpop.permute.xlu0 %3504
    %v3506 = vsel %vm813, %v3503, 0
    %v3508 = vsel %vm813, %v3505, 0
    %3510 = vmatprep.subr.mxu0 0.0
    %3511 = vmatpush1.xpose.msra.mxu0 %v3508
    %3512 = vmatprep.subr.mxu0 0.0
    %3513 = vmatpush1.xpose.msra.mxu0 0.0
    %3514 = vmatprep.subr.mxu0 0.0
    %3515 = vmatpush1.xpose.msra.mxu0 0.0
    %3516 = vmatprep.subr.mxu0 0.0
    %3517 = vmatpush1.xpose.msra.mxu0 0.0
    %3518 = vmatprep.subr.mxu0 0.0
    %3519 = vmatpush1.xpose.msra.mxu0 0.0
    %3520 = vmatprep.subr.mxu0 0.0
    %3521 = vmatpush1.xpose.msra.mxu0 0.0
    %3522 = vmatprep.subr.mxu0 0.0
    %3523 = vmatpush1.xpose.msra.mxu0 0.0
    %3524 = vmatprep.subr.mxu0 0.0
    %3525 = vmatpush1.xpose.msra.mxu0 0.0
    %3526 = vmatprep.subr.mxu0 0.0
    %3527 = vmatpush1.xpose.msra.mxu0 0.0
    %3528 = vmatprep.subr.mxu0 0.0
    %3529 = vmatpush1.xpose.msra.mxu0 0.0
    %3530 = vmatprep.subr.mxu0 0.0
    %3531 = vmatpush1.xpose.msra.mxu0 0.0
    %3532 = vmatprep.subr.mxu0 0.0
    %3533 = vmatpush1.xpose.msra.mxu0 0.0
    %3534 = vmatprep.subr.mxu0 0.0
    %3535 = vmatpush1.xpose.msra.mxu0 0.0
    %3536 = vmatprep.subr.mxu0 0.0
    %3537 = vmatpush1.xpose.msra.mxu0 0.0
    %3538 = vmatprep.subr.mxu0 0.0
    %3539 = vmatpush1.xpose.msra.mxu0 0.0
    %3540 = vmatprep.subr.mxu0 0.0
    %3541 = vmatpush1.xpose.msra.mxu0 0.0
    %3542 = vmatprep.subr.mxu0 0.0
    %3543 = vmatpush1.xpose.msra.mxu0 0.0
    %3544 = vmatprep.subr.mxu0 0.0
    %3545 = vmatpush1.xpose.msra.mxu0 0.0
    %3546 = vmatprep.subr.mxu0 0.0
    %3547 = vmatpush1.xpose.msra.mxu0 0.0
    %3548 = vmatprep.subr.mxu0 0.0
    %3549 = vmatpush1.xpose.msra.mxu0 0.0
    %3550 = vmatprep.subr.mxu0 0.0
    %3551 = vmatpush1.xpose.msra.mxu0 0.0
    %3552 = vmatprep.subr.mxu0 0.0
    %3553 = vmatpush1.xpose.msra.mxu0 0.0
    %3554 = vmatprep.subr.mxu0 0.0
    %3555 = vmatpush1.xpose.msra.mxu0 0.0
    %3556 = vmatprep.subr.mxu0 0.0
    %3557 = vmatpush1.xpose.msra.mxu0 0.0
    %3558 = vmatprep.subr.mxu0 0.0
    %3559 = vmatpush1.xpose.msra.mxu0 0.0
    %3560 = vmatprep.subr.mxu0 0.0
    %3561 = vmatpush1.xpose.msra.mxu0 0.0
    %3562 = vmatprep.subr.mxu0 0.0
    %3563 = vmatpush1.xpose.msra.mxu0 0.0
    %3564 = vmatprep.subr.mxu0 0.0
    %3565 = vmatpush1.xpose.msra.mxu0 0.0
    %3566 = vmatprep.subr.mxu0 0.0
    %3567 = vmatpush1.xpose.msra.mxu0 0.0
    %3568 = vmatprep.subr.mxu0 0.0
    %3569 = vmatpush1.xpose.msra.mxu0 0.0
    %3570 = vmatprep.subr.mxu0 0.0
    %3571 = vmatpush1.xpose.msra.mxu0 0.0
    %3572 = vmatprep.subr.mxu0 0.0
    %3573 = vmatpush1.xpose.msra.mxu0 0.0
    %3574 = vmatprep.mubr.f32.mxu0 0.0
    %3575 = vmatmul.mubr.f32.gmra.mrb[0].mxu0 %v3506
    %v3576 = vpop.f32.mrb[0].mxu0
    %v3577 = vadd.f32 0.0, %v3576
    %v3578 = vpop.f32.mrb[0].mxu0
    %3579 = vdwg.mxu0
    %3580 = vrot.lane.b32.xlu0 %v2859, 96
    %v3581 = vpop.permute.xlu0 %3580
    %3582 = vrot.lane.b32.xlu0 %v3019, 96
    %v3583 = vpop.permute.xlu0 %3582
    %v3584 = vsel %vm813, %v3581, 0
    %v3586 = vsel %vm813, %v3583, 0
    %3588 = vmatprep.subr.mxu0 0.0
    %3589 = vmatpush1.xpose.msra.mxu0 %v3586
    %3590 = vmatprep.subr.mxu0 0.0
    %3591 = vmatpush1.xpose.msra.mxu0 0.0
    %3592 = vmatprep.subr.mxu0 0.0
    %3593 = vmatpush1.xpose.msra.mxu0 0.0
    %3594 = vmatprep.subr.mxu0 0.0
    %3595 = vmatpush1.xpose.msra.mxu0 0.0
    %3596 = vmatprep.subr.mxu0 0.0
    %3597 = vmatpush1.xpose.msra.mxu0 0.0
    %3598 = vmatprep.subr.mxu0 0.0
    %3599 = vmatpush1.xpose.msra.mxu0 0.0
    %3600 = vmatprep.subr.mxu0 0.0
    %3601 = vmatpush1.xpose.msra.mxu0 0.0
    %3602 = vmatprep.subr.mxu0 0.0
    %3603 = vmatpush1.xpose.msra.mxu0 0.0
    %3604 = vmatprep.subr.mxu0 0.0
    %3605 = vmatpush1.xpose.msra.mxu0 0.0
    %3606 = vmatprep.subr.mxu0 0.0
    %3607 = vmatpush1.xpose.msra.mxu0 0.0
    %3608 = vmatprep.subr.mxu0 0.0
    %3609 = vmatpush1.xpose.msra.mxu0 0.0
    %3610 = vmatprep.subr.mxu0 0.0
    %3611 = vmatpush1.xpose.msra.mxu0 0.0
    %3612 = vmatprep.subr.mxu0 0.0
    %3613 = vmatpush1.xpose.msra.mxu0 0.0
    %3614 = vmatprep.subr.mxu0 0.0
    %3615 = vmatpush1.xpose.msra.mxu0 0.0
    %3616 = vmatprep.subr.mxu0 0.0
    %3617 = vmatpush1.xpose.msra.mxu0 0.0
    %3618 = vmatprep.subr.mxu0 0.0
    %3619 = vmatpush1.xpose.msra.mxu0 0.0
    %3620 = vmatprep.subr.mxu0 0.0
    %3621 = vmatpush1.xpose.msra.mxu0 0.0
    %3622 = vmatprep.subr.mxu0 0.0
    %3623 = vmatpush1.xpose.msra.mxu0 0.0
    %3624 = vmatprep.subr.mxu0 0.0
    %3625 = vmatpush1.xpose.msra.mxu0 0.0
    %3626 = vmatprep.subr.mxu0 0.0
    %3627 = vmatpush1.xpose.msra.mxu0 0.0
    %3628 = vmatprep.subr.mxu0 0.0
    %3629 = vmatpush1.xpose.msra.mxu0 0.0
    %3630 = vmatprep.subr.mxu0 0.0
    %3631 = vmatpush1.xpose.msra.mxu0 0.0
    %3632 = vmatprep.subr.mxu0 0.0
    %3633 = vmatpush1.xpose.msra.mxu0 0.0
    %3634 = vmatprep.subr.mxu0 0.0
    %3635 = vmatpush1.xpose.msra.mxu0 0.0
    %3636 = vmatprep.subr.mxu0 0.0
    %3637 = vmatpush1.xpose.msra.mxu0 0.0
    %3638 = vmatprep.subr.mxu0 0.0
    %3639 = vmatpush1.xpose.msra.mxu0 0.0
    %3640 = vmatprep.subr.mxu0 0.0
    %3641 = vmatpush1.xpose.msra.mxu0 0.0
    %3642 = vmatprep.subr.mxu0 0.0
    %3643 = vmatpush1.xpose.msra.mxu0 0.0
    %3644 = vmatprep.subr.mxu0 0.0
    %3645 = vmatpush1.xpose.msra.mxu0 0.0
    %3646 = vmatprep.subr.mxu0 0.0
    %3647 = vmatpush1.xpose.msra.mxu0 0.0
    %3648 = vmatprep.subr.mxu0 0.0
    %3649 = vmatpush1.xpose.msra.mxu0 0.0
    %3650 = vmatprep.subr.mxu0 0.0
    %3651 = vmatpush1.xpose.msra.mxu0 0.0
    %3652 = vmatprep.mubr.f32.mxu0 0.0
    %3653 = vmatmul.mubr.f32.gmra.mrb[0].mxu0 %v3584
    %v3654 = vpop.f32.mrb[0].mxu0
    %v3655 = vadd.f32 0.0, %v3654
    %v3656 = vpop.f32.mrb[0].mxu0
    %3657 = vdwg.mxu0
    %v3658 = vmul.f32 %v3577, 0.17677669
    %v3659 = vmul.f32 %v3655, 0.17677669
    %v3660 = vsel %vm968, %v3658, -inf
    %3661 = vmax.xlane.f32.xlu0 %v3660
    %v3662 = vpop.xlane.xlu0 %3661
    %v3663 = vsel %vm968, %v3659, -inf
    %3664 = vmax.xlane.f32.xlu0 %v3663
    %v3665 = vpop.xlane.xlu0 %3664
    %v3666 = vsub.f32 %v3658, %v3662
    %v3667 = vsub.f32 %v3659, %v3665
    %v3668 = vmul.f32 %v3666, 1.442695
    %v3669 = vpow.pop %v3668
    %v3670 = vmul.f32 %v3667, 1.442695
    %v3671 = vpow.pop %v3670
    %v3672 = vsel %vm968, %v3669, 0.0
    %3673 = vadd.xlane.f32.xlu0 %v3672
    %v3674 = vpop.xlane.xlu0 %3673
    %v3675 = vsel %vm968, %v3671, 0.0
    %3676 = vadd.xlane.f32.xlu0 %v3675
    %v3677 = vpop.xlane.xlu0 %3676
    %v3678 = vrcp.pop %v3674
    %v3679 = vmul.f32 %v3669, %v3678
    %v3680 = vrcp.pop %v3677
    %v3681 = vmul.f32 %v3671, %v3680
    %3683 = vrot.lane.b32.xlu0 %v3178, 96
    %v3684 = vpop.permute.xlu0 %3683
    %v3687 = vsel %vm968, %v3679, 0
    %3689 = vmatprep.subr.mxu0 0.0
    %3690 = vmatpush1.msra.mxu0 %v3684
    %3691 = vmatprep.subr.mxu0 0.0
    %3692 = vmatpush1.msra.mxu0 0.0
    %3693 = vmatprep.subr.mxu0 0.0
    %3694 = vmatpush1.msra.mxu0 0.0
    %3695 = vmatprep.subr.mxu0 0.0
    %3696 = vmatpush1.msra.mxu0 0.0
    %3697 = vmatprep.subr.mxu0 0.0
    %3698 = vmatpush1.msra.mxu0 0.0
    %3699 = vmatprep.subr.mxu0 0.0
    %3700 = vmatpush1.msra.mxu0 0.0
    %3701 = vmatprep.subr.mxu0 0.0
    %3702 = vmatpush1.msra.mxu0 0.0
    %3703 = vmatprep.subr.mxu0 0.0
    %3704 = vmatpush1.msra.mxu0 0.0
    %3705 = vmatprep.subr.mxu0 0.0
    %3706 = vmatpush1.msra.mxu0 0.0
    %3707 = vmatprep.subr.mxu0 0.0
    %3708 = vmatpush1.msra.mxu0 0.0
    %3709 = vmatprep.subr.mxu0 0.0
    %3710 = vmatpush1.msra.mxu0 0.0
    %3711 = vmatprep.subr.mxu0 0.0
    %3712 = vmatpush1.msra.mxu0 0.0
    %3713 = vmatprep.subr.mxu0 0.0
    %3714 = vmatpush1.msra.mxu0 0.0
    %3715 = vmatprep.subr.mxu0 0.0
    %3716 = vmatpush1.msra.mxu0 0.0
    %3717 = vmatprep.subr.mxu0 0.0
    %3718 = vmatpush1.msra.mxu0 0.0
    %3719 = vmatprep.subr.mxu0 0.0
    %3720 = vmatpush1.msra.mxu0 0.0
    %3721 = vmatprep.subr.mxu0 0.0
    %3722 = vmatpush1.msra.mxu0 0.0
    %3723 = vmatprep.subr.mxu0 0.0
    %3724 = vmatpush1.msra.mxu0 0.0
    %3725 = vmatprep.subr.mxu0 0.0
    %3726 = vmatpush1.msra.mxu0 0.0
    %3727 = vmatprep.subr.mxu0 0.0
    %3728 = vmatpush1.msra.mxu0 0.0
    %3729 = vmatprep.subr.mxu0 0.0
    %3730 = vmatpush1.msra.mxu0 0.0
    %3731 = vmatprep.subr.mxu0 0.0
    %3732 = vmatpush1.msra.mxu0 0.0
    %3733 = vmatprep.subr.mxu0 0.0
    %3734 = vmatpush1.msra.mxu0 0.0
    %3735 = vmatprep.subr.mxu0 0.0
    %3736 = vmatpush1.msra.mxu0 0.0
    %3737 = vmatprep.subr.mxu0 0.0
    %3738 = vmatpush1.msra.mxu0 0.0
    %3739 = vmatprep.subr.mxu0 0.0
    %3740 = vmatpush1.msra.mxu0 0.0
    %3741 = vmatprep.subr.mxu0 0.0
    %3742 = vmatpush1.msra.mxu0 0.0
    %3743 = vmatprep.subr.mxu0 0.0
    %3744 = vmatpush1.msra.mxu0 0.0
    %3745 = vmatprep.subr.mxu0 0.0
    %3746 = vmatpush1.msra.mxu0 0.0
    %3747 = vmatprep.subr.mxu0 0.0
    %3748 = vmatpush1.msra.mxu0 0.0
    %3749 = vmatprep.subr.mxu0 0.0
    %3750 = vmatpush1.msra.mxu0 0.0
    %3751 = vmatprep.subr.mxu0 0.0
    %3752 = vmatpush1.msra.mxu0 0.0
    %3753 = vmatprep.mubr.f32.mxu0 0.0
    %3754 = vmatmul.mubr.f32.gmra.mrb[0].mxu0 %v3687
    %v3755 = vpop.f32.mrb[0].mxu0
    %v3756 = vadd.f32 0.0, %v3755
    %v3757 = vpop.f32.mrb[0].mxu0
    %3758 = vdwg.mxu0
    %3760 = vrot.lane.b32.xlu0 %v3179, 96
    %v3761 = vpop.permute.xlu0 %3760
    %v3764 = vsel %vm968, %v3681, 0
    %3766 = vmatprep.subr.mxu0 0.0
    %3767 = vmatpush1.msra.mxu0 %v3761
    %3768 = vmatprep.subr.mxu0 0.0
    %3769 = vmatpush1.msra.mxu0 0.0
    %3770 = vmatprep.subr.mxu0 0.0
    %3771 = vmatpush1.msra.mxu0 0.0
    %3772 = vmatprep.subr.mxu0 0.0
    %3773 = vmatpush1.msra.mxu0 0.0
    %3774 = vmatprep.subr.mxu0 0.0
    %3775 = vmatpush1.msra.mxu0 0.0
    %3776 = vmatprep.subr.mxu0 0.0
    %3777 = vmatpush1.msra.mxu0 0.0
    %3778 = vmatprep.subr.mxu0 0.0
    %3779 = vmatpush1.msra.mxu0 0.0
    %3780 = vmatprep.subr.mxu0 0.0
    %3781 = vmatpush1.msra.mxu0 0.0
    %3782 = vmatprep.subr.mxu0 0.0
    %3783 = vmatpush1.msra.mxu0 0.0
    %3784 = vmatprep.subr.mxu0 0.0
    %3785 = vmatpush1.msra.mxu0 0.0
    %3786 = vmatprep.subr.mxu0 0.0
    %3787 = vmatpush1.msra.mxu0 0.0
    %3788 = vmatprep.subr.mxu0 0.0
    %3789 = vmatpush1.msra.mxu0 0.0
    %3790 = vmatprep.subr.mxu0 0.0
    %3791 = vmatpush1.msra.mxu0 0.0
    %3792 = vmatprep.subr.mxu0 0.0
    %3793 = vmatpush1.msra.mxu0 0.0
    %3794 = vmatprep.subr.mxu0 0.0
    %3795 = vmatpush1.msra.mxu0 0.0
    %3796 = vmatprep.subr.mxu0 0.0
    %3797 = vmatpush1.msra.mxu0 0.0
    %3798 = vmatprep.subr.mxu0 0.0
    %3799 = vmatpush1.msra.mxu0 0.0
    %3800 = vmatprep.subr.mxu0 0.0
    %3801 = vmatpush1.msra.mxu0 0.0
    %3802 = vmatprep.subr.mxu0 0.0
    %3803 = vmatpush1.msra.mxu0 0.0
    %3804 = vmatprep.subr.mxu0 0.0
    %3805 = vmatpush1.msra.mxu0 0.0
    %3806 = vmatprep.subr.mxu0 0.0
    %3807 = vmatpush1.msra.mxu0 0.0
    %3808 = vmatprep.subr.mxu0 0.0
    %3809 = vmatpush1.msra.mxu0 0.0
    %3810 = vmatprep.subr.mxu0 0.0
    %3811 = vmatpush1.msra.mxu0 0.0
    %3812 = vmatprep.subr.mxu0 0.0
    %3813 = vmatpush1.msra.mxu0 0.0
    %3814 = vmatprep.subr.mxu0 0.0
    %3815 = vmatpush1.msra.mxu0 0.0
    %3816 = vmatprep.subr.mxu0 0.0
    %3817 = vmatpush1.msra.mxu0 0.0
    %3818 = vmatprep.subr.mxu0 0.0
    %3819 = vmatpush1.msra.mxu0 0.0
    %3820 = vmatprep.subr.mxu0 0.0
    %3821 = vmatpush1.msra.mxu0 0.0
    %3822 = vmatprep.subr.mxu0 0.0
    %3823 = vmatpush1.msra.mxu0 0.0
    %3824 = vmatprep.subr.mxu0 0.0
    %3825 = vmatpush1.msra.mxu0 0.0
    %3826 = vmatprep.subr.mxu0 0.0
    %3827 = vmatpush1.msra.mxu0 0.0
    %3828 = vmatprep.subr.mxu0 0.0
    %3829 = vmatpush1.msra.mxu0 0.0
    %3830 = vmatprep.mubr.f32.mxu0 0.0
    %3831 = vmatmul.mubr.f32.gmra.mrb[0].mxu0 %v3764
    %v3832 = vpop.f32.mrb[0].mxu0
    %v3833 = vadd.f32 0.0, %v3832
    %v3834 = vpop.f32.mrb[0].mxu0
    %3835 = vdwg.mxu0
    %3836 = vrot.lane.b32.xlu0 %v2858, 64
    %v3837 = vpop.permute.xlu0 %3836
    %3838 = vrot.lane.b32.xlu0 %v3018, 64
    %v3839 = vpop.permute.xlu0 %3838
    %v3840 = vsel %vm813, %v3837, 0
    %v3842 = vsel %vm813, %v3839, 0
    %3844 = vmatprep.subr.mxu0 0.0
    %3845 = vmatpush1.xpose.msra.mxu0 %v3842
    %3846 = vmatprep.subr.mxu0 0.0
    %3847 = vmatpush1.xpose.msra.mxu0 0.0
    %3848 = vmatprep.subr.mxu0 0.0
    %3849 = vmatpush1.xpose.msra.mxu0 0.0
    %3850 = vmatprep.subr.mxu0 0.0
    %3851 = vmatpush1.xpose.msra.mxu0 0.0
    %3852 = vmatprep.subr.mxu0 0.0
    %3853 = vmatpush1.xpose.msra.mxu0 0.0
    %3854 = vmatprep.subr.mxu0 0.0
    %3855 = vmatpush1.xpose.msra.mxu0 0.0
    %3856 = vmatprep.subr.mxu0 0.0
    %3857 = vmatpush1.xpose.msra.mxu0 0.0
    %3858 = vmatprep.subr.mxu0 0.0
    %3859 = vmatpush1.xpose.msra.mxu0 0.0
    %3860 = vmatprep.subr.mxu0 0.0
    %3861 = vmatpush1.xpose.msra.mxu0 0.0
    %3862 = vmatprep.subr.mxu0 0.0
    %3863 = vmatpush1.xpose.msra.mxu0 0.0
    %3864 = vmatprep.subr.mxu0 0.0
    %3865 = vmatpush1.xpose.msra.mxu0 0.0
    %3866 = vmatprep.subr.mxu0 0.0
    %3867 = vmatpush1.xpose.msra.mxu0 0.0
    %3868 = vmatprep.subr.mxu0 0.0
    %3869 = vmatpush1.xpose.msra.mxu0 0.0
    %3870 = vmatprep.subr.mxu0 0.0
    %3871 = vmatpush1.xpose.msra.mxu0 0.0
    %3872 = vmatprep.subr.mxu0 0.0
    %3873 = vmatpush1.xpose.msra.mxu0 0.0
    %3874 = vmatprep.subr.mxu0 0.0
    %3875 = vmatpush1.xpose.msra.mxu0 0.0
    %3876 = vmatprep.subr.mxu0 0.0
    %3877 = vmatpush1.xpose.msra.mxu0 0.0
    %3878 = vmatprep.subr.mxu0 0.0
    %3879 = vmatpush1.xpose.msra.mxu0 0.0
    %3880 = vmatprep.subr.mxu0 0.0
    %3881 = vmatpush1.xpose.msra.mxu0 0.0
    %3882 = vmatprep.subr.mxu0 0.0
    %3883 = vmatpush1.xpose.msra.mxu0 0.0
    %3884 = vmatprep.subr.mxu0 0.0
    %3885 = vmatpush1.xpose.msra.mxu0 0.0
    %3886 = vmatprep.subr.mxu0 0.0
    %3887 = vmatpush1.xpose.msra.mxu0 0.0
    %3888 = vmatprep.subr.mxu0 0.0
    %3889 = vmatpush1.xpose.msra.mxu0 0.0
    %3890 = vmatprep.subr.mxu0 0.0
    %3891 = vmatpush1.xpose.msra.mxu0 0.0
    %3892 = vmatprep.subr.mxu0 0.0
    %3893 = vmatpush1.xpose.msra.mxu0 0.0
    %3894 = vmatprep.subr.mxu0 0.0
    %3895 = vmatpush1.xpose.msra.mxu0 0.0
    %3896 = vmatprep.subr.mxu0 0.0
    %3897 = vmatpush1.xpose.msra.mxu0 0.0
    %3898 = vmatprep.subr.mxu0 0.0
    %3899 = vmatpush1.xpose.msra.mxu0 0.0
    %3900 = vmatprep.subr.mxu0 0.0
    %3901 = vmatpush1.xpose.msra.mxu0 0.0
    %3902 = vmatprep.subr.mxu0 0.0
    %3903 = vmatpush1.xpose.msra.mxu0 0.0
    %3904 = vmatprep.subr.mxu0 0.0
    %3905 = vmatpush1.xpose.msra.mxu0 0.0
    %3906 = vmatprep.subr.mxu0 0.0
    %3907 = vmatpush1.xpose.msra.mxu0 0.0
    %3908 = vmatprep.mubr.f32.mxu0 0.0
    %3909 = vmatmul.mubr.f32.gmra.mrb[0].mxu0 %v3840
    %v3910 = vpop.f32.mrb[0].mxu0
    %v3911 = vadd.f32 0.0, %v3910
    %v3912 = vpop.f32.mrb[0].mxu0
    %3913 = vdwg.mxu0
    %3914 = vrot.lane.b32.xlu0 %v2859, 64
    %v3915 = vpop.permute.xlu0 %3914
    %3916 = vrot.lane.b32.xlu0 %v3019, 64
    %v3917 = vpop.permute.xlu0 %3916
    %v3918 = vsel %vm813, %v3915, 0
    %v3920 = vsel %vm813, %v3917, 0
    %3922 = vmatprep.subr.mxu0 0.0
    %3923 = vmatpush1.xpose.msra.mxu0 %v3920
    %3924 = vmatprep.subr.mxu0 0.0
    %3925 = vmatpush1.xpose.msra.mxu0 0.0
    %3926 = vmatprep.subr.mxu0 0.0
    %3927 = vmatpush1.xpose.msra.mxu0 0.0
    %3928 = vmatprep.subr.mxu0 0.0
    %3929 = vmatpush1.xpose.msra.mxu0 0.0
    %3930 = vmatprep.subr.mxu0 0.0
    %3931 = vmatpush1.xpose.msra.mxu0 0.0
    %3932 = vmatprep.subr.mxu0 0.0
    %3933 = vmatpush1.xpose.msra.mxu0 0.0
    %3934 = vmatprep.subr.mxu0 0.0
    %3935 = vmatpush1.xpose.msra.mxu0 0.0
    %3936 = vmatprep.subr.mxu0 0.0
    %3937 = vmatpush1.xpose.msra.mxu0 0.0
    %3938 = vmatprep.subr.mxu0 0.0
    %3939 = vmatpush1.xpose.msra.mxu0 0.0
    %3940 = vmatprep.subr.mxu0 0.0
    %3941 = vmatpush1.xpose.msra.mxu0 0.0
    %3942 = vmatprep.subr.mxu0 0.0
    %3943 = vmatpush1.xpose.msra.mxu0 0.0
    %3944 = vmatprep.subr.mxu0 0.0
    %3945 = vmatpush1.xpose.msra.mxu0 0.0
    %3946 = vmatprep.subr.mxu0 0.0
    %3947 = vmatpush1.xpose.msra.mxu0 0.0
    %3948 = vmatprep.subr.mxu0 0.0
    %3949 = vmatpush1.xpose.msra.mxu0 0.0
    %3950 = vmatprep.subr.mxu0 0.0
    %3951 = vmatpush1.xpose.msra.mxu0 0.0
    %3952 = vmatprep.subr.mxu0 0.0
    %3953 = vmatpush1.xpose.msra.mxu0 0.0
    %3954 = vmatprep.subr.mxu0 0.0
    %3955 = vmatpush1.xpose.msra.mxu0 0.0
    %3956 = vmatprep.subr.mxu0 0.0
    %3957 = vmatpush1.xpose.msra.mxu0 0.0
    %3958 = vmatprep.subr.mxu0 0.0
    %3959 = vmatpush1.xpose.msra.mxu0 0.0
    %3960 = vmatprep.subr.mxu0 0.0
    %3961 = vmatpush1.xpose.msra.mxu0 0.0
    %3962 = vmatprep.subr.mxu0 0.0
    %3963 = vmatpush1.xpose.msra.mxu0 0.0
    %3964 = vmatprep.subr.mxu0 0.0
    %3965 = vmatpush1.xpose.msra.mxu0 0.0
    %3966 = vmatprep.subr.mxu0 0.0
    %3967 = vmatpush1.xpose.msra.mxu0 0.0
    %3968 = vmatprep.subr.mxu0 0.0
    %3969 = vmatpush1.xpose.msra.mxu0 0.0
    %3970 = vmatprep.subr.mxu0 0.0
    %3971 = vmatpush1.xpose.msra.mxu0 0.0
    %3972 = vmatprep.subr.mxu0 0.0
    %3973 = vmatpush1.xpose.msra.mxu0 0.0
    %3974 = vmatprep.subr.mxu0 0.0
    %3975 = vmatpush1.xpose.msra.mxu0 0.0
    %3976 = vmatprep.subr.mxu0 0.0
    %3977 = vmatpush1.xpose.msra.mxu0 0.0
    %3978 = vmatprep.subr.mxu0 0.0
    %3979 = vmatpush1.xpose.msra.mxu0 0.0
    %3980 = vmatprep.subr.mxu0 0.0
    %3981 = vmatpush1.xpose.msra.mxu0 0.0
    %3982 = vmatprep.subr.mxu0 0.0
    %3983 = vmatpush1.xpose.msra.mxu0 0.0
    %3984 = vmatprep.subr.mxu0 0.0
    %3985 = vmatpush1.xpose.msra.mxu0 0.0
    %3986 = vmatprep.mubr.f32.mxu0 0.0
    %3987 = vmatmul.mubr.f32.gmra.mrb[0].mxu0 %v3918
    %v3988 = vpop.f32.mrb[0].mxu0
    %v3989 = vadd.f32 0.0, %v3988
    %v3990 = vpop.f32.mrb[0].mxu0
    %3991 = vdwg.mxu0
    %v3992 = vmul.f32 %v3911, 0.17677669
    %v3993 = vmul.f32 %v3989, 0.17677669
    %v3994 = vsel %vm968, %v3992, -inf
    %3995 = vmax.xlane.f32.xlu0 %v3994
    %v3996 = vpop.xlane.xlu0 %3995
    %v3997 = vsel %vm968, %v3993, -inf
    %3998 = vmax.xlane.f32.xlu0 %v3997
    %v3999 = vpop.xlane.xlu0 %3998
    %v4000 = vsub.f32 %v3992, %v3996
    %v4001 = vsub.f32 %v3993, %v3999
    %v4002 = vmul.f32 %v4000, 1.442695
    %v4003 = vpow.pop %v4002
    %v4004 = vmul.f32 %v4001, 1.442695
    %v4005 = vpow.pop %v4004
    %v4006 = vsel %vm968, %v4003, 0.0
    %4007 = vadd.xlane.f32.xlu0 %v4006
    %v4008 = vpop.xlane.xlu0 %4007
    %v4009 = vsel %vm968, %v4005, 0.0
    %4010 = vadd.xlane.f32.xlu0 %v4009
    %v4011 = vpop.xlane.xlu0 %4010
    %v4012 = vrcp.pop %v4008
    %v4013 = vmul.f32 %v4003, %v4012
    %v4014 = vrcp.pop %v4011
    %v4015 = vmul.f32 %v4005, %v4014
    %4016 = vrot.lane.b32.xlu0 %v3178, 64
    %v4017 = vpop.permute.xlu0 %4016
    %v4020 = vsel %vm968, %v4013, 0
    %4022 = vmatprep.subr.mxu0 0.0
    %4023 = vmatpush1.msra.mxu0 %v4017
    %4024 = vmatprep.subr.mxu0 0.0
    %4025 = vmatpush1.msra.mxu0 0.0
    %4026 = vmatprep.subr.mxu0 0.0
    %4027 = vmatpush1.msra.mxu0 0.0
    %4028 = vmatprep.subr.mxu0 0.0
    %4029 = vmatpush1.msra.mxu0 0.0
    %4030 = vmatprep.subr.mxu0 0.0
    %4031 = vmatpush1.msra.mxu0 0.0
    %4032 = vmatprep.subr.mxu0 0.0
    %4033 = vmatpush1.msra.mxu0 0.0
    %4034 = vmatprep.subr.mxu0 0.0
    %4035 = vmatpush1.msra.mxu0 0.0
    %4036 = vmatprep.subr.mxu0 0.0
    %4037 = vmatpush1.msra.mxu0 0.0
    %4038 = vmatprep.subr.mxu0 0.0
    %4039 = vmatpush1.msra.mxu0 0.0
    %4040 = vmatprep.subr.mxu0 0.0
    %4041 = vmatpush1.msra.mxu0 0.0
    %4042 = vmatprep.subr.mxu0 0.0
    %4043 = vmatpush1.msra.mxu0 0.0
    %4044 = vmatprep.subr.mxu0 0.0
    %4045 = vmatpush1.msra.mxu0 0.0
    %4046 = vmatprep.subr.mxu0 0.0
    %4047 = vmatpush1.msra.mxu0 0.0
    %4048 = vmatprep.subr.mxu0 0.0
    %4049 = vmatpush1.msra.mxu0 0.0
    %4050 = vmatprep.subr.mxu0 0.0
    %4051 = vmatpush1.msra.mxu0 0.0
    %4052 = vmatprep.subr.mxu0 0.0
    %4053 = vmatpush1.msra.mxu0 0.0
    %4054 = vmatprep.subr.mxu0 0.0
    %4055 = vmatpush1.msra.mxu0 0.0
    %4056 = vmatprep.subr.mxu0 0.0
    %4057 = vmatpush1.msra.mxu0 0.0
    %4058 = vmatprep.subr.mxu0 0.0
    %4059 = vmatpush1.msra.mxu0 0.0
    %4060 = vmatprep.subr.mxu0 0.0
    %4061 = vmatpush1.msra.mxu0 0.0
    %4062 = vmatprep.subr.mxu0 0.0
    %4063 = vmatpush1.msra.mxu0 0.0
    %4064 = vmatprep.subr.mxu0 0.0
    %4065 = vmatpush1.msra.mxu0 0.0
    %4066 = vmatprep.subr.mxu0 0.0
    %4067 = vmatpush1.msra.mxu0 0.0
    %4068 = vmatprep.subr.mxu0 0.0
    %4069 = vmatpush1.msra.mxu0 0.0
    %4070 = vmatprep.subr.mxu0 0.0
    %4071 = vmatpush1.msra.mxu0 0.0
    %4072 = vmatprep.subr.mxu0 0.0
    %4073 = vmatpush1.msra.mxu0 0.0
    %4074 = vmatprep.subr.mxu0 0.0
    %4075 = vmatpush1.msra.mxu0 0.0
    %4076 = vmatprep.subr.mxu0 0.0
    %4077 = vmatpush1.msra.mxu0 0.0
    %4078 = vmatprep.subr.mxu0 0.0
    %4079 = vmatpush1.msra.mxu0 0.0
    %4080 = vmatprep.subr.mxu0 0.0
    %4081 = vmatpush1.msra.mxu0 0.0
    %4082 = vmatprep.subr.mxu0 0.0
    %4083 = vmatpush1.msra.mxu0 0.0
    %4084 = vmatprep.subr.mxu0 0.0
    %4085 = vmatpush1.msra.mxu0 0.0
    %4086 = vmatprep.mubr.f32.mxu0 0.0
    %4087 = vmatmul.mubr.f32.gmra.mrb[0].mxu0 %v4020
    %v4088 = vpop.f32.mrb[0].mxu0
    %v4089 = vadd.f32 0.0, %v4088
    %v4090 = vpop.f32.mrb[0].mxu0
    %4091 = vdwg.mxu0
    %4092 = vrot.lane.b32.xlu0 %v3179, 64
    %v4093 = vpop.permute.xlu0 %4092
    %v4096 = vsel %vm968, %v4015, 0
    %4098 = vmatprep.subr.mxu0 0.0
    %4099 = vmatpush1.msra.mxu0 %v4093
    %4100 = vmatprep.subr.mxu0 0.0
    %4101 = vmatpush1.msra.mxu0 0.0
    %4102 = vmatprep.subr.mxu0 0.0
    %4103 = vmatpush1.msra.mxu0 0.0
    %4104 = vmatprep.subr.mxu0 0.0
    %4105 = vmatpush1.msra.mxu0 0.0
    %4106 = vmatprep.subr.mxu0 0.0
    %4107 = vmatpush1.msra.mxu0 0.0
    %4108 = vmatprep.subr.mxu0 0.0
    %4109 = vmatpush1.msra.mxu0 0.0
    %4110 = vmatprep.subr.mxu0 0.0
    %4111 = vmatpush1.msra.mxu0 0.0
    %4112 = vmatprep.subr.mxu0 0.0
    %4113 = vmatpush1.msra.mxu0 0.0
    %4114 = vmatprep.subr.mxu0 0.0
    %4115 = vmatpush1.msra.mxu0 0.0
    %4116 = vmatprep.subr.mxu0 0.0
    %4117 = vmatpush1.msra.mxu0 0.0
    %4118 = vmatprep.subr.mxu0 0.0
    %4119 = vmatpush1.msra.mxu0 0.0
    %4120 = vmatprep.subr.mxu0 0.0
    %4121 = vmatpush1.msra.mxu0 0.0
    %4122 = vmatprep.subr.mxu0 0.0
    %4123 = vmatpush1.msra.mxu0 0.0
    %4124 = vmatprep.subr.mxu0 0.0
    %4125 = vmatpush1.msra.mxu0 0.0
    %4126 = vmatprep.subr.mxu0 0.0
    %4127 = vmatpush1.msra.mxu0 0.0
    %4128 = vmatprep.subr.mxu0 0.0
    %4129 = vmatpush1.msra.mxu0 0.0
    %4130 = vmatprep.subr.mxu0 0.0
    %4131 = vmatpush1.msra.mxu0 0.0
    %4132 = vmatprep.subr.mxu0 0.0
    %4133 = vmatpush1.msra.mxu0 0.0
    %4134 = vmatprep.subr.mxu0 0.0
    %4135 = vmatpush1.msra.mxu0 0.0
    %4136 = vmatprep.subr.mxu0 0.0
    %4137 = vmatpush1.msra.mxu0 0.0
    %4138 = vmatprep.subr.mxu0 0.0
    %4139 = vmatpush1.msra.mxu0 0.0
    %4140 = vmatprep.subr.mxu0 0.0
    %4141 = vmatpush1.msra.mxu0 0.0
    %4142 = vmatprep.subr.mxu0 0.0
    %4143 = vmatpush1.msra.mxu0 0.0
    %4144 = vmatprep.subr.mxu0 0.0
    %4145 = vmatpush1.msra.mxu0 0.0
    %4146 = vmatprep.subr.mxu0 0.0
    %4147 = vmatpush1.msra.mxu0 0.0
    %4148 = vmatprep.subr.mxu0 0.0
    %4149 = vmatpush1.msra.mxu0 0.0
    %4150 = vmatprep.subr.mxu0 0.0
    %4151 = vmatpush1.msra.mxu0 0.0
    %4152 = vmatprep.subr.mxu0 0.0
    %4153 = vmatpush1.msra.mxu0 0.0
    %4154 = vmatprep.subr.mxu0 0.0
    %4155 = vmatpush1.msra.mxu0 0.0
    %4156 = vmatprep.subr.mxu0 0.0
    %4157 = vmatpush1.msra.mxu0 0.0
    %4158 = vmatprep.subr.mxu0 0.0
    %4159 = vmatpush1.msra.mxu0 0.0
    %4160 = vmatprep.subr.mxu0 0.0
    %4161 = vmatpush1.msra.mxu0 0.0
    %4162 = vmatprep.mubr.f32.mxu0 0.0
    %4163 = vmatmul.mubr.f32.gmra.mrb[0].mxu0 %v4096
    %v4164 = vpop.f32.mrb[0].mxu0
    %v4165 = vadd.f32 0.0, %v4164
    %v4166 = vpop.f32.mrb[0].mxu0
    %4167 = vdwg.mxu0
    %4168 = vrot.lane.b32.xlu0 %v2858, 32
    %v4169 = vpop.permute.xlu0 %4168
    %4170 = vrot.lane.b32.xlu0 %v3018, 32
    %v4171 = vpop.permute.xlu0 %4170
    %v4172 = vsel %vm813, %v4169, 0
    %v4174 = vsel %vm813, %v4171, 0
    %4176 = vmatprep.subr.mxu0 0.0
    %4177 = vmatpush1.xpose.msra.mxu0 %v4174
    %4178 = vmatprep.subr.mxu0 0.0
    %4179 = vmatpush1.xpose.msra.mxu0 0.0
    %4180 = vmatprep.subr.mxu0 0.0
    %4181 = vmatpush1.xpose.msra.mxu0 0.0
    %4182 = vmatprep.subr.mxu0 0.0
    %4183 = vmatpush1.xpose.msra.mxu0 0.0
    %4184 = vmatprep.subr.mxu0 0.0
    %4185 = vmatpush1.xpose.msra.mxu0 0.0
    %4186 = vmatprep.subr.mxu0 0.0
    %4187 = vmatpush1.xpose.msra.mxu0 0.0
    %4188 = vmatprep.subr.mxu0 0.0
    %4189 = vmatpush1.xpose.msra.mxu0 0.0
    %4190 = vmatprep.subr.mxu0 0.0
    %4191 = vmatpush1.xpose.msra.mxu0 0.0
    %4192 = vmatprep.subr.mxu0 0.0
    %4193 = vmatpush1.xpose.msra.mxu0 0.0
    %4194 = vmatprep.subr.mxu0 0.0
    %4195 = vmatpush1.xpose.msra.mxu0 0.0
    %4196 = vmatprep.subr.mxu0 0.0
    %4197 = vmatpush1.xpose.msra.mxu0 0.0
    %4198 = vmatprep.subr.mxu0 0.0
    %4199 = vmatpush1.xpose.msra.mxu0 0.0
    %4200 = vmatprep.subr.mxu0 0.0
    %4201 = vmatpush1.xpose.msra.mxu0 0.0
    %4202 = vmatprep.subr.mxu0 0.0
    %4203 = vmatpush1.xpose.msra.mxu0 0.0
    %4204 = vmatprep.subr.mxu0 0.0
    %4205 = vmatpush1.xpose.msra.mxu0 0.0
    %4206 = vmatprep.subr.mxu0 0.0
    %4207 = vmatpush1.xpose.msra.mxu0 0.0
    %4208 = vmatprep.subr.mxu0 0.0
    %4209 = vmatpush1.xpose.msra.mxu0 0.0
    %4210 = vmatprep.subr.mxu0 0.0
    %4211 = vmatpush1.xpose.msra.mxu0 0.0
    %4212 = vmatprep.subr.mxu0 0.0
    %4213 = vmatpush1.xpose.msra.mxu0 0.0
    %4214 = vmatprep.subr.mxu0 0.0
    %4215 = vmatpush1.xpose.msra.mxu0 0.0
    %4216 = vmatprep.subr.mxu0 0.0
    %4217 = vmatpush1.xpose.msra.mxu0 0.0
    %4218 = vmatprep.subr.mxu0 0.0
    %4219 = vmatpush1.xpose.msra.mxu0 0.0
    %4220 = vmatprep.subr.mxu0 0.0
    %4221 = vmatpush1.xpose.msra.mxu0 0.0
    %4222 = vmatprep.subr.mxu0 0.0
    %4223 = vmatpush1.xpose.msra.mxu0 0.0
    %4224 = vmatprep.subr.mxu0 0.0
    %4225 = vmatpush1.xpose.msra.mxu0 0.0
    %4226 = vmatprep.subr.mxu0 0.0
    %4227 = vmatpush1.xpose.msra.mxu0 0.0
    %4228 = vmatprep.subr.mxu0 0.0
    %4229 = vmatpush1.xpose.msra.mxu0 0.0
    %4230 = vmatprep.subr.mxu0 0.0
    %4231 = vmatpush1.xpose.msra.mxu0 0.0
    %4232 = vmatprep.subr.mxu0 0.0
    %4233 = vmatpush1.xpose.msra.mxu0 0.0
    %4234 = vmatprep.subr.mxu0 0.0
    %4235 = vmatpush1.xpose.msra.mxu0 0.0
    %4236 = vmatprep.subr.mxu0 0.0
    %4237 = vmatpush1.xpose.msra.mxu0 0.0
    %4238 = vmatprep.subr.mxu0 0.0
    %4239 = vmatpush1.xpose.msra.mxu0 0.0
    %4240 = vmatprep.mubr.f32.mxu0 0.0
    %4241 = vmatmul.mubr.f32.gmra.mrb[0].mxu0 %v4172
    %v4242 = vpop.f32.mrb[0].mxu0
    %v4243 = vadd.f32 0.0, %v4242
    %v4244 = vpop.f32.mrb[0].mxu0
    %4245 = vdwg.mxu0
    %4246 = vrot.lane.b32.xlu0 %v2859, 32
    %v4247 = vpop.permute.xlu0 %4246
    %4248 = vrot.lane.b32.xlu0 %v3019, 32
    %v4249 = vpop.permute.xlu0 %4248
    %v4250 = vsel %vm813, %v4247, 0
    %v4252 = vsel %vm813, %v4249, 0
    %4254 = vmatprep.subr.mxu0 0.0
    %4255 = vmatpush1.xpose.msra.mxu0 %v4252
    %4256 = vmatprep.subr.mxu0 0.0
    %4257 = vmatpush1.xpose.msra.mxu0 0.0
    %4258 = vmatprep.subr.mxu0 0.0
    %4259 = vmatpush1.xpose.msra.mxu0 0.0
    %4260 = vmatprep.subr.mxu0 0.0
    %4261 = vmatpush1.xpose.msra.mxu0 0.0
    %4262 = vmatprep.subr.mxu0 0.0
    %4263 = vmatpush1.xpose.msra.mxu0 0.0
    %4264 = vmatprep.subr.mxu0 0.0
    %4265 = vmatpush1.xpose.msra.mxu0 0.0
    %4266 = vmatprep.subr.mxu0 0.0
    %4267 = vmatpush1.xpose.msra.mxu0 0.0
    %4268 = vmatprep.subr.mxu0 0.0
    %4269 = vmatpush1.xpose.msra.mxu0 0.0
    %4270 = vmatprep.subr.mxu0 0.0
    %4271 = vmatpush1.xpose.msra.mxu0 0.0
    %4272 = vmatprep.subr.mxu0 0.0
    %4273 = vmatpush1.xpose.msra.mxu0 0.0
    %4274 = vmatprep.subr.mxu0 0.0
    %4275 = vmatpush1.xpose.msra.mxu0 0.0
    %4276 = vmatprep.subr.mxu0 0.0
    %4277 = vmatpush1.xpose.msra.mxu0 0.0
    %4278 = vmatprep.subr.mxu0 0.0
    %4279 = vmatpush1.xpose.msra.mxu0 0.0
    %4280 = vmatprep.subr.mxu0 0.0
    %4281 = vmatpush1.xpose.msra.mxu0 0.0
    %4282 = vmatprep.subr.mxu0 0.0
    %4283 = vmatpush1.xpose.msra.mxu0 0.0
    %4284 = vmatprep.subr.mxu0 0.0
    %4285 = vmatpush1.xpose.msra.mxu0 0.0
    %4286 = vmatprep.subr.mxu0 0.0
    %4287 = vmatpush1.xpose.msra.mxu0 0.0
    %4288 = vmatprep.subr.mxu0 0.0
    %4289 = vmatpush1.xpose.msra.mxu0 0.0
    %4290 = vmatprep.subr.mxu0 0.0
    %4291 = vmatpush1.xpose.msra.mxu0 0.0
    %4292 = vmatprep.subr.mxu0 0.0
    %4293 = vmatpush1.xpose.msra.mxu0 0.0
    %4294 = vmatprep.subr.mxu0 0.0
    %4295 = vmatpush1.xpose.msra.mxu0 0.0
    %4296 = vmatprep.subr.mxu0 0.0
    %4297 = vmatpush1.xpose.msra.mxu0 0.0
    %4298 = vmatprep.subr.mxu0 0.0
    %4299 = vmatpush1.xpose.msra.mxu0 0.0
    %4300 = vmatprep.subr.mxu0 0.0
    %4301 = vmatpush1.xpose.msra.mxu0 0.0
    %4302 = vmatprep.subr.mxu0 0.0
    %4303 = vmatpush1.xpose.msra.mxu0 0.0
    %4304 = vmatprep.subr.mxu0 0.0
    %4305 = vmatpush1.xpose.msra.mxu0 0.0
    %4306 = vmatprep.subr.mxu0 0.0
    %4307 = vmatpush1.xpose.msra.mxu0 0.0
    %4308 = vmatprep.subr.mxu0 0.0
    %4309 = vmatpush1.xpose.msra.mxu0 0.0
    %4310 = vmatprep.subr.mxu0 0.0
    %4311 = vmatpush1.xpose.msra.mxu0 0.0
    %4312 = vmatprep.subr.mxu0 0.0
    %4313 = vmatpush1.xpose.msra.mxu0 0.0
    %4314 = vmatprep.subr.mxu0 0.0
    %4315 = vmatpush1.xpose.msra.mxu0 0.0
    %4316 = vmatprep.subr.mxu0 0.0
    %4317 = vmatpush1.xpose.msra.mxu0 0.0
    %4318 = vmatprep.mubr.f32.mxu0 0.0
    %4319 = vmatmul.mubr.f32.gmra.mrb[0].mxu0 %v4250
    %v4320 = vpop.f32.mrb[0].mxu0
    %v4321 = vadd.f32 0.0, %v4320
    %v4322 = vpop.f32.mrb[0].mxu0
    %4323 = vdwg.mxu0
    %v4324 = vmul.f32 %v4243, 0.17677669
    %v4325 = vmul.f32 %v4321, 0.17677669
    %v4326 = vsel %vm968, %v4324, -inf
    %4327 = vmax.xlane.f32.xlu0 %v4326
    %v4328 = vpop.xlane.xlu0 %4327
    %v4329 = vsel %vm968, %v4325, -inf
    %4330 = vmax.xlane.f32.xlu0 %v4329
    %v4331 = vpop.xlane.xlu0 %4330
    %v4332 = vsub.f32 %v4324, %v4328
    %v4333 = vsub.f32 %v4325, %v4331
    %v4334 = vmul.f32 %v4332, 1.442695
    %v4335 = vpow.pop %v4334
    %v4336 = vmul.f32 %v4333, 1.442695
    %v4337 = vpow.pop %v4336
    %v4338 = vsel %vm968, %v4335, 0.0
    %4339 = vadd.xlane.f32.xlu0 %v4338
    %v4340 = vpop.xlane.xlu0 %4339
    %v4341 = vsel %vm968, %v4337, 0.0
    %4342 = vadd.xlane.f32.xlu0 %v4341
    %v4343 = vpop.xlane.xlu0 %4342
    %v4344 = vrcp.pop %v4340
    %v4345 = vmul.f32 %v4335, %v4344
    %v4346 = vrcp.pop %v4343
    %v4347 = vmul.f32 %v4337, %v4346
    %4348 = vrot.lane.b32.xlu0 %v3178, 32
    %v4349 = vpop.permute.xlu0 %4348
    %v4352 = vsel %vm968, %v4345, 0
    %4354 = vmatprep.subr.mxu0 0.0
    %4355 = vmatpush1.msra.mxu0 %v4349
    %4356 = vmatprep.subr.mxu0 0.0
    %4357 = vmatpush1.msra.mxu0 0.0
    %4358 = vmatprep.subr.mxu0 0.0
    %4359 = vmatpush1.msra.mxu0 0.0
    %4360 = vmatprep.subr.mxu0 0.0
    %4361 = vmatpush1.msra.mxu0 0.0
    %4362 = vmatprep.subr.mxu0 0.0
    %4363 = vmatpush1.msra.mxu0 0.0
    %4364 = vmatprep.subr.mxu0 0.0
    %4365 = vmatpush1.msra.mxu0 0.0
    %4366 = vmatprep.subr.mxu0 0.0
    %4367 = vmatpush1.msra.mxu0 0.0
    %4368 = vmatprep.subr.mxu0 0.0
    %4369 = vmatpush1.msra.mxu0 0.0
    %4370 = vmatprep.subr.mxu0 0.0
    %4371 = vmatpush1.msra.mxu0 0.0
    %4372 = vmatprep.subr.mxu0 0.0
    %4373 = vmatpush1.msra.mxu0 0.0
    %4374 = vmatprep.subr.mxu0 0.0
    %4375 = vmatpush1.msra.mxu0 0.0
    %4376 = vmatprep.subr.mxu0 0.0
    %4377 = vmatpush1.msra.mxu0 0.0
    %4378 = vmatprep.subr.mxu0 0.0
    %4379 = vmatpush1.msra.mxu0 0.0
    %4380 = vmatprep.subr.mxu0 0.0
    %4381 = vmatpush1.msra.mxu0 0.0
    %4382 = vmatprep.subr.mxu0 0.0
    %4383 = vmatpush1.msra.mxu0 0.0
    %4384 = vmatprep.subr.mxu0 0.0
    %4385 = vmatpush1.msra.mxu0 0.0
    %4386 = vmatprep.subr.mxu0 0.0
    %4387 = vmatpush1.msra.mxu0 0.0
    %4388 = vmatprep.subr.mxu0 0.0
    %4389 = vmatpush1.msra.mxu0 0.0
    %4390 = vmatprep.subr.mxu0 0.0
    %4391 = vmatpush1.msra.mxu0 0.0
    %4392 = vmatprep.subr.mxu0 0.0
    %4393 = vmatpush1.msra.mxu0 0.0
    %4394 = vmatprep.subr.mxu0 0.0
    %4395 = vmatpush1.msra.mxu0 0.0
    %4396 = vmatprep.subr.mxu0 0.0
    %4397 = vmatpush1.msra.mxu0 0.0
    %4398 = vmatprep.subr.mxu0 0.0
    %4399 = vmatpush1.msra.mxu0 0.0
    %4400 = vmatprep.subr.mxu0 0.0
    %4401 = vmatpush1.msra.mxu0 0.0
    %4402 = vmatprep.subr.mxu0 0.0
    %4403 = vmatpush1.msra.mxu0 0.0
    %4404 = vmatprep.subr.mxu0 0.0
    %4405 = vmatpush1.msra.mxu0 0.0
    %4406 = vmatprep.subr.mxu0 0.0
    %4407 = vmatpush1.msra.mxu0 0.0
    %4408 = vmatprep.subr.mxu0 0.0
    %4409 = vmatpush1.msra.mxu0 0.0
    %4410 = vmatprep.subr.mxu0 0.0
    %4411 = vmatpush1.msra.mxu0 0.0
    %4412 = vmatprep.subr.mxu0 0.0
    %4413 = vmatpush1.msra.mxu0 0.0
    %4414 = vmatprep.subr.mxu0 0.0
    %4415 = vmatpush1.msra.mxu0 0.0
    %4416 = vmatprep.subr.mxu0 0.0
    %4417 = vmatpush1.msra.mxu0 0.0
    %4418 = vmatprep.mubr.f32.mxu0 0.0
    %4419 = vmatmul.mubr.f32.gmra.mrb[0].mxu0 %v4352
    %v4420 = vpop.f32.mrb[0].mxu0
    %v4421 = vadd.f32 0.0, %v4420
    %v4422 = vpop.f32.mrb[0].mxu0
    %4423 = vdwg.mxu0
    %4424 = vrot.lane.b32.xlu0 %v3179, 32
    %v4425 = vpop.permute.xlu0 %4424
    %v4428 = vsel %vm968, %v4347, 0
    %4430 = vmatprep.subr.mxu0 0.0
    %4431 = vmatpush1.msra.mxu0 %v4425
    %4432 = vmatprep.subr.mxu0 0.0
    %4433 = vmatpush1.msra.mxu0 0.0
    %4434 = vmatprep.subr.mxu0 0.0
    %4435 = vmatpush1.msra.mxu0 0.0
    %4436 = vmatprep.subr.mxu0 0.0
    %4437 = vmatpush1.msra.mxu0 0.0
    %4438 = vmatprep.subr.mxu0 0.0
    %4439 = vmatpush1.msra.mxu0 0.0
    %4440 = vmatprep.subr.mxu0 0.0
    %4441 = vmatpush1.msra.mxu0 0.0
    %4442 = vmatprep.subr.mxu0 0.0
    %4443 = vmatpush1.msra.mxu0 0.0
    %4444 = vmatprep.subr.mxu0 0.0
    %4445 = vmatpush1.msra.mxu0 0.0
    %4446 = vmatprep.subr.mxu0 0.0
    %4447 = vmatpush1.msra.mxu0 0.0
    %4448 = vmatprep.subr.mxu0 0.0
    %4449 = vmatpush1.msra.mxu0 0.0
    %4450 = vmatprep.subr.mxu0 0.0
    %4451 = vmatpush1.msra.mxu0 0.0
    %4452 = vmatprep.subr.mxu0 0.0
    %4453 = vmatpush1.msra.mxu0 0.0
    %4454 = vmatprep.subr.mxu0 0.0
    %4455 = vmatpush1.msra.mxu0 0.0
    %4456 = vmatprep.subr.mxu0 0.0
    %4457 = vmatpush1.msra.mxu0 0.0
    %4458 = vmatprep.subr.mxu0 0.0
    %4459 = vmatpush1.msra.mxu0 0.0
    %4460 = vmatprep.subr.mxu0 0.0
    %4461 = vmatpush1.msra.mxu0 0.0
    %4462 = vmatprep.subr.mxu0 0.0
    %4463 = vmatpush1.msra.mxu0 0.0
    %4464 = vmatprep.subr.mxu0 0.0
    %4465 = vmatpush1.msra.mxu0 0.0
    %4466 = vmatprep.subr.mxu0 0.0
    %4467 = vmatpush1.msra.mxu0 0.0
    %4468 = vmatprep.subr.mxu0 0.0
    %4469 = vmatpush1.msra.mxu0 0.0
    %4470 = vmatprep.subr.mxu0 0.0
    %4471 = vmatpush1.msra.mxu0 0.0
    %4472 = vmatprep.subr.mxu0 0.0
    %4473 = vmatpush1.msra.mxu0 0.0
    %4474 = vmatprep.subr.mxu0 0.0
    %4475 = vmatpush1.msra.mxu0 0.0
    %4476 = vmatprep.subr.mxu0 0.0
    %4477 = vmatpush1.msra.mxu0 0.0
    %4478 = vmatprep.subr.mxu0 0.0
    %4479 = vmatpush1.msra.mxu0 0.0
    %4480 = vmatprep.subr.mxu0 0.0
    %4481 = vmatpush1.msra.mxu0 0.0
    %4482 = vmatprep.subr.mxu0 0.0
    %4483 = vmatpush1.msra.mxu0 0.0
    %4484 = vmatprep.subr.mxu0 0.0
    %4485 = vmatpush1.msra.mxu0 0.0
    %4486 = vmatprep.subr.mxu0 0.0
    %4487 = vmatpush1.msra.mxu0 0.0
    %4488 = vmatprep.subr.mxu0 0.0
    %4489 = vmatpush1.msra.mxu0 0.0
    %4490 = vmatprep.subr.mxu0 0.0
    %4491 = vmatpush1.msra.mxu0 0.0
    %4492 = vmatprep.subr.mxu0 0.0
    %4493 = vmatpush1.msra.mxu0 0.0
    %4494 = vmatprep.mubr.f32.mxu0 0.0
    %4495 = vmatmul.mubr.f32.gmra.mrb[0].mxu0 %v4428
    %v4496 = vpop.f32.mrb[0].mxu0
    %v4497 = vadd.f32 0.0, %v4496
    %v4498 = vpop.f32.mrb[0].mxu0
    %4499 = vdwg.mxu0
    %4502 = vrot.lane.b32.xlu0 %v3756, 32
    %v4503 = vpop.permute.xlu0 %4502
    %4504 = vrot.lane.b32.xlu0 %v3833, 32
    %v4505 = vpop.permute.xlu0 %4504
    %4510 = vrot.lane.b32.xlu0 %v4089, 64
    %v4511 = vpop.permute.xlu0 %4510
    %4512 = vrot.lane.b32.xlu0 %v4165, 64
    %v4513 = vpop.permute.xlu0 %4512
    %4518 = vrot.lane.b32.xlu0 %v4421, 96
    %v4519 = vpop.permute.xlu0 %4518
    %4520 = vrot.lane.b32.xlu0 %v4497, 96
    %v4521 = vpop.permute.xlu0 %4520
    %v4524 = vsel %vm813, %v3426, %v4503
    %v4525 = vsel %vm813, %v3499, %v4505
    %v4526 = vsel %vm2161, %v4524, %v4511
    %v4527 = vsel %vm2161, %v4525, %v4513
    %v4528 = vsel %vm2164, %v4526, %v4519
    %v4529 = vsel %vm2164, %v4527, %v4521
    %v4530 = vlaneseq
    %v4531 = vshrl.u32 %v4530, 7
    %v4532 = vsub.s32 6, %v4531
    %v4533 = vrot.slane %v2651, %v4532
    %4534 = vmatprep.subr.mxu0 0.0
    %4535 = vmatpush1.msra.mxu0 %v2634
    %4536 = vmatprep.subr.mxu0 0.0
    %4537 = vmatpush1.msra.mxu0 %v2635
    %4538 = vmatprep.subr.mxu0 0.0
    %4539 = vmatpush1.msra.mxu0 %v2636
    %4540 = vmatprep.subr.mxu0 0.0
    %4541 = vmatpush1.msra.mxu0 %v2637
    %4542 = vmatprep.subr.mxu0 0.0
    %4543 = vmatpush1.msra.mxu0 %v2638
    %4544 = vmatprep.subr.mxu0 0.0
    %4545 = vmatpush1.msra.mxu0 %v2639
    %4546 = vmatprep.subr.mxu0 0.0
    %4547 = vmatpush1.msra.mxu0 %v2640
    %4548 = vmatprep.subr.mxu0 0.0
    %4549 = vmatpush1.msra.mxu0 %v2641
    %4550 = vmatprep.subr.mxu0 0.0
    %4551 = vmatpush1.msra.mxu0 %v2642
    %4552 = vmatprep.subr.mxu0 0.0
    %4553 = vmatpush1.msra.mxu0 %v2643
    %4554 = vmatprep.subr.mxu0 0.0
    %4555 = vmatpush1.msra.mxu0 %v2644
    %4556 = vmatprep.subr.mxu0 0.0
    %4557 = vmatpush1.msra.mxu0 %v2645
    %4558 = vmatprep.subr.mxu0 0.0
    %4559 = vmatpush1.msra.mxu0 %v2646
    %4560 = vmatprep.subr.mxu0 0.0
    %4561 = vmatpush1.msra.mxu0 %v2647
    %4562 = vmatprep.subr.mxu0 0.0
    %4563 = vmatpush1.msra.mxu0 %v2648
    %4564 = vmatprep.subr.mxu0 0.0
    %4565 = vmatpush1.msra.mxu0 %v2649
    %4566 = vmatprep.subr.mxu0 0.0
    %4567 = vmatpush1.msra.mxu0 0.0
    %4568 = vmatprep.subr.mxu0 0.0
    %4569 = vmatpush1.msra.mxu0 0.0
    %4570 = vmatprep.subr.mxu0 0.0
    %4571 = vmatpush1.msra.mxu0 0.0
    %4572 = vmatprep.subr.mxu0 0.0
    %4573 = vmatpush1.msra.mxu0 0.0
    %4574 = vmatprep.subr.mxu0 0.0
    %4575 = vmatpush1.msra.mxu0 0.0
    %4576 = vmatprep.subr.mxu0 0.0
    %4577 = vmatpush1.msra.mxu0 0.0
    %4578 = vmatprep.subr.mxu0 0.0
    %4579 = vmatpush1.msra.mxu0 0.0
    %4580 = vmatprep.subr.mxu0 0.0
    %4581 = vmatpush1.msra.mxu0 0.0
    %4582 = vmatprep.subr.mxu0 0.0
    %4583 = vmatpush1.msra.mxu0 0.0
    %4584 = vmatprep.subr.mxu0 0.0
    %4585 = vmatpush1.msra.mxu0 0.0
    %4586 = vmatprep.subr.mxu0 0.0
    %4587 = vmatpush1.msra.mxu0 0.0
    %4588 = vmatprep.subr.mxu0 0.0
    %4589 = vmatpush1.msra.mxu0 0.0
    %4590 = vmatprep.subr.mxu0 0.0
    %4591 = vmatpush1.msra.mxu0 0.0
    %4592 = vmatprep.subr.mxu0 0.0
    %4593 = vmatpush1.msra.mxu0 0.0
    %4594 = vmatprep.subr.mxu0 0.0
    %4595 = vmatpush1.msra.mxu0 0.0
    %4596 = vmatprep.subr.mxu0 0.0
    %4597 = vmatpush1.msra.mxu0 0.0
    %4598 = vmatprep.mubr.f32.mxu0 0.0
    %4599 = vmatmul.mubr.f32.gmra.mrb[0].mxu0 %v4528
    %v4600 = vpop.f32.mrb[0].mxu0
    %v4601 = vadd.f32 %v4533, %v4600
    %v4602 = vpop.f32.mrb[0].mxu0
    %4603 = vmatprep.mubr.f32.mxu0 0.0
    %4604 = vmatmul.mubr.f32.gmra.mrb[0].mxu0 %v4529
    %v4605 = vpop.f32.mrb[0].mxu0
    %v4606 = vadd.f32 %v4533, %v4605
    %v4607 = vpop.f32.mrb[0].mxu0
    %4608 = vdwg.mxu0
    %v4609 = vadd.f32 %v2535, %v4601
    %v4610 = vadd.f32 %v2536, %v4606
    %4611 = vadd.xlane.f32.xlu0 %v4609
    %v4612 = vpop.xlane.xlu0 %4611
    %4613 = vadd.xlane.f32.xlu0 %v4610
    %v4614 = vpop.xlane.xlu0 %4613
    %v4615 = vmul.f32 %v4612, %v123
    %v4616 = vmul.f32 %v4614, %v123
    %v4617 = vsub.f32 %v4609, %v4615
    %v4618 = vsub.f32 %v4610, %v4616
    %v4619 = vmul.f32 %v4617, %v4617
    %v4620 = vmul.f32 %v4618, %v4618
    %4621 = vadd.xlane.f32.xlu0 %v4619
    %v4622 = vpop.xlane.xlu0 %4621
    %4623 = vadd.xlane.f32.xlu0 %v4620
    %v4624 = vpop.xlane.xlu0 %4623
    %v4625 = vmul.f32 %v4622, 0.007874016
    %v4626 = vmul.f32 %v4624, 0.007874016
    %v4627 = vrsqrt.pop %v4625
    %v4628 = vmul.f32 %v4625, %v4627
    %vm4629 = vcmp.eq.f32.partialorder %v4625, inf
    %v4630 = vsel %vm4629, %v4625, %v4628
    %vm4631 = vcmp.eq.f32.partialorder %v4625, 0.0
    %v4632 = vand.u32 %v4625, 2147483648
    %v4633 = vsel %vm4631, %v4632, %v4630
    %v4634 = vrsqrt.pop %v4626
    %v4635 = vmul.f32 %v4626, %v4634
    %vm4636 = vcmp.eq.f32.partialorder %v4626, inf
    %v4637 = vsel %vm4636, %v4626, %v4635
    %vm4638 = vcmp.eq.f32.partialorder %v4626, 0.0
    %v4639 = vand.u32 %v4626, 2147483648
    %v4640 = vsel %vm4638, %v4639, %v4637
    %v4641 = vlaneseq
    %v4642 = vshrl.u32 %v4641, 7
    %v4643 = vsub.s32 4, %v4642
    %v4644 = vrot.slane %v88, %v4643
    %v4645 = vmul.f32 %v4644, %v4617
    %v4646 = vmul.f32 %v4644, %v4618
    %v4647 = vadd.f32 %v4633, 1e-06
    %v4648 = vadd.f32 %v4640, 1e-06
    %v4649 = vrcp.pop %v4647
    %v4650 = vmul.f32 %v4645, %v4649
    %v4651 = vrcp.pop %v4648
    %v4652 = vmul.f32 %v4646, %v4651
    %v4653 = vlaneseq
    %v4654 = vshrl.u32 %v4653, 7
    %v4655 = vsub.s32 4, %v4654
    %v4656 = vrot.slane %v89, %v4655
    %v4657 = vadd.f32 %v4650, %v4656
    %v4658 = vadd.f32 %v4652, %v4656
    %s4659 = scalar_lea.vmem [#allocation7], 256
    %v4660 = vld [vmem:[%s4659] sm:$0xff]
    %v4661 = vld [vmem:[%s4659 + $0x8] sm:$0xff]
    %v4662 = vld [vmem:[%s4659 + $0x10] sm:$0xff]
    %v4663 = vld [vmem:[%s4659 + $0x18] sm:$0xff]
    %v4664 = vld [vmem:[%s4659 + $0x20] sm:$0xff]
    %v4665 = vld [vmem:[%s4659 + $0x28] sm:$0xff]
    %v4666 = vld [vmem:[%s4659 + $0x30] sm:$0xff]
    %v4667 = vld [vmem:[%s4659 + $0x38] sm:$0xff]
    %v4668 = vld [vmem:[%s4659 + $0x40] sm:$0xff]
    %v4669 = vld [vmem:[%s4659 + $0x48] sm:$0xff]
    %v4670 = vld [vmem:[%s4659 + $0x50] sm:$0xff]
    %v4671 = vld [vmem:[%s4659 + $0x58] sm:$0xff]
    %v4672 = vld [vmem:[%s4659 + $0x60] sm:$0xff]
    %v4673 = vld [vmem:[%s4659 + $0x68] sm:$0xff]
    %v4674 = vld [vmem:[%s4659 + $0x70] sm:$0xff]
    %v4675 = vld [vmem:[%s4659 + $0x78] sm:$0xff]
    %v4676 = vld [vmem:[%s4659 + $0x80] sm:$0xff]
    %v4677 = vld [vmem:[%s4659 + $0x88] sm:$0xff]
    %v4678 = vld [vmem:[%s4659 + $0x90] sm:$0xff]
    %v4679 = vld [vmem:[%s4659 + $0x98] sm:$0xff]
    %v4680 = vld [vmem:[%s4659 + $0xa0] sm:$0xff]
    %v4681 = vld [vmem:[%s4659 + $0xa8] sm:$0xff]
    %v4682 = vld [vmem:[%s4659 + $0xb0] sm:$0xff]
    %v4683 = vld [vmem:[%s4659 + $0xb8] sm:$0xff]
    %v4684 = vld [vmem:[%s4659 + $0xc0] sm:$0xff]
    %v4685 = vld [vmem:[%s4659 + $0xc8] sm:$0xff]
    %v4686 = vld [vmem:[%s4659 + $0xd0] sm:$0xff]
    %v4687 = vld [vmem:[%s4659 + $0xd8] sm:$0xff]
    %v4688 = vld [vmem:[%s4659 + $0xe0] sm:$0xff]
    %v4689 = vld [vmem:[%s4659 + $0xe8] sm:$0xff]
    %v4690 = vld [vmem:[%s4659 + $0xf0] sm:$0xff]
    %v4691 = vld [vmem:[%s4659 + $0xf8] sm:$0xff]
    %s4692 = scalar_lea.vmem %s6, 2
    %v4693 = vld [vmem:[%s4692] sm:$0x3]
    %v4695 = vlaneseq
    %v4696 = vshrl.u32 %v4695, 7
    %v4697 = vsub.s32 0, %v4696
    %v4698 = vrot.slane %v4693, %v4697
    %v4699 = vlaneseq
    %v4700 = vshrl.u32 %v4699, 7
    %v4701 = vsub.s32 1, %v4700
    %v4702 = vrot.slane %v4693, %v4701
    %4705 = vmatprep.subr.mxu0 %v4661
    %4706 = vmatpush1.msra.mxu0 %v4660
    %4707 = vmatprep.subr.mxu0 %v4663
    %4708 = vmatpush1.msra.mxu0 %v4662
    %4709 = vmatprep.subr.mxu0 %v4665
    %4710 = vmatpush1.msra.mxu0 %v4664
    %4711 = vmatprep.subr.mxu0 %v4667
    %4712 = vmatpush1.msra.mxu0 %v4666
    %4713 = vmatprep.subr.mxu0 %v4669
    %4714 = vmatpush1.msra.mxu0 %v4668
    %4715 = vmatprep.subr.mxu0 %v4671
    %4716 = vmatpush1.msra.mxu0 %v4670
    %4717 = vmatprep.subr.mxu0 %v4673
    %4718 = vmatpush1.msra.mxu0 %v4672
    %4719 = vmatprep.subr.mxu0 %v4675
    %4720 = vmatpush1.msra.mxu0 %v4674
    %4721 = vmatprep.subr.mxu0 %v4677
    %4722 = vmatpush1.msra.mxu0 %v4676
    %4723 = vmatprep.subr.mxu0 %v4679
    %4724 = vmatpush1.msra.mxu0 %v4678
    %4725 = vmatprep.subr.mxu0 %v4681
    %4726 = vmatpush1.msra.mxu0 %v4680
    %4727 = vmatprep.subr.mxu0 %v4683
    %4728 = vmatpush1.msra.mxu0 %v4682
    %4729 = vmatprep.subr.mxu0 %v4685
    %4730 = vmatpush1.msra.mxu0 %v4684
    %4731 = vmatprep.subr.mxu0 %v4687
    %4732 = vmatpush1.msra.mxu0 %v4686
    %4733 = vmatprep.subr.mxu0 %v4689
    %4734 = vmatpush1.msra.mxu0 %v4688
    %4735 = vmatprep.subr.mxu0 %v4691
    %4736 = vmatpush1.msra.mxu0 %v4690
    %4737 = vmatprep.subr.mxu0 0.0
    %4738 = vmatpush1.msra.mxu0 0.0
    %4739 = vmatprep.subr.mxu0 0.0
    %4740 = vmatpush1.msra.mxu0 0.0
    %4741 = vmatprep.subr.mxu0 0.0
    %4742 = vmatpush1.msra.mxu0 0.0
    %4743 = vmatprep.subr.mxu0 0.0
    %4744 = vmatpush1.msra.mxu0 0.0
    %4745 = vmatprep.subr.mxu0 0.0
    %4746 = vmatpush1.msra.mxu0 0.0
    %4747 = vmatprep.subr.mxu0 0.0
    %4748 = vmatpush1.msra.mxu0 0.0
    %4749 = vmatprep.subr.mxu0 0.0
    %4750 = vmatpush1.msra.mxu0 0.0
    %4751 = vmatprep.subr.mxu0 0.0
    %4752 = vmatpush1.msra.mxu0 0.0
    %4753 = vmatprep.subr.mxu0 0.0
    %4754 = vmatpush1.msra.mxu0 0.0
    %4755 = vmatprep.subr.mxu0 0.0
    %4756 = vmatpush1.msra.mxu0 0.0
    %4757 = vmatprep.subr.mxu0 0.0
    %4758 = vmatpush1.msra.mxu0 0.0
    %4759 = vmatprep.subr.mxu0 0.0
    %4760 = vmatpush1.msra.mxu0 0.0
    %4761 = vmatprep.subr.mxu0 0.0
    %4762 = vmatpush1.msra.mxu0 0.0
    %4763 = vmatprep.subr.mxu0 0.0
    %4764 = vmatpush1.msra.mxu0 0.0
    %4765 = vmatprep.subr.mxu0 0.0
    %4766 = vmatpush1.msra.mxu0 0.0
    %4767 = vmatprep.subr.mxu0 0.0
    %4768 = vmatpush1.msra.mxu0 0.0
    %4769 = vmatprep.mubr.f32.mxu0 0.0
    %4770 = vmatmul.mubr.f32.gmra.mrb[0].mxu0 %v4657
    %v4771 = vpop.f32.mrb[0].mxu0
    %v4772 = vadd.f32 %v4698, %v4771
    %v4773 = vpop.f32.mrb[0].mxu0
    %v4774 = vadd.f32 %v4702, %v4773
    %4775 = vmatprep.mubr.f32.mxu0 0.0
    %4776 = vmatmul.mubr.f32.gmra.mrb[0].mxu0 %v4658
    %v4777 = vpop.f32.mrb[0].mxu0
    %v4778 = vadd.f32 %v4698, %v4777
    %v4779 = vpop.f32.mrb[0].mxu0
    %v4780 = vadd.f32 %v4702, %v4779
    %4781 = vdwg.mxu0
    %v4782 = vmax.f32 %v4772, 0.0
    %v4783 = vmax.f32 %v4774, 0.0
    %v4784 = vmax.f32 %v4778, 0.0
    %v4785 = vmax.f32 %v4780, 0.0
    %s4786 = scalar_lea.vmem [#allocation8], 256
    %v4787 = vld [vmem:[%s4786] sm:$0xff]
    %v4788 = vld [vmem:[%s4786 + $0x8] sm:$0xff]
    %v4789 = vld [vmem:[%s4786 + $0x10] sm:$0xff]
    %v4790 = vld [vmem:[%s4786 + $0x18] sm:$0xff]
    %v4791 = vld [vmem:[%s4786 + $0x20] sm:$0xff]
    %v4792 = vld [vmem:[%s4786 + $0x28] sm:$0xff]
    %v4793 = vld [vmem:[%s4786 + $0x30] sm:$0xff]
    %v4794 = vld [vmem:[%s4786 + $0x38] sm:$0xff]
    %v4795 = vld [vmem:[%s4786 + $0x40] sm:$0xff]
    %v4796 = vld [vmem:[%s4786 + $0x48] sm:$0xff]
    %v4797 = vld [vmem:[%s4786 + $0x50] sm:$0xff]
    %v4798 = vld [vmem:[%s4786 + $0x58] sm:$0xff]
    %v4799 = vld [vmem:[%s4786 + $0x60] sm:$0xff]
    %v4800 = vld [vmem:[%s4786 + $0x68] sm:$0xff]
    %v4801 = vld [vmem:[%s4786 + $0x70] sm:$0xff]
    %v4802 = vld [vmem:[%s4786 + $0x78] sm:$0xff]
    %v4803 = vld [vmem:[%s4786 + $0x80] sm:$0xff]
    %v4804 = vld [vmem:[%s4786 + $0x88] sm:$0xff]
    %v4805 = vld [vmem:[%s4786 + $0x90] sm:$0xff]
    %v4806 = vld [vmem:[%s4786 + $0x98] sm:$0xff]
    %v4807 = vld [vmem:[%s4786 + $0xa0] sm:$0xff]
    %v4808 = vld [vmem:[%s4786 + $0xa8] sm:$0xff]
    %v4809 = vld [vmem:[%s4786 + $0xb0] sm:$0xff]
    %v4810 = vld [vmem:[%s4786 + $0xb8] sm:$0xff]
    %v4811 = vld [vmem:[%s4786 + $0xc0] sm:$0xff]
    %v4812 = vld [vmem:[%s4786 + $0xc8] sm:$0xff]
    %v4813 = vld [vmem:[%s4786 + $0xd0] sm:$0xff]
    %v4814 = vld [vmem:[%s4786 + $0xd8] sm:$0xff]
    %v4815 = vld [vmem:[%s4786 + $0xe0] sm:$0xff]
    %v4816 = vld [vmem:[%s4786 + $0xe8] sm:$0xff]
    %v4817 = vld [vmem:[%s4786 + $0xf0] sm:$0xff]
    %v4818 = vld [vmem:[%s4786 + $0xf8] sm:$0xff]
    %s4819 = scalar_lea.vmem %s8, 1
    %v4820 = vld [vmem:[%s4819] sm:$0x1]
    %v4822 = vlaneseq
    %v4823 = vshrl.u32 %v4822, 7
    %v4824 = vsub.s32 0, %v4823
    %v4825 = vrot.slane %v4820, %v4824
    %4827 = vmatprep.subr.mxu0 0.0
    %4828 = vmatpush1.msra.mxu0 %v4787
    %4829 = vmatprep.subr.mxu0 0.0
    %4830 = vmatpush1.msra.mxu0 %v4788
    %4831 = vmatprep.subr.mxu0 0.0
    %4832 = vmatpush1.msra.mxu0 %v4789
    %4833 = vmatprep.subr.mxu0 0.0
    %4834 = vmatpush1.msra.mxu0 %v4790
    %4835 = vmatprep.subr.mxu0 0.0
    %4836 = vmatpush1.msra.mxu0 %v4791
    %4837 = vmatprep.subr.mxu0 0.0
    %4838 = vmatpush1.msra.mxu0 %v4792
    %4839 = vmatprep.subr.mxu0 0.0
    %4840 = vmatpush1.msra.mxu0 %v4793
    %4841 = vmatprep.subr.mxu0 0.0
    %4842 = vmatpush1.msra.mxu0 %v4794
    %4843 = vmatprep.subr.mxu0 0.0
    %4844 = vmatpush1.msra.mxu0 %v4795
    %4845 = vmatprep.subr.mxu0 0.0
    %4846 = vmatpush1.msra.mxu0 %v4796
    %4847 = vmatprep.subr.mxu0 0.0
    %4848 = vmatpush1.msra.mxu0 %v4797
    %4849 = vmatprep.subr.mxu0 0.0
    %4850 = vmatpush1.msra.mxu0 %v4798
    %4851 = vmatprep.subr.mxu0 0.0
    %4852 = vmatpush1.msra.mxu0 %v4799
    %4853 = vmatprep.subr.mxu0 0.0
    %4854 = vmatpush1.msra.mxu0 %v4800
    %4855 = vmatprep.subr.mxu0 0.0
    %4856 = vmatpush1.msra.mxu0 %v4801
    %4857 = vmatprep.subr.mxu0 0.0
    %4858 = vmatpush1.msra.mxu0 %v4802
    %4859 = vmatprep.subr.mxu0 0.0
    %4860 = vmatpush1.msra.mxu0 %v4803
    %4861 = vmatprep.subr.mxu0 0.0
    %4862 = vmatpush1.msra.mxu0 %v4804
    %4863 = vmatprep.subr.mxu0 0.0
    %4864 = vmatpush1.msra.mxu0 %v4805
    %4865 = vmatprep.subr.mxu0 0.0
    %4866 = vmatpush1.msra.mxu0 %v4806
    %4867 = vmatprep.subr.mxu0 0.0
    %4868 = vmatpush1.msra.mxu0 %v4807
    %4869 = vmatprep.subr.mxu0 0.0
    %4870 = vmatpush1.msra.mxu0 %v4808
    %4871 = vmatprep.subr.mxu0 0.0
    %4872 = vmatpush1.msra.mxu0 %v4809
    %4873 = vmatprep.subr.mxu0 0.0
    %4874 = vmatpush1.msra.mxu0 %v4810
    %4875 = vmatprep.subr.mxu0 0.0
    %4876 = vmatpush1.msra.mxu0 %v4811
    %4877 = vmatprep.subr.mxu0 0.0
    %4878 = vmatpush1.msra.mxu0 %v4812
    %4879 = vmatprep.subr.mxu0 0.0
    %4880 = vmatpush1.msra.mxu0 %v4813
    %4881 = vmatprep.subr.mxu0 0.0
    %4882 = vmatpush1.msra.mxu0 %v4814
    %4883 = vmatprep.subr.mxu0 0.0
    %4884 = vmatpush1.msra.mxu0 %v4815
    %4885 = vmatprep.subr.mxu0 0.0
    %4886 = vmatpush1.msra.mxu0 %v4816
    %4887 = vmatprep.subr.mxu0 0.0
    %4888 = vmatpush1.msra.mxu0 %v4817
    %4889 = vmatprep.subr.mxu0 0.0
    %4890 = vmatpush1.msra.mxu0 %v4818
    %4891 = vmatprep.mubr.f32.mxu0 %v4783
    %4892 = vmatmul.mubr.f32.gmra.mrb[0].mxu0 %v4782
    %v4893 = vpop.f32.mrb[0].mxu0
    %v4894 = vadd.f32 %v4825, %v4893
    %v4895 = vpop.f32.mrb[0].mxu0
    %4896 = vmatprep.mubr.f32.mxu0 %v4785
    %4897 = vmatmul.mubr.f32.gmra.mrb[0].mxu0 %v4784
    %v4898 = vpop.f32.mrb[0].mxu0
    %v4899 = vadd.f32 %v4825, %v4898
    %v4900 = vpop.f32.mrb[0].mxu0
    %4901 = vdwg.mxu0
    %v4902 = vadd.f32 %v4609, %v4894
    %v4903 = vadd.f32 %v4610, %v4899
    %4904 = vst [vmem:[#allocation10] sm:$0xff] %v4902
    %4905 = vst [vmem:[#allocation10 + $0x8] sm:$0xff] %v4903
    // Predicated region
    $region54: #{tpu_custom_call.1} parent=1 // pred_check
      _
    $region55: #{tpu_custom_call.1} parent=1 // pred_check_branch
      %4907 = sbr.rel (0) target = $region57
    $region56: #{tpu_custom_call.1} parent=1 // pred_region
      %s4909 = ssub.s32 256, 256
      %4910 = vsyncadd [#allocation4], %s4909
      %s4911 = sshll.u32 [#allocation10], 4
      %s4912 = int_to_ptr.vmem [resolvable:$true] %s4911
      %4917 = dma.vmem_to_hbm [thread:$0]  %s4912, 256, %s9, [#allocation4], 128, 128, 8
    $region57: #{tpu_custom_call.1} parent=1 // pred_fallthru
      _
    // Predicated region
    $region58: #{tpu_custom_call.1} parent=1 // pred_check
      _
    $region59: #{tpu_custom_call.1} parent=1 // pred_check_branch
      %4919 = sbr.rel (0) target = $region61
    $region60: #{tpu_custom_call.1} parent=1 // pred_region
      %4920 = dma.done [#allocation4], 256
    $region61: #{tpu_custom_call.1} parent=1 // pred_fallthru
      _
    %4921 = vsyncpa [#allocation3], 1
    %4922 = vsyncpa [#allocation6], 1
    %4923 = vsyncpa [#allocation9], 1
    %4924 = vsyncpa [#allocation4], 1

</llo_original>
